<compile_context>
chip_gen: v7x
topology: tpu7x:2x2x1
jax: 0.10.0
libtpu: 0.0.40
codegen_flags: <defaults>
</compile_context>

<pallas_src>
import functools

import jax
import jax.numpy as jnp
from jax import lax
from jax.experimental import pallas as pl
from jax.experimental.pallas import tpu as pltpu  # noqa: F401 (kept for real-scale TODO)

CFG = dict(
    vocab=50,          # vocab size (synthetic)
    hidden=32,         # stands in for 768
    heads=4,           # stands in for 12
    inter=64,          # stands in for 3072
    layers=3,          # layer[0] = part1, layers[1:] = part2
    max_pos=16,
    pad_idx=1,
    num_labels=2,
    linear_channel=16, # stands in for linear_channel=768
)

LN_EPS = 1e-5
LANE = 128   # lane-dense padded width for the classifier output slab


# ---------------------------------------------------------------------------
# In-kernel helpers (pure jnp/lax, traced inside the Pallas bodies) — f32 math
# ---------------------------------------------------------------------------

def _ln(x, g, b, eps):
    mu = jnp.mean(x, axis=-1, keepdims=True)
    xc = x - mu
    var = jnp.mean(xc * xc, axis=-1, keepdims=True)
    return xc * lax.rsqrt(var + eps) * g + b


def _gelu(x):  # exact (erf) GELU, as in RoBERTa
    return 0.5 * x * (1.0 + lax.erf(x * 0.7071067811865476))


def _bf(x):    # MXU operand cast; accumulation stays f32 via preferred_element_type
    return x.astype(jnp.bfloat16)


# ---------------------------------------------------------------------------
# Shared fused encoder-layer core: QKV -> all-head attention -> out-proj+LN
# -> FFN (erf-GELU) + residual + LN.  Operates on values (everything in vregs).
# ---------------------------------------------------------------------------

def _attention_ffn(x, mask_b, wqkv, bqkv, wo, bo, g1, be1,
                   wfi, bfi, wfo, bfo, g2, be2, *, B, S, H, nH, eps):
    dH = H // nH
    scale = 1.0 / float(dH) ** 0.5

    # Fused QKV projection: one lane-dense (M, 3H) MXU result (bf16 in, f32 acc).
    qkv = jnp.dot(_bf(x), wqkv, preferred_element_type=jnp.float32) + bqkv
    qkv3 = qkv.reshape(B, S, 3 * H)

    # Per-head attention; head contexts collected in vregs (no VMEM scratch,
    # no narrow masked stores) and concatenated into a lane-dense (M, H) slab.
    ctx_heads = []
    for h in range(nH):
        q = _bf(qkv3[:, :, h * dH:(h + 1) * dH])                   # (B, S, dH)
        k = _bf(qkv3[:, :, H + h * dH:H + (h + 1) * dH])           # (B, S, dH)
        v = _bf(qkv3[:, :, 2 * H + h * dH:2 * H + (h + 1) * dH])   # (B, S, dH)
        s = jnp.einsum("bqd,bkd->bqk", q, k,
                       preferred_element_type=jnp.float32) * scale
        s = s + mask_b                                             # hoisted mask
        s = s - jnp.max(s, axis=-1, keepdims=True)                 # guards exp
        p = jnp.exp(s)
        p = p * pl.reciprocal(jnp.sum(p, axis=-1, keepdims=True), approx=True)
        ctx_h = jnp.einsum("bqk,bkd->bqd", _bf(p), v,
                           preferred_element_type=jnp.float32)
        ctx_heads.append(ctx_h.reshape(B * S, dH))
    ctx = jnp.concatenate(ctx_heads, axis=-1)                      # (M, H) f32

    # Attention output projection + residual + layernorm.
    attn = jnp.dot(_bf(ctx), wo, preferred_element_type=jnp.float32) + bo
    y = _ln(attn + x, g1, be1, eps)

    # FFN: gelu(y @ Wi + bi) @ Wo + bo, + residual + layernorm (f32 elementwise).
    hmid = _gelu(jnp.dot(_bf(y), wfi, preferred_element_type=jnp.float32) + bfi)
    ff = jnp.dot(_bf(hmid), wfo, preferred_element_type=jnp.float32) + bfo
    return _ln(ff + y, g2, be2, eps)


# ---------------------------------------------------------------------------
# Block A: embedding layernorm + encoder layer 0 + linear1 + linear2 (fused)
# ---------------------------------------------------------------------------

def _block_a_kernel(x_ref, mask_ref, eg_ref, eb_ref,
                    wqkv_ref, bqkv_ref, wo_ref, bo_ref, g1_ref, be1_ref,
                    wfi_ref, bfi_ref, wfo_ref, bfo_ref, g2_ref, be2_ref,
                    w1_ref, b1_ref, w2_ref, b2_ref,
                    o_ref, *, B, S, H, nH, eps):
    mask_b = jnp.broadcast_to(mask_ref[...][:, None, :], (B, S, S))  # once
    x = _ln(x_ref[...], eg_ref[...], eb_ref[...], eps)               # emb LN
    y = _attention_ffn(x, mask_b,
                       wqkv_ref[...], bqkv_ref[...], wo_ref[...], bo_ref[...],
                       g1_ref[...], be1_ref[...], wfi_ref[...], bfi_ref[...],
                       wfo_ref[...], bfo_ref[...], g2_ref[...], be2_ref[...],
                       B=B, S=S, H=H, nH=nH, eps=eps)
    # linear1 -> linear2; the narrow intermediate never touches HBM.
    h = jnp.dot(_bf(y), w1_ref[...], preferred_element_type=jnp.float32) + b1_ref[...]
    z = jnp.dot(_bf(h), w2_ref[...], preferred_element_type=jnp.float32) + b2_ref[...]
    o_ref[...] = z.astype(o_ref.dtype)


def _flatten_layer(lp):
    return (lp["qkv_w"], lp["qkv_b"],
            lp["attn_out"]["w"], lp["attn_out"]["b"],
            lp["attn_ln"]["g"], lp["attn_ln"]["b"],
            lp["ffn_in"]["w"], lp["ffn_in"]["b"],
            lp["ffn_out"]["w"], lp["ffn_out"]["b"],
            lp["ffn_ln"]["g"], lp["ffn_ln"]["b"])


def block_a(params, x, add_mask, B, S):
    H = CFG["hidden"]
    kernel = functools.partial(_block_a_kernel, B=B, S=S, H=H,
                               nH=CFG["heads"], eps=LN_EPS)
    return pl.pallas_call(
        kernel,
        out_shape=jax.ShapeDtypeStruct((B * S, H), jnp.float32),
        input_output_aliases={0: 0},   # reuse the activation buffer in place
    )(x, add_mask, params["emb_ln"]["g"], params["emb_ln"]["b"],
      *_flatten_layer(params["layers"][0]),
      params["linear1"]["w"], params["linear1"]["b"],
      params["linear2"]["w"], params["linear2"]["b"])


# ---------------------------------------------------------------------------
# Block B: one plain encoder layer (middle layers of part2)
# ---------------------------------------------------------------------------

def _block_b_kernel(x_ref, mask_ref,
                    wqkv_ref, bqkv_ref, wo_ref, bo_ref, g1_ref, be1_ref,
                    wfi_ref, bfi_ref, wfo_ref, bfo_ref, g2_ref, be2_ref,
                    o_ref, *, B, S, H, nH, eps):
    mask_b = jnp.broadcast_to(mask_ref[...][:, None, :], (B, S, S))
    y = _attention_ffn(x_ref[...], mask_b,
                       wqkv_ref[...], bqkv_ref[...], wo_ref[...], bo_ref[...],
                       g1_ref[...], be1_ref[...], wfi_ref[...], bfi_ref[...],
                       wfo_ref[...], bfo_ref[...], g2_ref[...], be2_ref[...],
                       B=B, S=S, H=H, nH=nH, eps=eps)
    o_ref[...] = y.astype(o_ref.dtype)


def block_b(lp, x, add_mask, B, S):
    H = CFG["hidden"]
    kernel = functools.partial(_block_b_kernel, B=B, S=S, H=H,
                               nH=CFG["heads"], eps=LN_EPS)
    return pl.pallas_call(
        kernel,
        out_shape=jax.ShapeDtypeStruct((B * S, H), jnp.float32),
        input_output_aliases={0: 0},
    )(x, add_mask, *_flatten_layer(lp))


# ---------------------------------------------------------------------------
# Block C: last encoder layer + linear3 + linear4 + classifier head (fused).
# Logits are written lane-dense into a 128-wide padded slab.
# ---------------------------------------------------------------------------

def _block_c_kernel(x_ref, mask_ref,
                    wqkv_ref, bqkv_ref, wo_ref, bo_ref, g1_ref, be1_ref,
                    wfi_ref, bfi_ref, wfo_ref, bfo_ref, g2_ref, be2_ref,
                    w3_ref, b3_ref, w4_ref, b4_ref,
                    wcd_ref, bcd_ref, wco_ref, bco_ref,
                    o_ref, *, B, S, H, nH, eps):
    mask_b = jnp.broadcast_to(mask_ref[...][:, None, :], (B, S, S))
    y = _attention_ffn(x_ref[...], mask_b,
                       wqkv_ref[...], bqkv_ref[...], wo_ref[...], bo_ref[...],
                       g1_ref[...], be1_ref[...], wfi_ref[...], bfi_ref[...],
                       wfo_ref[...], bfo_ref[...], g2_ref[...], be2_ref[...],
                       B=B, S=S, H=H, nH=nH, eps=eps)
    # linear3 -> linear4 over the full sequence (as in the PyTorch module).
    h = jnp.dot(_bf(y), w3_ref[...], preferred_element_type=jnp.float32) + b3_ref[...]
    z = jnp.dot(_bf(h), w4_ref[...], preferred_element_type=jnp.float32) + b4_ref[...]
    # Classifier head on the <s> (CLS) token: dense -> tanh -> out_proj.
    cls = z.reshape(B, S, H)[:, 0, :]                                  # (B, H)
    d = jnp.tanh(jnp.dot(_bf(cls), wcd_ref[...],
                         preferred_element_type=jnp.float32) + bcd_ref[...])
    logits = jnp.dot(_bf(d), wco_ref[...],
                     preferred_element_type=jnp.float32) + bco_ref[...]
    o_ref[...] = logits.astype(o_ref.dtype)                            # (B, 128)


def block_c(params, x, add_mask, B, S):
    H = CFG["hidden"]
    kernel = functools.partial(_block_c_kernel, B=B, S=S, H=H,
                               nH=CFG["heads"], eps=LN_EPS)
    return pl.pallas_call(
        kernel,
        out_shape=jax.ShapeDtypeStruct((B, LANE), jnp.float32),
    )(x, add_mask, *_flatten_layer(params["layers"][-1]),
      params["linear3"]["w"], params["linear3"]["b"],
      params["linear4"]["w"], params["linear4"]["b"],
      params["cls_dense"]["w"], params["cls_dense"]["b"],
      params["cls_out_w_pad"], params["cls_out_b_pad"])


# ---------------------------------------------------------------------------
# Parameters (deterministic synthetic init — shapes follow the module).
# Weights in bf16 (MXU operands, half the DMA); biases / LN params in f32.
# ---------------------------------------------------------------------------

def init_params(key):
    counter = [0]

    def nxt():
        counter[0] += 1
        return jax.random.fold_in(key, counter[0])

    def dense(kin, kout):
        w = (jax.random.normal(nxt(), (kin, kout), jnp.float32) * 0.02)
        return dict(w=w.astype(jnp.bfloat16), b=jnp.zeros((1, kout), jnp.float32))

    def ln(h):
        return dict(g=jnp.ones((1, h), jnp.float32),
                    b=jnp.zeros((1, h), jnp.float32))

    H, I, L = CFG["hidden"], CFG["inter"], CFG["num_labels"]

    def layer_params():
        q, k, v = dense(H, H), dense(H, H), dense(H, H)
        return dict(
            # Wq|Wk|Wv fused into a single (H, 3H) bf16 weight for one MXU call.
            qkv_w=jnp.concatenate([q["w"], k["w"], v["w"]], axis=1),
            qkv_b=jnp.concatenate([q["b"], k["b"], v["b"]], axis=1),
            attn_out=dense(H, H), attn_ln=ln(H),
            ffn_in=dense(H, I), ffn_out=dense(I, H), ffn_ln=ln(H))

    cls_out = dense(H, L)
    wco_pad = jnp.zeros((H, LANE), jnp.bfloat16).at[:, :L].set(cls_out["w"])
    bco_pad = jnp.zeros((1, LANE), jnp.float32).at[:, :L].set(cls_out["b"])

    return dict(
        word_emb=jax.random.normal(nxt(), (CFG["vocab"], H), jnp.float32) * 0.02,
        pos_emb=jax.random.normal(nxt(), (CFG["max_pos"], H), jnp.float32) * 0.02,
        type_emb=jax.random.normal(nxt(), (1, H), jnp.float32) * 0.02,
        emb_ln=ln(H),
        layers=[layer_params() for _ in range(CFG["layers"])],
        linear1=dense(H, CFG["linear_channel"]),
        linear2=dense(CFG["linear_channel"], H),
        linear3=dense(H, CFG["linear_channel"]),
        linear4=dense(CFG["linear_channel"], H),
        cls_dense=dense(H, H),
        cls_out_w_pad=wco_pad,
        cls_out_b_pad=bco_pad,
    )


# ---------------------------------------------------------------------------
# Model forward: embedding gathers in plain JAX, everything else in 3 kernels
# ---------------------------------------------------------------------------

@jax.jit
def robertabase_linear4_forward(params, input_ids, attention_mask):
    B, S = input_ids.shape
    H = CFG["hidden"]
    pad = CFG["pad_idx"]

    # mask = reshape(mask,[B,1,1,S]); mask = (1 - mask) * -1e9  -> kept as (B,S)
    add_mask = (1.0 - attention_mask.astype(jnp.float32)) * -1e9

    # Embeddings (gathers stay in plain JAX; dropout is eval-mode identity).
    not_pad = (input_ids != pad).astype(jnp.int32)
    pos_ids = jnp.cumsum(not_pad, axis=1) * not_pad + pad     # RoBERTa pos ids
    x = (params["word_emb"][input_ids]
         + params["pos_emb"][pos_ids]
         + params["type_emb"][0]).reshape(B * S, H)           # token_type == 0

    # Block A: emb LN + part1 (layer 0) + linear1/linear2
    x2 = block_a(params, x, add_mask, B, S)

    # Block B: middle layers of part2
    for lp in params["layers"][1:-1]:
        x2 = block_b(lp, x2, add_mask, B, S)

    # Block C: last part2 layer + linear3/linear4 + part3 classifier head
    logits_pad = block_c(params, x2, add_mask, B, S)
    return logits_pad[:, :CFG["num_labels"]]


if __name__ == "__main__":
    key = jax.random.PRNGKey(0)
    params = init_params(key)

    B, S = 2, 8
    ids_key, _ = jax.random.split(key)
    input_ids = jax.random.randint(ids_key, (B, S), 2, CFG["vocab"])
    attention_mask = jnp.ones((B, S), jnp.float32)

    logits = robertabase_linear4_forward(params, input_ids, attention_mask)
    jax.block_until_ready(logits)
    assert logits.shape == (B, CFG["num_labels"])
    assert jnp.all(jnp.isfinite(logits))
    print("KERNEL_OK")
</pallas_src>

<mosaic_0001>
module attributes {stable_mosaic.version = 11 : i64} {
  func.func @_block_b_kernel(%arg0: memref<16x32xf32, #tpu.memory_space<vmem>>, %arg1: memref<2x8xf32, #tpu.memory_space<vmem>>, %arg2: memref<32x96xbf16, #tpu.memory_space<vmem>>, %arg3: memref<1x96xf32, #tpu.memory_space<vmem>>, %arg4: memref<32x32xbf16, #tpu.memory_space<vmem>>, %arg5: memref<1x32xf32, #tpu.memory_space<vmem>>, %arg6: memref<1x32xf32, #tpu.memory_space<vmem>>, %arg7: memref<1x32xf32, #tpu.memory_space<vmem>>, %arg8: memref<32x64xbf16, #tpu.memory_space<vmem>>, %arg9: memref<1x64xf32, #tpu.memory_space<vmem>>, %arg10: memref<64x32xbf16, #tpu.memory_space<vmem>>, %arg11: memref<1x32xf32, #tpu.memory_space<vmem>>, %arg12: memref<1x32xf32, #tpu.memory_space<vmem>>, %arg13: memref<1x32xf32, #tpu.memory_space<vmem>>, %arg14: memref<16x32xf32, #tpu.memory_space<vmem>>) attributes {dimension_semantics = [], scalar_prefetch = 0 : i64, scratch_operands = 0 : i64, tpu.core_type = #tpu.core_type<tc>} {
    %c0 = arith.constant 0 : index
    %c0_0 = arith.constant 0 : index
    %0 = vector.load %arg1[%c0, %c0_0] : memref<2x8xf32, #tpu.memory_space<vmem>>, vector<2x8xf32>
    %1 = vector.shape_cast %0 : vector<2x8xf32> to vector<2x1x8xf32>
    %2 = vector.shape_cast %1 : vector<2x1x8xf32> to vector<2x1x8xf32>
    %3 = vector.broadcast %2 : vector<2x1x8xf32> to vector<2x8x8xf32>
    %c0_1 = arith.constant 0 : index
    %c0_2 = arith.constant 0 : index
    %4 = vector.load %arg0[%c0_1, %c0_2] : memref<16x32xf32, #tpu.memory_space<vmem>>, vector<16x32xf32>
    %c0_3 = arith.constant 0 : index
    %c0_4 = arith.constant 0 : index
    %5 = vector.load %arg2[%c0_3, %c0_4] : memref<32x96xbf16, #tpu.memory_space<vmem>>, vector<32x96xbf16>
    %c0_5 = arith.constant 0 : index
    %c0_6 = arith.constant 0 : index
    %6 = vector.load %arg3[%c0_5, %c0_6] : memref<1x96xf32, #tpu.memory_space<vmem>>, vector<1x96xf32>
    %c0_7 = arith.constant 0 : index
    %c0_8 = arith.constant 0 : index
    %7 = vector.load %arg4[%c0_7, %c0_8] : memref<32x32xbf16, #tpu.memory_space<vmem>>, vector<32x32xbf16>
    %c0_9 = arith.constant 0 : index
    %c0_10 = arith.constant 0 : index
    %8 = vector.load %arg5[%c0_9, %c0_10] : memref<1x32xf32, #tpu.memory_space<vmem>>, vector<1x32xf32>
    %c0_11 = arith.constant 0 : index
    %c0_12 = arith.constant 0 : index
    %9 = vector.load %arg6[%c0_11, %c0_12] : memref<1x32xf32, #tpu.memory_space<vmem>>, vector<1x32xf32>
    %c0_13 = arith.constant 0 : index
    %c0_14 = arith.constant 0 : index
    %10 = vector.load %arg7[%c0_13, %c0_14] : memref<1x32xf32, #tpu.memory_space<vmem>>, vector<1x32xf32>
    %c0_15 = arith.constant 0 : index
    %c0_16 = arith.constant 0 : index
    %11 = vector.load %arg8[%c0_15, %c0_16] : memref<32x64xbf16, #tpu.memory_space<vmem>>, vector<32x64xbf16>
    %c0_17 = arith.constant 0 : index
    %c0_18 = arith.constant 0 : index
    %12 = vector.load %arg9[%c0_17, %c0_18] : memref<1x64xf32, #tpu.memory_space<vmem>>, vector<1x64xf32>
    %c0_19 = arith.constant 0 : index
    %c0_20 = arith.constant 0 : index
    %13 = vector.load %arg10[%c0_19, %c0_20] : memref<64x32xbf16, #tpu.memory_space<vmem>>, vector<64x32xbf16>
    %c0_21 = arith.constant 0 : index
    %c0_22 = arith.constant 0 : index
    %14 = vector.load %arg11[%c0_21, %c0_22] : memref<1x32xf32, #tpu.memory_space<vmem>>, vector<1x32xf32>
    %c0_23 = arith.constant 0 : index
    %c0_24 = arith.constant 0 : index
    %15 = vector.load %arg12[%c0_23, %c0_24] : memref<1x32xf32, #tpu.memory_space<vmem>>, vector<1x32xf32>
    %c0_25 = arith.constant 0 : index
    %c0_26 = arith.constant 0 : index
    %16 = vector.load %arg13[%c0_25, %c0_26] : memref<1x32xf32, #tpu.memory_space<vmem>>, vector<1x32xf32>
    %17 = arith.truncf %4 : vector<16x32xf32> to vector<16x32xbf16>
    %cst = arith.constant dense<0.000000e+00> : vector<16x96xf32>
    %18 = tpu.matmul %17, %5, %cst {dimension_numbers = #tpu.dot_dimension_numbers<[1], [0], [0], [1], [0, 0, 1, 1], [], []>} : vector<16x32xbf16>, vector<32x96xbf16>, vector<16x96xf32> -> vector<16x96xf32>
    %19 = vector.broadcast %6 : vector<1x96xf32> to vector<16x96xf32>
    %20 = arith.addf %18, %19 : vector<16x96xf32>
    %21 = vector.shape_cast %20 : vector<16x96xf32> to vector<2x8x96xf32>
    %22 = vector.extract_strided_slice %21 {offsets = [0, 0, 0], sizes = [2, 8, 8], strides = [1, 1, 1]} : vector<2x8x96xf32> to vector<2x8x8xf32>
    %23 = arith.truncf %22 : vector<2x8x8xf32> to vector<2x8x8xbf16>
    %24 = vector.extract_strided_slice %21 {offsets = [0, 0, 32], sizes = [2, 8, 8], strides = [1, 1, 1]} : vector<2x8x96xf32> to vector<2x8x8xf32>
    %25 = arith.truncf %24 : vector<2x8x8xf32> to vector<2x8x8xbf16>
    %26 = vector.extract_strided_slice %21 {offsets = [0, 0, 64], sizes = [2, 8, 8], strides = [1, 1, 1]} : vector<2x8x96xf32> to vector<2x8x8xf32>
    %27 = arith.truncf %26 : vector<2x8x8xf32> to vector<2x8x8xbf16>
    "tpu.trace_start"() <{level = 10 : i32, message = "bqd,bkd->bqk"}> : () -> ()
    %cst_27 = arith.constant dense<0.000000e+00> : vector<2x8x8xf32>
    %28 = tpu.matmul %23, %25, %cst_27 {dimension_numbers = #tpu.dot_dimension_numbers<[2], [2], [1], [1], [0, 0, 0, 1, 1, 1], [0], [0]>} : vector<2x8x8xbf16>, vector<2x8x8xbf16>, vector<2x8x8xf32> -> vector<2x8x8xf32>
    "tpu.trace_stop"() : () -> ()
    %cst_28 = arith.constant 0.353553385 : f32
    %29 = vector.broadcast %cst_28 : f32 to vector<2x8x8xf32>
    %30 = arith.mulf %28, %29 : vector<2x8x8xf32>
    %31 = arith.addf %30, %3 : vector<2x8x8xf32>
    %cst_29 = arith.constant dense<0xFF800000> : vector<2x8xf32>
    %32 = vector.multi_reduction <maximumf>, %31, %cst_29 [2] : vector<2x8x8xf32> to vector<2x8xf32>
    %33 = vector.shape_cast %32 : vector<2x8xf32> to vector<2x8x1xf32>
    %34 = vector.broadcast %33 : vector<2x8x1xf32> to vector<2x8x8xf32>
    %35 = arith.subf %31, %34 : vector<2x8x8xf32>
    %36 = math.exp %35 : vector<2x8x8xf32>
    %cst_30 = arith.constant dense<0.000000e+00> : vector<2x8xf32>
    %37 = vector.multi_reduction <add>, %36, %cst_30 [2] : vector<2x8x8xf32> to vector<2x8xf32>
    %38 = vector.shape_cast %37 : vector<2x8xf32> to vector<2x8x1xf32>
    %39 = tpu.reciprocal %38 {approx = true} : vector<2x8x1xf32> -> vector<2x8x1xf32>
    %40 = vector.broadcast %39 : vector<2x8x1xf32> to vector<2x8x8xf32>
    %41 = arith.mulf %36, %40 : vector<2x8x8xf32>
    %42 = arith.truncf %41 : vector<2x8x8xf32> to vector<2x8x8xbf16>
    "tpu.trace_start"() <{level = 10 : i32, message = "bqk,bkd->bqd"}> : () -> ()
    %cst_31 = arith.constant dense<0.000000e+00> : vector<2x8x8xf32>
    %43 = tpu.matmul %42, %27, %cst_31 {dimension_numbers = #tpu.dot_dimension_numbers<[2], [1], [1], [2], [0, 0, 0, 1, 1, 2], [0], [0]>} : vector<2x8x8xbf16>, vector<2x8x8xbf16>, vector<2x8x8xf32> -> vector<2x8x8xf32>
    "tpu.trace_stop"() : () -> ()
    %44 = vector.shape_cast %43 : vector<2x8x8xf32> to vector<16x8xf32>
    %45 = vector.extract_strided_slice %21 {offsets = [0, 0, 8], sizes = [2, 8, 8], strides = [1, 1, 1]} : vector<2x8x96xf32> to vector<2x8x8xf32>
    %46 = arith.truncf %45 : vector<2x8x8xf32> to vector<2x8x8xbf16>
    %47 = vector.extract_strided_slice %21 {offsets = [0, 0, 40], sizes = [2, 8, 8], strides = [1, 1, 1]} : vector<2x8x96xf32> to vector<2x8x8xf32>
    %48 = arith.truncf %47 : vector<2x8x8xf32> to vector<2x8x8xbf16>
    %49 = vector.extract_strided_slice %21 {offsets = [0, 0, 72], sizes = [2, 8, 8], strides = [1, 1, 1]} : vector<2x8x96xf32> to vector<2x8x8xf32>
    %50 = arith.truncf %49 : vector<2x8x8xf32> to vector<2x8x8xbf16>
    "tpu.trace_start"() <{level = 10 : i32, message = "bqd,bkd->bqk"}> : () -> ()
    %cst_32 = arith.constant dense<0.000000e+00> : vector<2x8x8xf32>
    %51 = tpu.matmul %46, %48, %cst_32 {dimension_numbers = #tpu.dot_dimension_numbers<[2], [2], [1], [1], [0, 0, 0, 1, 1, 1], [0], [0]>} : vector<2x8x8xbf16>, vector<2x8x8xbf16>, vector<2x8x8xf32> -> vector<2x8x8xf32>
    "tpu.trace_stop"() : () -> ()
    %cst_33 = arith.constant 0.353553385 : f32
    %52 = vector.broadcast %cst_33 : f32 to vector<2x8x8xf32>
    %53 = arith.mulf %51, %52 : vector<2x8x8xf32>
    %54 = arith.addf %53, %3 : vector<2x8x8xf32>
    %cst_34 = arith.constant dense<0xFF800000> : vector<2x8xf32>
    %55 = vector.multi_reduction <maximumf>, %54, %cst_34 [2] : vector<2x8x8xf32> to vector<2x8xf32>
    %56 = vector.shape_cast %55 : vector<2x8xf32> to vector<2x8x1xf32>
    %57 = vector.broadcast %56 : vector<2x8x1xf32> to vector<2x8x8xf32>
    %58 = arith.subf %54, %57 : vector<2x8x8xf32>
    %59 = math.exp %58 : vector<2x8x8xf32>
    %cst_35 = arith.constant dense<0.000000e+00> : vector<2x8xf32>
    %60 = vector.multi_reduction <add>, %59, %cst_35 [2] : vector<2x8x8xf32> to vector<2x8xf32>
    %61 = vector.shape_cast %60 : vector<2x8xf32> to vector<2x8x1xf32>
    %62 = tpu.reciprocal %61 {approx = true} : vector<2x8x1xf32> -> vector<2x8x1xf32>
    %63 = vector.broadcast %62 : vector<2x8x1xf32> to vector<2x8x8xf32>
    %64 = arith.mulf %59, %63 : vector<2x8x8xf32>
    %65 = arith.truncf %64 : vector<2x8x8xf32> to vector<2x8x8xbf16>
    "tpu.trace_start"() <{level = 10 : i32, message = "bqk,bkd->bqd"}> : () -> ()
    %cst_36 = arith.constant dense<0.000000e+00> : vector<2x8x8xf32>
    %66 = tpu.matmul %65, %50, %cst_36 {dimension_numbers = #tpu.dot_dimension_numbers<[2], [1], [1], [2], [0, 0, 0, 1, 1, 2], [0], [0]>} : vector<2x8x8xbf16>, vector<2x8x8xbf16>, vector<2x8x8xf32> -> vector<2x8x8xf32>
    "tpu.trace_stop"() : () -> ()
    %67 = vector.shape_cast %66 : vector<2x8x8xf32> to vector<16x8xf32>
    %68 = vector.extract_strided_slice %21 {offsets = [0, 0, 16], sizes = [2, 8, 8], strides = [1, 1, 1]} : vector<2x8x96xf32> to vector<2x8x8xf32>
    %69 = arith.truncf %68 : vector<2x8x8xf32> to vector<2x8x8xbf16>
    %70 = vector.extract_strided_slice %21 {offsets = [0, 0, 48], sizes = [2, 8, 8], strides = [1, 1, 1]} : vector<2x8x96xf32> to vector<2x8x8xf32>
    %71 = arith.truncf %70 : vector<2x8x8xf32> to vector<2x8x8xbf16>
    %72 = vector.extract_strided_slice %21 {offsets = [0, 0, 80], sizes = [2, 8, 8], strides = [1, 1, 1]} : vector<2x8x96xf32> to vector<2x8x8xf32>
    %73 = arith.truncf %72 : vector<2x8x8xf32> to vector<2x8x8xbf16>
    "tpu.trace_start"() <{level = 10 : i32, message = "bqd,bkd->bqk"}> : () -> ()
    %cst_37 = arith.constant dense<0.000000e+00> : vector<2x8x8xf32>
    %74 = tpu.matmul %69, %71, %cst_37 {dimension_numbers = #tpu.dot_dimension_numbers<[2], [2], [1], [1], [0, 0, 0, 1, 1, 1], [0], [0]>} : vector<2x8x8xbf16>, vector<2x8x8xbf16>, vector<2x8x8xf32> -> vector<2x8x8xf32>
    "tpu.trace_stop"() : () -> ()
    %cst_38 = arith.constant 0.353553385 : f32
    %75 = vector.broadcast %cst_38 : f32 to vector<2x8x8xf32>
    %76 = arith.mulf %74, %75 : vector<2x8x8xf32>
    %77 = arith.addf %76, %3 : vector<2x8x8xf32>
    %cst_39 = arith.constant dense<0xFF800000> : vector<2x8xf32>
    %78 = vector.multi_reduction <maximumf>, %77, %cst_39 [2] : vector<2x8x8xf32> to vector<2x8xf32>
    %79 = vector.shape_cast %78 : vector<2x8xf32> to vector<2x8x1xf32>
    %80 = vector.broadcast %79 : vector<2x8x1xf32> to vector<2x8x8xf32>
    %81 = arith.subf %77, %80 : vector<2x8x8xf32>
    %82 = math.exp %81 : vector<2x8x8xf32>
    %cst_40 = arith.constant dense<0.000000e+00> : vector<2x8xf32>
    %83 = vector.multi_reduction <add>, %82, %cst_40 [2] : vector<2x8x8xf32> to vector<2x8xf32>
    %84 = vector.shape_cast %83 : vector<2x8xf32> to vector<2x8x1xf32>
    %85 = tpu.reciprocal %84 {approx = true} : vector<2x8x1xf32> -> vector<2x8x1xf32>
    %86 = vector.broadcast %85 : vector<2x8x1xf32> to vector<2x8x8xf32>
    %87 = arith.mulf %82, %86 : vector<2x8x8xf32>
    %88 = arith.truncf %87 : vector<2x8x8xf32> to vector<2x8x8xbf16>
    "tpu.trace_start"() <{level = 10 : i32, message = "bqk,bkd->bqd"}> : () -> ()
    %cst_41 = arith.constant dense<0.000000e+00> : vector<2x8x8xf32>
    %89 = tpu.matmul %88, %73, %cst_41 {dimension_numbers = #tpu.dot_dimension_numbers<[2], [1], [1], [2], [0, 0, 0, 1, 1, 2], [0], [0]>} : vector<2x8x8xbf16>, vector<2x8x8xbf16>, vector<2x8x8xf32> -> vector<2x8x8xf32>
    "tpu.trace_stop"() : () -> ()
    %90 = vector.shape_cast %89 : vector<2x8x8xf32> to vector<16x8xf32>
    %91 = vector.extract_strided_slice %21 {offsets = [0, 0, 24], sizes = [2, 8, 8], strides = [1, 1, 1]} : vector<2x8x96xf32> to vector<2x8x8xf32>
    %92 = arith.truncf %91 : vector<2x8x8xf32> to vector<2x8x8xbf16>
    %93 = vector.extract_strided_slice %21 {offsets = [0, 0, 56], sizes = [2, 8, 8], strides = [1, 1, 1]} : vector<2x8x96xf32> to vector<2x8x8xf32>
    %94 = arith.truncf %93 : vector<2x8x8xf32> to vector<2x8x8xbf16>
    %95 = vector.extract_strided_slice %21 {offsets = [0, 0, 88], sizes = [2, 8, 8], strides = [1, 1, 1]} : vector<2x8x96xf32> to vector<2x8x8xf32>
    %96 = arith.truncf %95 : vector<2x8x8xf32> to vector<2x8x8xbf16>
    "tpu.trace_start"() <{level = 10 : i32, message = "bqd,bkd->bqk"}> : () -> ()
    %cst_42 = arith.constant dense<0.000000e+00> : vector<2x8x8xf32>
    %97 = tpu.matmul %92, %94, %cst_42 {dimension_numbers = #tpu.dot_dimension_numbers<[2], [2], [1], [1], [0, 0, 0, 1, 1, 1], [0], [0]>} : vector<2x8x8xbf16>, vector<2x8x8xbf16>, vector<2x8x8xf32> -> vector<2x8x8xf32>
    "tpu.trace_stop"() : () -> ()
    %cst_43 = arith.constant 0.353553385 : f32
    %98 = vector.broadcast %cst_43 : f32 to vector<2x8x8xf32>
    %99 = arith.mulf %97, %98 : vector<2x8x8xf32>
    %100 = arith.addf %99, %3 : vector<2x8x8xf32>
    %cst_44 = arith.constant dense<0xFF800000> : vector<2x8xf32>
    %101 = vector.multi_reduction <maximumf>, %100, %cst_44 [2] : vector<2x8x8xf32> to vector<2x8xf32>
    %102 = vector.shape_cast %101 : vector<2x8xf32> to vector<2x8x1xf32>
    %103 = vector.broadcast %102 : vector<2x8x1xf32> to vector<2x8x8xf32>
    %104 = arith.subf %100, %103 : vector<2x8x8xf32>
    %105 = math.exp %104 : vector<2x8x8xf32>
    %cst_45 = arith.constant dense<0.000000e+00> : vector<2x8xf32>
    %106 = vector.multi_reduction <add>, %105, %cst_45 [2] : vector<2x8x8xf32> to vector<2x8xf32>
    %107 = vector.shape_cast %106 : vector<2x8xf32> to vector<2x8x1xf32>
    %108 = tpu.reciprocal %107 {approx = true} : vector<2x8x1xf32> -> vector<2x8x1xf32>
    %109 = vector.broadcast %108 : vector<2x8x1xf32> to vector<2x8x8xf32>
    %110 = arith.mulf %105, %109 : vector<2x8x8xf32>
    %111 = arith.truncf %110 : vector<2x8x8xf32> to vector<2x8x8xbf16>
    "tpu.trace_start"() <{level = 10 : i32, message = "bqk,bkd->bqd"}> : () -> ()
    %cst_46 = arith.constant dense<0.000000e+00> : vector<2x8x8xf32>
    %112 = tpu.matmul %111, %96, %cst_46 {dimension_numbers = #tpu.dot_dimension_numbers<[2], [1], [1], [2], [0, 0, 0, 1, 1, 2], [0], [0]>} : vector<2x8x8xbf16>, vector<2x8x8xbf16>, vector<2x8x8xf32> -> vector<2x8x8xf32>
    "tpu.trace_stop"() : () -> ()
    %113 = vector.shape_cast %112 : vector<2x8x8xf32> to vector<16x8xf32>
    %114 = tpu.concatenate %44, %67, %90, %113 in 1 : vector<16x8xf32>, vector<16x8xf32>, vector<16x8xf32>, vector<16x8xf32> -> vector<16x32xf32>
    %115 = arith.truncf %114 : vector<16x32xf32> to vector<16x32xbf16>
    %cst_47 = arith.constant dense<0.000000e+00> : vector<16x32xf32>
    %116 = tpu.matmul %115, %7, %cst_47 {dimension_numbers = #tpu.dot_dimension_numbers<[1], [0], [0], [1], [0, 0, 1, 1], [], []>} : vector<16x32xbf16>, vector<32x32xbf16>, vector<16x32xf32> -> vector<16x32xf32>
    %117 = vector.broadcast %8 : vector<1x32xf32> to vector<16x32xf32>
    %118 = arith.addf %116, %117 : vector<16x32xf32>
    %119 = arith.addf %118, %4 : vector<16x32xf32>
    %cst_48 = arith.constant dense<0.000000e+00> : vector<16xf32>
    %120 = vector.multi_reduction <add>, %119, %cst_48 [1] : vector<16x32xf32> to vector<16xf32>
    %121 = vector.shape_cast %120 : vector<16xf32> to vector<16x1xf32>
    %cst_49 = arith.constant 3.200000e+01 : f32
    %122 = vector.broadcast %cst_49 : f32 to vector<16x1xf32>
    %123 = arith.divf %121, %122 : vector<16x1xf32>
    %124 = vector.broadcast %123 : vector<16x1xf32> to vector<16x32xf32>
    %125 = arith.subf %119, %124 : vector<16x32xf32>
    %126 = arith.mulf %125, %125 : vector<16x32xf32>
    %cst_50 = arith.constant dense<0.000000e+00> : vector<16xf32>
    %127 = vector.multi_reduction <add>, %126, %cst_50 [1] : vector<16x32xf32> to vector<16xf32>
    %128 = vector.shape_cast %127 : vector<16xf32> to vector<16x1xf32>
    %cst_51 = arith.constant 3.200000e+01 : f32
    %129 = vector.broadcast %cst_51 : f32 to vector<16x1xf32>
    %130 = arith.divf %128, %129 : vector<16x1xf32>
    %cst_52 = arith.constant 9.99999974E-6 : f32
    %131 = vector.broadcast %cst_52 : f32 to vector<16x1xf32>
    %132 = arith.addf %130, %131 : vector<16x1xf32>
    %133 = math.rsqrt %132 : vector<16x1xf32>
    %134 = vector.broadcast %133 : vector<16x1xf32> to vector<16x32xf32>
    %135 = arith.mulf %125, %134 : vector<16x32xf32>
    %136 = vector.broadcast %9 : vector<1x32xf32> to vector<16x32xf32>
    %137 = arith.mulf %135, %136 : vector<16x32xf32>
    %138 = vector.broadcast %10 : vector<1x32xf32> to vector<16x32xf32>
    %139 = arith.addf %137, %138 : vector<16x32xf32>
    %140 = arith.truncf %139 : vector<16x32xf32> to vector<16x32xbf16>
    %cst_53 = arith.constant dense<0.000000e+00> : vector<16x64xf32>
    %141 = tpu.matmul %140, %11, %cst_53 {dimension_numbers = #tpu.dot_dimension_numbers<[1], [0], [0], [1], [0, 0, 1, 1], [], []>} : vector<16x32xbf16>, vector<32x64xbf16>, vector<16x64xf32> -> vector<16x64xf32>
    %142 = vector.broadcast %12 : vector<1x64xf32> to vector<16x64xf32>
    %143 = arith.addf %141, %142 : vector<16x64xf32>
    %cst_54 = arith.constant 5.000000e-01 : f32
    %144 = vector.broadcast %cst_54 : f32 to vector<16x64xf32>
    %145 = arith.mulf %144, %143 : vector<16x64xf32>
    %cst_55 = arith.constant 0.707106769 : f32
    %146 = vector.broadcast %cst_55 : f32 to vector<16x64xf32>
    %147 = arith.mulf %143, %146 : vector<16x64xf32>
    %148 = math.erf %147 : vector<16x64xf32>
    %cst_56 = arith.constant 1.000000e+00 : f32
    %149 = vector.broadcast %cst_56 : f32 to vector<16x64xf32>
    %150 = arith.addf %149, %148 : vector<16x64xf32>
    %151 = arith.mulf %145, %150 : vector<16x64xf32>
    %152 = arith.truncf %151 : vector<16x64xf32> to vector<16x64xbf16>
    %cst_57 = arith.constant dense<0.000000e+00> : vector<16x32xf32>
    %153 = tpu.matmul %152, %13, %cst_57 {dimension_numbers = #tpu.dot_dimension_numbers<[1], [0], [0], [1], [0, 0, 1, 1], [], []>} : vector<16x64xbf16>, vector<64x32xbf16>, vector<16x32xf32> -> vector<16x32xf32>
    %154 = vector.broadcast %14 : vector<1x32xf32> to vector<16x32xf32>
    %155 = arith.addf %153, %154 : vector<16x32xf32>
    %156 = arith.addf %155, %139 : vector<16x32xf32>
    %cst_58 = arith.constant dense<0.000000e+00> : vector<16xf32>
    %157 = vector.multi_reduction <add>, %156, %cst_58 [1] : vector<16x32xf32> to vector<16xf32>
    %158 = vector.shape_cast %157 : vector<16xf32> to vector<16x1xf32>
    %cst_59 = arith.constant 3.200000e+01 : f32
    %159 = vector.broadcast %cst_59 : f32 to vector<16x1xf32>
    %160 = arith.divf %158, %159 : vector<16x1xf32>
    %161 = vector.broadcast %160 : vector<16x1xf32> to vector<16x32xf32>
    %162 = arith.subf %156, %161 : vector<16x32xf32>
    %163 = arith.mulf %162, %162 : vector<16x32xf32>
    %cst_60 = arith.constant dense<0.000000e+00> : vector<16xf32>
    %164 = vector.multi_reduction <add>, %163, %cst_60 [1] : vector<16x32xf32> to vector<16xf32>
    %165 = vector.shape_cast %164 : vector<16xf32> to vector<16x1xf32>
    %cst_61 = arith.constant 3.200000e+01 : f32
    %166 = vector.broadcast %cst_61 : f32 to vector<16x1xf32>
    %167 = arith.divf %165, %166 : vector<16x1xf32>
    %cst_62 = arith.constant 9.99999974E-6 : f32
    %168 = vector.broadcast %cst_62 : f32 to vector<16x1xf32>
    %169 = arith.addf %167, %168 : vector<16x1xf32>
    %170 = math.rsqrt %169 : vector<16x1xf32>
    %171 = vector.broadcast %170 : vector<16x1xf32> to vector<16x32xf32>
    %172 = arith.mulf %162, %171 : vector<16x32xf32>
    %173 = vector.broadcast %15 : vector<1x32xf32> to vector<16x32xf32>
    %174 = arith.mulf %172, %173 : vector<16x32xf32>
    %175 = vector.broadcast %16 : vector<1x32xf32> to vector<16x32xf32>
    %176 = arith.addf %174, %175 : vector<16x32xf32>
    %c0_63 = arith.constant 0 : index
    %c0_64 = arith.constant 0 : index
    %177 = vector.load %arg14[%c0_63, %c0_64] : memref<16x32xf32, #tpu.memory_space<vmem>>, vector<16x32xf32>
    tpu.vector_store %arg14[%c0_63, %c0_64], %176 {strides = array<i32>} : memref<16x32xf32, #tpu.memory_space<vmem>>, vector<16x32xf32>,
    return
  }
}

module attributes {stable_mosaic.version = 11 : i64} {
  func.func @_block_a_kernel(%arg0: memref<16x32xf32, #tpu.memory_space<vmem>>, %arg1: memref<2x8xf32, #tpu.memory_space<vmem>>, %arg2: memref<1x32xf32, #tpu.memory_space<vmem>>, %arg3: memref<1x32xf32, #tpu.memory_space<vmem>>, %arg4: memref<32x96xbf16, #tpu.memory_space<vmem>>, %arg5: memref<1x96xf32, #tpu.memory_space<vmem>>, %arg6: memref<32x32xbf16, #tpu.memory_space<vmem>>, %arg7: memref<1x32xf32, #tpu.memory_space<vmem>>, %arg8: memref<1x32xf32, #tpu.memory_space<vmem>>, %arg9: memref<1x32xf32, #tpu.memory_space<vmem>>, %arg10: memref<32x64xbf16, #tpu.memory_space<vmem>>, %arg11: memref<1x64xf32, #tpu.memory_space<vmem>>, %arg12: memref<64x32xbf16, #tpu.memory_space<vmem>>, %arg13: memref<1x32xf32, #tpu.memory_space<vmem>>, %arg14: memref<1x32xf32, #tpu.memory_space<vmem>>, %arg15: memref<1x32xf32, #tpu.memory_space<vmem>>, %arg16: memref<32x16xbf16, #tpu.memory_space<vmem>>, %arg17: memref<1x16xf32, #tpu.memory_space<vmem>>, %arg18: memref<16x32xbf16, #tpu.memory_space<vmem>>, %arg19: memref<1x32xf32, #tpu.memory_space<vmem>>, %arg20: memref<16x32xf32, #tpu.memory_space<vmem>>) attributes {dimension_semantics = [], scalar_prefetch = 0 : i64, scratch_operands = 0 : i64, tpu.core_type = #tpu.core_type<tc>} {
    %c0 = arith.constant 0 : index
    %c0_0 = arith.constant 0 : index
    %0 = vector.load %arg1[%c0, %c0_0] : memref<2x8xf32, #tpu.memory_space<vmem>>, vector<2x8xf32>
    %1 = vector.shape_cast %0 : vector<2x8xf32> to vector<2x1x8xf32>
    %2 = vector.shape_cast %1 : vector<2x1x8xf32> to vector<2x1x8xf32>
    %3 = vector.broadcast %2 : vector<2x1x8xf32> to vector<2x8x8xf32>
    %c0_1 = arith.constant 0 : index
    %c0_2 = arith.constant 0 : index
    %4 = vector.load %arg0[%c0_1, %c0_2] : memref<16x32xf32, #tpu.memory_space<vmem>>, vector<16x32xf32>
    %c0_3 = arith.constant 0 : index
    %c0_4 = arith.constant 0 : index
    %5 = vector.load %arg2[%c0_3, %c0_4] : memref<1x32xf32, #tpu.memory_space<vmem>>, vector<1x32xf32>
    %c0_5 = arith.constant 0 : index
    %c0_6 = arith.constant 0 : index
    %6 = vector.load %arg3[%c0_5, %c0_6] : memref<1x32xf32, #tpu.memory_space<vmem>>, vector<1x32xf32>
    %cst = arith.constant dense<0.000000e+00> : vector<16xf32>
    %7 = vector.multi_reduction <add>, %4, %cst [1] : vector<16x32xf32> to vector<16xf32>
    %8 = vector.shape_cast %7 : vector<16xf32> to vector<16x1xf32>
    %cst_7 = arith.constant 3.200000e+01 : f32
    %9 = vector.broadcast %cst_7 : f32 to vector<16x1xf32>
    %10 = arith.divf %8, %9 : vector<16x1xf32>
    %11 = vector.broadcast %10 : vector<16x1xf32> to vector<16x32xf32>
    %12 = arith.subf %4, %11 : vector<16x32xf32>
    %13 = arith.mulf %12, %12 : vector<16x32xf32>
    %cst_8 = arith.constant dense<0.000000e+00> : vector<16xf32>
    %14 = vector.multi_reduction <add>, %13, %cst_8 [1] : vector<16x32xf32> to vector<16xf32>
    %15 = vector.shape_cast %14 : vector<16xf32> to vector<16x1xf32>
    %cst_9 = arith.constant 3.200000e+01 : f32
    %16 = vector.broadcast %cst_9 : f32 to vector<16x1xf32>
    %17 = arith.divf %15, %16 : vector<16x1xf32>
    %cst_10 = arith.constant 9.99999974E-6 : f32
    %18 = vector.broadcast %cst_10 : f32 to vector<16x1xf32>
    %19 = arith.addf %17, %18 : vector<16x1xf32>
    %20 = math.rsqrt %19 : vector<16x1xf32>
    %21 = vector.broadcast %20 : vector<16x1xf32> to vector<16x32xf32>
    %22 = arith.mulf %12, %21 : vector<16x32xf32>
    %23 = vector.broadcast %5 : vector<1x32xf32> to vector<16x32xf32>
    %24 = arith.mulf %22, %23 : vector<16x32xf32>
    %25 = vector.broadcast %6 : vector<1x32xf32> to vector<16x32xf32>
    %26 = arith.addf %24, %25 : vector<16x32xf32>
    %c0_11 = arith.constant 0 : index
    %c0_12 = arith.constant 0 : index
    %27 = vector.load %arg4[%c0_11, %c0_12] : memref<32x96xbf16, #tpu.memory_space<vmem>>, vector<32x96xbf16>
    %c0_13 = arith.constant 0 : index
    %c0_14 = arith.constant 0 : index
    %28 = vector.load %arg5[%c0_13, %c0_14] : memref<1x96xf32, #tpu.memory_space<vmem>>, vector<1x96xf32>
    %c0_15 = arith.constant 0 : index
    %c0_16 = arith.constant 0 : index
    %29 = vector.load %arg6[%c0_15, %c0_16] : memref<32x32xbf16, #tpu.memory_space<vmem>>, vector<32x32xbf16>
    %c0_17 = arith.constant 0 : index
    %c0_18 = arith.constant 0 : index
    %30 = vector.load %arg7[%c0_17, %c0_18] : memref<1x32xf32, #tpu.memory_space<vmem>>, vector<1x32xf32>
    %c0_19 = arith.constant 0 : index
    %c0_20 = arith.constant 0 : index
    %31 = vector.load %arg8[%c0_19, %c0_20] : memref<1x32xf32, #tpu.memory_space<vmem>>, vector<1x32xf32>
    %c0_21 = arith.constant 0 : index
    %c0_22 = arith.constant 0 : index
    %32 = vector.load %arg9[%c0_21, %c0_22] : memref<1x32xf32, #tpu.memory_space<vmem>>, vector<1x32xf32>
    %c0_23 = arith.constant 0 : index
    %c0_24 = arith.constant 0 : index
    %33 = vector.load %arg10[%c0_23, %c0_24] : memref<32x64xbf16, #tpu.memory_space<vmem>>, vector<32x64xbf16>
    %c0_25 = arith.constant 0 : index
    %c0_26 = arith.constant 0 : index
    %34 = vector.load %arg11[%c0_25, %c0_26] : memref<1x64xf32, #tpu.memory_space<vmem>>, vector<1x64xf32>
    %c0_27 = arith.constant 0 : index
    %c0_28 = arith.constant 0 : index
    %35 = vector.load %arg12[%c0_27, %c0_28] : memref<64x32xbf16, #tpu.memory_space<vmem>>, vector<64x32xbf16>
    %c0_29 = arith.constant 0 : index
    %c0_30 = arith.constant 0 : index
    %36 = vector.load %arg13[%c0_29, %c0_30] : memref<1x32xf32, #tpu.memory_space<vmem>>, vector<1x32xf32>
    %c0_31 = arith.constant 0 : index
    %c0_32 = arith.constant 0 : index
    %37 = vector.load %arg14[%c0_31, %c0_32] : memref<1x32xf32, #tpu.memory_space<vmem>>, vector<1x32xf32>
    %c0_33 = arith.constant 0 : index
    %c0_34 = arith.constant 0 : index
    %38 = vector.load %arg15[%c0_33, %c0_34] : memref<1x32xf32, #tpu.memory_space<vmem>>, vector<1x32xf32>
    %39 = arith.truncf %26 : vector<16x32xf32> to vector<16x32xbf16>
    %cst_35 = arith.constant dense<0.000000e+00> : vector<16x96xf32>
    %40 = tpu.matmul %39, %27, %cst_35 {dimension_numbers = #tpu.dot_dimension_numbers<[1], [0], [0], [1], [0, 0, 1, 1], [], []>} : vector<16x32xbf16>, vector<32x96xbf16>, vector<16x96xf32> -> vector<16x96xf32>
    %41 = vector.broadcast %28 : vector<1x96xf32> to vector<16x96xf32>
    %42 = arith.addf %40, %41 : vector<16x96xf32>
    %43 = vector.shape_cast %42 : vector<16x96xf32> to vector<2x8x96xf32>
    %44 = vector.extract_strided_slice %43 {offsets = [0, 0, 0], sizes = [2, 8, 8], strides = [1, 1, 1]} : vector<2x8x96xf32> to vector<2x8x8xf32>
    %45 = arith.truncf %44 : vector<2x8x8xf32> to vector<2x8x8xbf16>
    %46 = vector.extract_strided_slice %43 {offsets = [0, 0, 32], sizes = [2, 8, 8], strides = [1, 1, 1]} : vector<2x8x96xf32> to vector<2x8x8xf32>
    %47 = arith.truncf %46 : vector<2x8x8xf32> to vector<2x8x8xbf16>
    %48 = vector.extract_strided_slice %43 {offsets = [0, 0, 64], sizes = [2, 8, 8], strides = [1, 1, 1]} : vector<2x8x96xf32> to vector<2x8x8xf32>
    %49 = arith.truncf %48 : vector<2x8x8xf32> to vector<2x8x8xbf16>
    "tpu.trace_start"() <{level = 10 : i32, message = "bqd,bkd->bqk"}> : () -> ()
    %cst_36 = arith.constant dense<0.000000e+00> : vector<2x8x8xf32>
    %50 = tpu.matmul %45, %47, %cst_36 {dimension_numbers = #tpu.dot_dimension_numbers<[2], [2], [1], [1], [0, 0, 0, 1, 1, 1], [0], [0]>} : vector<2x8x8xbf16>, vector<2x8x8xbf16>, vector<2x8x8xf32> -> vector<2x8x8xf32>
    "tpu.trace_stop"() : () -> ()
    %cst_37 = arith.constant 0.353553385 : f32
    %51 = vector.broadcast %cst_37 : f32 to vector<2x8x8xf32>
    %52 = arith.mulf %50, %51 : vector<2x8x8xf32>
    %53 = arith.addf %52, %3 : vector<2x8x8xf32>
    %cst_38 = arith.constant dense<0xFF800000> : vector<2x8xf32>
    %54 = vector.multi_reduction <maximumf>, %53, %cst_38 [2] : vector<2x8x8xf32> to vector<2x8xf32>
    %55 = vector.shape_cast %54 : vector<2x8xf32> to vector<2x8x1xf32>
    %56 = vector.broadcast %55 : vector<2x8x1xf32> to vector<2x8x8xf32>
    %57 = arith.subf %53, %56 : vector<2x8x8xf32>
    %58 = math.exp %57 : vector<2x8x8xf32>
    %cst_39 = arith.constant dense<0.000000e+00> : vector<2x8xf32>
    %59 = vector.multi_reduction <add>, %58, %cst_39 [2] : vector<2x8x8xf32> to vector<2x8xf32>
    %60 = vector.shape_cast %59 : vector<2x8xf32> to vector<2x8x1xf32>
    %61 = tpu.reciprocal %60 {approx = true} : vector<2x8x1xf32> -> vector<2x8x1xf32>
    %62 = vector.broadcast %61 : vector<2x8x1xf32> to vector<2x8x8xf32>
    %63 = arith.mulf %58, %62 : vector<2x8x8xf32>
    %64 = arith.truncf %63 : vector<2x8x8xf32> to vector<2x8x8xbf16>
    "tpu.trace_start"() <{level = 10 : i32, message = "bqk,bkd->bqd"}> : () -> ()
    %cst_40 = arith.constant dense<0.000000e+00> : vector<2x8x8xf32>
    %65 = tpu.matmul %64, %49, %cst_40 {dimension_numbers = #tpu.dot_dimension_numbers<[2], [1], [1], [2], [0, 0, 0, 1, 1, 2], [0], [0]>} : vector<2x8x8xbf16>, vector<2x8x8xbf16>, vector<2x8x8xf32> -> vector<2x8x8xf32>
    "tpu.trace_stop"() : () -> ()
    %66 = vector.shape_cast %65 : vector<2x8x8xf32> to vector<16x8xf32>
    %67 = vector.extract_strided_slice %43 {offsets = [0, 0, 8], sizes = [2, 8, 8], strides = [1, 1, 1]} : vector<2x8x96xf32> to vector<2x8x8xf32>
    %68 = arith.truncf %67 : vector<2x8x8xf32> to vector<2x8x8xbf16>
    %69 = vector.extract_strided_slice %43 {offsets = [0, 0, 40], sizes = [2, 8, 8], strides = [1, 1, 1]} : vector<2x8x96xf32> to vector<2x8x8xf32>
    %70 = arith.truncf %69 : vector<2x8x8xf32> to vector<2x8x8xbf16>
    %71 = vector.extract_strided_slice %43 {offsets = [0, 0, 72], sizes = [2, 8, 8], strides = [1, 1, 1]} : vector<2x8x96xf32> to vector<2x8x8xf32>
    %72 = arith.truncf %71 : vector<2x8x8xf32> to vector<2x8x8xbf16>
    "tpu.trace_start"() <{level = 10 : i32, message = "bqd,bkd->bqk"}> : () -> ()
    %cst_41 = arith.constant dense<0.000000e+00> : vector<2x8x8xf32>
    %73 = tpu.matmul %68, %70, %cst_41 {dimension_numbers = #tpu.dot_dimension_numbers<[2], [2], [1], [1], [0, 0, 0, 1, 1, 1], [0], [0]>} : vector<2x8x8xbf16>, vector<2x8x8xbf16>, vector<2x8x8xf32> -> vector<2x8x8xf32>
    "tpu.trace_stop"() : () -> ()
    %cst_42 = arith.constant 0.353553385 : f32
    %74 = vector.broadcast %cst_42 : f32 to vector<2x8x8xf32>
    %75 = arith.mulf %73, %74 : vector<2x8x8xf32>
    %76 = arith.addf %75, %3 : vector<2x8x8xf32>
    %cst_43 = arith.constant dense<0xFF800000> : vector<2x8xf32>
    %77 = vector.multi_reduction <maximumf>, %76, %cst_43 [2] : vector<2x8x8xf32> to vector<2x8xf32>
    %78 = vector.shape_cast %77 : vector<2x8xf32> to vector<2x8x1xf32>
    %79 = vector.broadcast %78 : vector<2x8x1xf32> to vector<2x8x8xf32>
    %80 = arith.subf %76, %79 : vector<2x8x8xf32>
    %81 = math.exp %80 : vector<2x8x8xf32>
    %cst_44 = arith.constant dense<0.000000e+00> : vector<2x8xf32>
    %82 = vector.multi_reduction <add>, %81, %cst_44 [2] : vector<2x8x8xf32> to vector<2x8xf32>
    %83 = vector.shape_cast %82 : vector<2x8xf32> to vector<2x8x1xf32>
    %84 = tpu.reciprocal %83 {approx = true} : vector<2x8x1xf32> -> vector<2x8x1xf32>
    %85 = vector.broadcast %84 : vector<2x8x1xf32> to vector<2x8x8xf32>
    %86 = arith.mulf %81, %85 : vector<2x8x8xf32>
    %87 = arith.truncf %86 : vector<2x8x8xf32> to vector<2x8x8xbf16>
    "tpu.trace_start"() <{level = 10 : i32, message = "bqk,bkd->bqd"}> : () -> ()
    %cst_45 = arith.constant dense<0.000000e+00> : vector<2x8x8xf32>
    %88 = tpu.matmul %87, %72, %cst_45 {dimension_numbers = #tpu.dot_dimension_numbers<[2], [1], [1], [2], [0, 0, 0, 1, 1, 2], [0], [0]>} : vector<2x8x8xbf16>, vector<2x8x8xbf16>, vector<2x8x8xf32> -> vector<2x8x8xf32>
    "tpu.trace_stop"() : () -> ()
    %89 = vector.shape_cast %88 : vector<2x8x8xf32> to vector<16x8xf32>
    %90 = vector.extract_strided_slice %43 {offsets = [0, 0, 16], sizes = [2, 8, 8], strides = [1, 1, 1]} : vector<2x8x96xf32> to vector<2x8x8xf32>
    %91 = arith.truncf %90 : vector<2x8x8xf32> to vector<2x8x8xbf16>
    %92 = vector.extract_strided_slice %43 {offsets = [0, 0, 48], sizes = [2, 8, 8], strides = [1, 1, 1]} : vector<2x8x96xf32> to vector<2x8x8xf32>
    %93 = arith.truncf %92 : vector<2x8x8xf32> to vector<2x8x8xbf16>
    %94 = vector.extract_strided_slice %43 {offsets = [0, 0, 80], sizes = [2, 8, 8], strides = [1, 1, 1]} : vector<2x8x96xf32> to vector<2x8x8xf32>
    %95 = arith.truncf %94 : vector<2x8x8xf32> to vector<2x8x8xbf16>
    "tpu.trace_start"() <{level = 10 : i32, message = "bqd,bkd->bqk"}> : () -> ()
    %cst_46 = arith.constant dense<0.000000e+00> : vector<2x8x8xf32>
    %96 = tpu.matmul %91, %93, %cst_46 {dimension_numbers = #tpu.dot_dimension_numbers<[2], [2], [1], [1], [0, 0, 0, 1, 1, 1], [0], [0]>} : vector<2x8x8xbf16>, vector<2x8x8xbf16>, vector<2x8x8xf32> -> vector<2x8x8xf32>
    "tpu.trace_stop"() : () -> ()
    %cst_47 = arith.constant 0.353553385 : f32
    %97 = vector.broadcast %cst_47 : f32 to vector<2x8x8xf32>
    %98 = arith.mulf %96, %97 : vector<2x8x8xf32>
    %99 = arith.addf %98, %3 : vector<2x8x8xf32>
    %cst_48 = arith.constant dense<0xFF800000> : vector<2x8xf32>
    %100 = vector.multi_reduction <maximumf>, %99, %cst_48 [2] : vector<2x8x8xf32> to vector<2x8xf32>
    %101 = vector.shape_cast %100 : vector<2x8xf32> to vector<2x8x1xf32>
    %102 = vector.broadcast %101 : vector<2x8x1xf32> to vector<2x8x8xf32>
    %103 = arith.subf %99, %102 : vector<2x8x8xf32>
    %104 = math.exp %103 : vector<2x8x8xf32>
    %cst_49 = arith.constant dense<0.000000e+00> : vector<2x8xf32>
    %105 = vector.multi_reduction <add>, %104, %cst_49 [2] : vector<2x8x8xf32> to vector<2x8xf32>
    %106 = vector.shape_cast %105 : vector<2x8xf32> to vector<2x8x1xf32>
    %107 = tpu.reciprocal %106 {approx = true} : vector<2x8x1xf32> -> vector<2x8x1xf32>
    %108 = vector.broadcast %107 : vector<2x8x1xf32> to vector<2x8x8xf32>
    %109 = arith.mulf %104, %108 : vector<2x8x8xf32>
    %110 = arith.truncf %109 : vector<2x8x8xf32> to vector<2x8x8xbf16>
    "tpu.trace_start"() <{level = 10 : i32, message = "bqk,bkd->bqd"}> : () -> ()
    %cst_50 = arith.constant dense<0.000000e+00> : vector<2x8x8xf32>
    %111 = tpu.matmul %110, %95, %cst_50 {dimension_numbers = #tpu.dot_dimension_numbers<[2], [1], [1], [2], [0, 0, 0, 1, 1, 2], [0], [0]>} : vector<2x8x8xbf16>, vector<2x8x8xbf16>, vector<2x8x8xf32> -> vector<2x8x8xf32>
    "tpu.trace_stop"() : () -> ()
    %112 = vector.shape_cast %111 : vector<2x8x8xf32> to vector<16x8xf32>
    %113 = vector.extract_strided_slice %43 {offsets = [0, 0, 24], sizes = [2, 8, 8], strides = [1, 1, 1]} : vector<2x8x96xf32> to vector<2x8x8xf32>
    %114 = arith.truncf %113 : vector<2x8x8xf32> to vector<2x8x8xbf16>
    %115 = vector.extract_strided_slice %43 {offsets = [0, 0, 56], sizes = [2, 8, 8], strides = [1, 1, 1]} : vector<2x8x96xf32> to vector<2x8x8xf32>
    %116 = arith.truncf %115 : vector<2x8x8xf32> to vector<2x8x8xbf16>
    %117 = vector.extract_strided_slice %43 {offsets = [0, 0, 88], sizes = [2, 8, 8], strides = [1, 1, 1]} : vector<2x8x96xf32> to vector<2x8x8xf32>
    %118 = arith.truncf %117 : vector<2x8x8xf32> to vector<2x8x8xbf16>
    "tpu.trace_start"() <{level = 10 : i32, message = "bqd,bkd->bqk"}> : () -> ()
    %cst_51 = arith.constant dense<0.000000e+00> : vector<2x8x8xf32>
    %119 = tpu.matmul %114, %116, %cst_51 {dimension_numbers = #tpu.dot_dimension_numbers<[2], [2], [1], [1], [0, 0, 0, 1, 1, 1], [0], [0]>} : vector<2x8x8xbf16>, vector<2x8x8xbf16>, vector<2x8x8xf32> -> vector<2x8x8xf32>
    "tpu.trace_stop"() : () -> ()
    %cst_52 = arith.constant 0.353553385 : f32
    %120 = vector.broadcast %cst_52 : f32 to vector<2x8x8xf32>
    %121 = arith.mulf %119, %120 : vector<2x8x8xf32>
    %122 = arith.addf %121, %3 : vector<2x8x8xf32>
    %cst_53 = arith.constant dense<0xFF800000> : vector<2x8xf32>
    %123 = vector.multi_reduction <maximumf>, %122, %cst_53 [2] : vector<2x8x8xf32> to vector<2x8xf32>
    %124 = vector.shape_cast %123 : vector<2x8xf32> to vector<2x8x1xf32>
    %125 = vector.broadcast %124 : vector<2x8x1xf32> to vector<2x8x8xf32>
    %126 = arith.subf %122, %125 : vector<2x8x8xf32>
    %127 = math.exp %126 : vector<2x8x8xf32>
    %cst_54 = arith.constant dense<0.000000e+00> : vector<2x8xf32>
    %128 = vector.multi_reduction <add>, %127, %cst_54 [2] : vector<2x8x8xf32> to vector<2x8xf32>
    %129 = vector.shape_cast %128 : vector<2x8xf32> to vector<2x8x1xf32>
    %130 = tpu.reciprocal %129 {approx = true} : vector<2x8x1xf32> -> vector<2x8x1xf32>
    %131 = vector.broadcast %130 : vector<2x8x1xf32> to vector<2x8x8xf32>
    %132 = arith.mulf %127, %131 : vector<2x8x8xf32>
    %133 = arith.truncf %132 : vector<2x8x8xf32> to vector<2x8x8xbf16>
    "tpu.trace_start"() <{level = 10 : i32, message = "bqk,bkd->bqd"}> : () -> ()
    %cst_55 = arith.constant dense<0.000000e+00> : vector<2x8x8xf32>
    %134 = tpu.matmul %133, %118, %cst_55 {dimension_numbers = #tpu.dot_dimension_numbers<[2], [1], [1], [2], [0, 0, 0, 1, 1, 2], [0], [0]>} : vector<2x8x8xbf16>, vector<2x8x8xbf16>, vector<2x8x8xf32> -> vector<2x8x8xf32>
    "tpu.trace_stop"() : () -> ()
    %135 = vector.shape_cast %134 : vector<2x8x8xf32> to vector<16x8xf32>
    %136 = tpu.concatenate %66, %89, %112, %135 in 1 : vector<16x8xf32>, vector<16x8xf32>, vector<16x8xf32>, vector<16x8xf32> -> vector<16x32xf32>
    %137 = arith.truncf %136 : vector<16x32xf32> to vector<16x32xbf16>
    %cst_56 = arith.constant dense<0.000000e+00> : vector<16x32xf32>
    %138 = tpu.matmul %137, %29, %cst_56 {dimension_numbers = #tpu.dot_dimension_numbers<[1], [0], [0], [1], [0, 0, 1, 1], [], []>} : vector<16x32xbf16>, vector<32x32xbf16>, vector<16x32xf32> -> vector<16x32xf32>
    %139 = vector.broadcast %30 : vector<1x32xf32> to vector<16x32xf32>
    %140 = arith.addf %138, %139 : vector<16x32xf32>
    %141 = arith.addf %140, %26 : vector<16x32xf32>
    %cst_57 = arith.constant dense<0.000000e+00> : vector<16xf32>
    %142 = vector.multi_reduction <add>, %141, %cst_57 [1] : vector<16x32xf32> to vector<16xf32>
    %143 = vector.shape_cast %142 : vector<16xf32> to vector<16x1xf32>
    %cst_58 = arith.constant 3.200000e+01 : f32
    %144 = vector.broadcast %cst_58 : f32 to vector<16x1xf32>
    %145 = arith.divf %143, %144 : vector<16x1xf32>
    %146 = vector.broadcast %145 : vector<16x1xf32> to vector<16x32xf32>
    %147 = arith.subf %141, %146 : vector<16x32xf32>
    %148 = arith.mulf %147, %147 : vector<16x32xf32>
    %cst_59 = arith.constant dense<0.000000e+00> : vector<16xf32>
    %149 = vector.multi_reduction <add>, %148, %cst_59 [1] : vector<16x32xf32> to vector<16xf32>
    %150 = vector.shape_cast %149 : vector<16xf32> to vector<16x1xf32>
    %cst_60 = arith.constant 3.200000e+01 : f32
    %151 = vector.broadcast %cst_60 : f32 to vector<16x1xf32>
    %152 = arith.divf %150, %151 : vector<16x1xf32>
    %cst_61 = arith.constant 9.99999974E-6 : f32
    %153 = vector.broadcast %cst_61 : f32 to vector<16x1xf32>
    %154 = arith.addf %152, %153 : vector<16x1xf32>
    %155 = math.rsqrt %154 : vector<16x1xf32>
    %156 = vector.broadcast %155 : vector<16x1xf32> to vector<16x32xf32>
    %157 = arith.mulf %147, %156 : vector<16x32xf32>
    %158 = vector.broadcast %31 : vector<1x32xf32> to vector<16x32xf32>
    %159 = arith.mulf %157, %158 : vector<16x32xf32>
    %160 = vector.broadcast %32 : vector<1x32xf32> to vector<16x32xf32>
    %161 = arith.addf %159, %160 : vector<16x32xf32>
    %162 = arith.truncf %161 : vector<16x32xf32> to vector<16x32xbf16>
    %cst_62 = arith.constant dense<0.000000e+00> : vector<16x64xf32>
    %163 = tpu.matmul %162, %33, %cst_62 {dimension_numbers = #tpu.dot_dimension_numbers<[1], [0], [0], [1], [0, 0, 1, 1], [], []>} : vector<16x32xbf16>, vector<32x64xbf16>, vector<16x64xf32> -> vector<16x64xf32>
    %164 = vector.broadcast %34 : vector<1x64xf32> to vector<16x64xf32>
    %165 = arith.addf %163, %164 : vector<16x64xf32>
    %cst_63 = arith.constant 5.000000e-01 : f32
    %166 = vector.broadcast %cst_63 : f32 to vector<16x64xf32>
    %167 = arith.mulf %166, %165 : vector<16x64xf32>
    %cst_64 = arith.constant 0.707106769 : f32
    %168 = vector.broadcast %cst_64 : f32 to vector<16x64xf32>
    %169 = arith.mulf %165, %168 : vector<16x64xf32>
    %170 = math.erf %169 : vector<16x64xf32>
    %cst_65 = arith.constant 1.000000e+00 : f32
    %171 = vector.broadcast %cst_65 : f32 to vector<16x64xf32>
    %172 = arith.addf %171, %170 : vector<16x64xf32>
    %173 = arith.mulf %167, %172 : vector<16x64xf32>
    %174 = arith.truncf %173 : vector<16x64xf32> to vector<16x64xbf16>
    %cst_66 = arith.constant dense<0.000000e+00> : vector<16x32xf32>
    %175 = tpu.matmul %174, %35, %cst_66 {dimension_numbers = #tpu.dot_dimension_numbers<[1], [0], [0], [1], [0, 0, 1, 1], [], []>} : vector<16x64xbf16>, vector<64x32xbf16>, vector<16x32xf32> -> vector<16x32xf32>
    %176 = vector.broadcast %36 : vector<1x32xf32> to vector<16x32xf32>
    %177 = arith.addf %175, %176 : vector<16x32xf32>
    %178 = arith.addf %177, %161 : vector<16x32xf32>
    %cst_67 = arith.constant dense<0.000000e+00> : vector<16xf32>
    %179 = vector.multi_reduction <add>, %178, %cst_67 [1] : vector<16x32xf32> to vector<16xf32>
    %180 = vector.shape_cast %179 : vector<16xf32> to vector<16x1xf32>
    %cst_68 = arith.constant 3.200000e+01 : f32
    %181 = vector.broadcast %cst_68 : f32 to vector<16x1xf32>
    %182 = arith.divf %180, %181 : vector<16x1xf32>
    %183 = vector.broadcast %182 : vector<16x1xf32> to vector<16x32xf32>
    %184 = arith.subf %178, %183 : vector<16x32xf32>
    %185 = arith.mulf %184, %184 : vector<16x32xf32>
    %cst_69 = arith.constant dense<0.000000e+00> : vector<16xf32>
    %186 = vector.multi_reduction <add>, %185, %cst_69 [1] : vector<16x32xf32> to vector<16xf32>
    %187 = vector.shape_cast %186 : vector<16xf32> to vector<16x1xf32>
    %cst_70 = arith.constant 3.200000e+01 : f32
    %188 = vector.broadcast %cst_70 : f32 to vector<16x1xf32>
    %189 = arith.divf %187, %188 : vector<16x1xf32>
    %cst_71 = arith.constant 9.99999974E-6 : f32
    %190 = vector.broadcast %cst_71 : f32 to vector<16x1xf32>
    %191 = arith.addf %189, %190 : vector<16x1xf32>
    %192 = math.rsqrt %191 : vector<16x1xf32>
    %193 = vector.broadcast %192 : vector<16x1xf32> to vector<16x32xf32>
    %194 = arith.mulf %184, %193 : vector<16x32xf32>
    %195 = vector.broadcast %37 : vector<1x32xf32> to vector<16x32xf32>
    %196 = arith.mulf %194, %195 : vector<16x32xf32>
    %197 = vector.broadcast %38 : vector<1x32xf32> to vector<16x32xf32>
    %198 = arith.addf %196, %197 : vector<16x32xf32>
    %199 = arith.truncf %198 : vector<16x32xf32> to vector<16x32xbf16>
    %c0_72 = arith.constant 0 : index
    %c0_73 = arith.constant 0 : index
    %200 = vector.load %arg16[%c0_72, %c0_73] : memref<32x16xbf16, #tpu.memory_space<vmem>>, vector<32x16xbf16>
    %cst_74 = arith.constant dense<0.000000e+00> : vector<16x16xf32>
    %201 = tpu.matmul %199, %200, %cst_74 {dimension_numbers = #tpu.dot_dimension_numbers<[1], [0], [0], [1], [0, 0, 1, 1], [], []>} : vector<16x32xbf16>, vector<32x16xbf16>, vector<16x16xf32> -> vector<16x16xf32>
    %c0_75 = arith.constant 0 : index
    %c0_76 = arith.constant 0 : index
    %202 = vector.load %arg17[%c0_75, %c0_76] : memref<1x16xf32, #tpu.memory_space<vmem>>, vector<1x16xf32>
    %203 = vector.broadcast %202 : vector<1x16xf32> to vector<16x16xf32>
    %204 = arith.addf %201, %203 : vector<16x16xf32>
    %205 = arith.truncf %204 : vector<16x16xf32> to vector<16x16xbf16>
    %c0_77 = arith.constant 0 : index
    %c0_78 = arith.constant 0 : index
    %206 = vector.load %arg18[%c0_77, %c0_78] : memref<16x32xbf16, #tpu.memory_space<vmem>>, vector<16x32xbf16>
    %cst_79 = arith.constant dense<0.000000e+00> : vector<16x32xf32>
    %207 = tpu.matmul %205, %206, %cst_79 {dimension_numbers = #tpu.dot_dimension_numbers<[1], [0], [0], [1], [0, 0, 1, 1], [], []>} : vector<16x16xbf16>, vector<16x32xbf16>, vector<16x32xf32> -> vector<16x32xf32>
    %c0_80 = arith.constant 0 : index
    %c0_81 = arith.constant 0 : index
    %208 = vector.load %arg19[%c0_80, %c0_81] : memref<1x32xf32, #tpu.memory_space<vmem>>, vector<1x32xf32>
    %209 = vector.broadcast %208 : vector<1x32xf32> to vector<16x32xf32>
    %210 = arith.addf %207, %209 : vector<16x32xf32>
    %c0_82 = arith.constant 0 : index
    %c0_83 = arith.constant 0 : index
    %211 = vector.load %arg20[%c0_82, %c0_83] : memref<16x32xf32, #tpu.memory_space<vmem>>, vector<16x32xf32>
    tpu.vector_store %arg20[%c0_82, %c0_83], %210 {strides = array<i32>} : memref<16x32xf32, #tpu.memory_space<vmem>>, vector<16x32xf32>,
    return
  }
}

module attributes {stable_mosaic.version = 11 : i64} {
  func.func @_block_c_kernel(%arg0: memref<16x32xf32, #tpu.memory_space<vmem>>, %arg1: memref<2x8xf32, #tpu.memory_space<vmem>>, %arg2: memref<32x96xbf16, #tpu.memory_space<vmem>>, %arg3: memref<1x96xf32, #tpu.memory_space<vmem>>, %arg4: memref<32x32xbf16, #tpu.memory_space<vmem>>, %arg5: memref<1x32xf32, #tpu.memory_space<vmem>>, %arg6: memref<1x32xf32, #tpu.memory_space<vmem>>, %arg7: memref<1x32xf32, #tpu.memory_space<vmem>>, %arg8: memref<32x64xbf16, #tpu.memory_space<vmem>>, %arg9: memref<1x64xf32, #tpu.memory_space<vmem>>, %arg10: memref<64x32xbf16, #tpu.memory_space<vmem>>, %arg11: memref<1x32xf32, #tpu.memory_space<vmem>>, %arg12: memref<1x32xf32, #tpu.memory_space<vmem>>, %arg13: memref<1x32xf32, #tpu.memory_space<vmem>>, %arg14: memref<32x16xbf16, #tpu.memory_space<vmem>>, %arg15: memref<1x16xf32, #tpu.memory_space<vmem>>, %arg16: memref<16x32xbf16, #tpu.memory_space<vmem>>, %arg17: memref<1x32xf32, #tpu.memory_space<vmem>>, %arg18: memref<32x32xbf16, #tpu.memory_space<vmem>>, %arg19: memref<1x32xf32, #tpu.memory_space<vmem>>, %arg20: memref<32x128xbf16, #tpu.memory_space<vmem>>, %arg21: memref<1x128xf32, #tpu.memory_space<vmem>>, %arg22: memref<2x128xf32, #tpu.memory_space<vmem>>) attributes {dimension_semantics = [], scalar_prefetch = 0 : i64, scratch_operands = 0 : i64, tpu.core_type = #tpu.core_type<tc>} {
    %c0 = arith.constant 0 : index
    %c0_0 = arith.constant 0 : index
    %0 = vector.load %arg1[%c0, %c0_0] : memref<2x8xf32, #tpu.memory_space<vmem>>, vector<2x8xf32>
    %1 = vector.shape_cast %0 : vector<2x8xf32> to vector<2x1x8xf32>
    %2 = vector.shape_cast %1 : vector<2x1x8xf32> to vector<2x1x8xf32>
    %3 = vector.broadcast %2 : vector<2x1x8xf32> to vector<2x8x8xf32>
    %c0_1 = arith.constant 0 : index
    %c0_2 = arith.constant 0 : index
    %4 = vector.load %arg0[%c0_1, %c0_2] : memref<16x32xf32, #tpu.memory_space<vmem>>, vector<16x32xf32>
    %c0_3 = arith.constant 0 : index
    %c0_4 = arith.constant 0 : index
    %5 = vector.load %arg2[%c0_3, %c0_4] : memref<32x96xbf16, #tpu.memory_space<vmem>>, vector<32x96xbf16>
    %c0_5 = arith.constant 0 : index
    %c0_6 = arith.constant 0 : index
    %6 = vector.load %arg3[%c0_5, %c0_6] : memref<1x96xf32, #tpu.memory_space<vmem>>, vector<1x96xf32>
    %c0_7 = arith.constant 0 : index
    %c0_8 = arith.constant 0 : index
    %7 = vector.load %arg4[%c0_7, %c0_8] : memref<32x32xbf16, #tpu.memory_space<vmem>>, vector<32x32xbf16>
    %c0_9 = arith.constant 0 : index
    %c0_10 = arith.constant 0 : index
    %8 = vector.load %arg5[%c0_9, %c0_10] : memref<1x32xf32, #tpu.memory_space<vmem>>, vector<1x32xf32>
    %c0_11 = arith.constant 0 : index
    %c0_12 = arith.constant 0 : index
    %9 = vector.load %arg6[%c0_11, %c0_12] : memref<1x32xf32, #tpu.memory_space<vmem>>, vector<1x32xf32>
    %c0_13 = arith.constant 0 : index
    %c0_14 = arith.constant 0 : index
    %10 = vector.load %arg7[%c0_13, %c0_14] : memref<1x32xf32, #tpu.memory_space<vmem>>, vector<1x32xf32>
    %c0_15 = arith.constant 0 : index
    %c0_16 = arith.constant 0 : index
    %11 = vector.load %arg8[%c0_15, %c0_16] : memref<32x64xbf16, #tpu.memory_space<vmem>>, vector<32x64xbf16>
    %c0_17 = arith.constant 0 : index
    %c0_18 = arith.constant 0 : index
    %12 = vector.load %arg9[%c0_17, %c0_18] : memref<1x64xf32, #tpu.memory_space<vmem>>, vector<1x64xf32>
    %c0_19 = arith.constant 0 : index
    %c0_20 = arith.constant 0 : index
    %13 = vector.load %arg10[%c0_19, %c0_20] : memref<64x32xbf16, #tpu.memory_space<vmem>>, vector<64x32xbf16>
    %c0_21 = arith.constant 0 : index
    %c0_22 = arith.constant 0 : index
    %14 = vector.load %arg11[%c0_21, %c0_22] : memref<1x32xf32, #tpu.memory_space<vmem>>, vector<1x32xf32>
    %c0_23 = arith.constant 0 : index
    %c0_24 = arith.constant 0 : index
    %15 = vector.load %arg12[%c0_23, %c0_24] : memref<1x32xf32, #tpu.memory_space<vmem>>, vector<1x32xf32>
    %c0_25 = arith.constant 0 : index
    %c0_26 = arith.constant 0 : index
    %16 = vector.load %arg13[%c0_25, %c0_26] : memref<1x32xf32, #tpu.memory_space<vmem>>, vector<1x32xf32>
    %17 = arith.truncf %4 : vector<16x32xf32> to vector<16x32xbf16>
    %cst = arith.constant dense<0.000000e+00> : vector<16x96xf32>
    %18 = tpu.matmul %17, %5, %cst {dimension_numbers = #tpu.dot_dimension_numbers<[1], [0], [0], [1], [0, 0, 1, 1], [], []>} : vector<16x32xbf16>, vector<32x96xbf16>, vector<16x96xf32> -> vector<16x96xf32>
    %19 = vector.broadcast %6 : vector<1x96xf32> to vector<16x96xf32>
    %20 = arith.addf %18, %19 : vector<16x96xf32>
    %21 = vector.shape_cast %20 : vector<16x96xf32> to vector<2x8x96xf32>
    %22 = vector.extract_strided_slice %21 {offsets = [0, 0, 0], sizes = [2, 8, 8], strides = [1, 1, 1]} : vector<2x8x96xf32> to vector<2x8x8xf32>
    %23 = arith.truncf %22 : vector<2x8x8xf32> to vector<2x8x8xbf16>
    %24 = vector.extract_strided_slice %21 {offsets = [0, 0, 32], sizes = [2, 8, 8], strides = [1, 1, 1]} : vector<2x8x96xf32> to vector<2x8x8xf32>
    %25 = arith.truncf %24 : vector<2x8x8xf32> to vector<2x8x8xbf16>
    %26 = vector.extract_strided_slice %21 {offsets = [0, 0, 64], sizes = [2, 8, 8], strides = [1, 1, 1]} : vector<2x8x96xf32> to vector<2x8x8xf32>
    %27 = arith.truncf %26 : vector<2x8x8xf32> to vector<2x8x8xbf16>
    "tpu.trace_start"() <{level = 10 : i32, message = "bqd,bkd->bqk"}> : () -> ()
    %cst_27 = arith.constant dense<0.000000e+00> : vector<2x8x8xf32>
    %28 = tpu.matmul %23, %25, %cst_27 {dimension_numbers = #tpu.dot_dimension_numbers<[2], [2], [1], [1], [0, 0, 0, 1, 1, 1], [0], [0]>} : vector<2x8x8xbf16>, vector<2x8x8xbf16>, vector<2x8x8xf32> -> vector<2x8x8xf32>
    "tpu.trace_stop"() : () -> ()
    %cst_28 = arith.constant 0.353553385 : f32
    %29 = vector.broadcast %cst_28 : f32 to vector<2x8x8xf32>
    %30 = arith.mulf %28, %29 : vector<2x8x8xf32>
    %31 = arith.addf %30, %3 : vector<2x8x8xf32>
    %cst_29 = arith.constant dense<0xFF800000> : vector<2x8xf32>
    %32 = vector.multi_reduction <maximumf>, %31, %cst_29 [2] : vector<2x8x8xf32> to vector<2x8xf32>
    %33 = vector.shape_cast %32 : vector<2x8xf32> to vector<2x8x1xf32>
    %34 = vector.broadcast %33 : vector<2x8x1xf32> to vector<2x8x8xf32>
    %35 = arith.subf %31, %34 : vector<2x8x8xf32>
    %36 = math.exp %35 : vector<2x8x8xf32>
    %cst_30 = arith.constant dense<0.000000e+00> : vector<2x8xf32>
    %37 = vector.multi_reduction <add>, %36, %cst_30 [2] : vector<2x8x8xf32> to vector<2x8xf32>
    %38 = vector.shape_cast %37 : vector<2x8xf32> to vector<2x8x1xf32>
    %39 = tpu.reciprocal %38 {approx = true} : vector<2x8x1xf32> -> vector<2x8x1xf32>
    %40 = vector.broadcast %39 : vector<2x8x1xf32> to vector<2x8x8xf32>
    %41 = arith.mulf %36, %40 : vector<2x8x8xf32>
    %42 = arith.truncf %41 : vector<2x8x8xf32> to vector<2x8x8xbf16>
    "tpu.trace_start"() <{level = 10 : i32, message = "bqk,bkd->bqd"}> : () -> ()
    %cst_31 = arith.constant dense<0.000000e+00> : vector<2x8x8xf32>
    %43 = tpu.matmul %42, %27, %cst_31 {dimension_numbers = #tpu.dot_dimension_numbers<[2], [1], [1], [2], [0, 0, 0, 1, 1, 2], [0], [0]>} : vector<2x8x8xbf16>, vector<2x8x8xbf16>, vector<2x8x8xf32> -> vector<2x8x8xf32>
    "tpu.trace_stop"() : () -> ()
    %44 = vector.shape_cast %43 : vector<2x8x8xf32> to vector<16x8xf32>
    %45 = vector.extract_strided_slice %21 {offsets = [0, 0, 8], sizes = [2, 8, 8], strides = [1, 1, 1]} : vector<2x8x96xf32> to vector<2x8x8xf32>
    %46 = arith.truncf %45 : vector<2x8x8xf32> to vector<2x8x8xbf16>
    %47 = vector.extract_strided_slice %21 {offsets = [0, 0, 40], sizes = [2, 8, 8], strides = [1, 1, 1]} : vector<2x8x96xf32> to vector<2x8x8xf32>
    %48 = arith.truncf %47 : vector<2x8x8xf32> to vector<2x8x8xbf16>
    %49 = vector.extract_strided_slice %21 {offsets = [0, 0, 72], sizes = [2, 8, 8], strides = [1, 1, 1]} : vector<2x8x96xf32> to vector<2x8x8xf32>
    %50 = arith.truncf %49 : vector<2x8x8xf32> to vector<2x8x8xbf16>
    "tpu.trace_start"() <{level = 10 : i32, message = "bqd,bkd->bqk"}> : () -> ()
    %cst_32 = arith.constant dense<0.000000e+00> : vector<2x8x8xf32>
    %51 = tpu.matmul %46, %48, %cst_32 {dimension_numbers = #tpu.dot_dimension_numbers<[2], [2], [1], [1], [0, 0, 0, 1, 1, 1], [0], [0]>} : vector<2x8x8xbf16>, vector<2x8x8xbf16>, vector<2x8x8xf32> -> vector<2x8x8xf32>
    "tpu.trace_stop"() : () -> ()
    %cst_33 = arith.constant 0.353553385 : f32
    %52 = vector.broadcast %cst_33 : f32 to vector<2x8x8xf32>
    %53 = arith.mulf %51, %52 : vector<2x8x8xf32>
    %54 = arith.addf %53, %3 : vector<2x8x8xf32>
    %cst_34 = arith.constant dense<0xFF800000> : vector<2x8xf32>
    %55 = vector.multi_reduction <maximumf>, %54, %cst_34 [2] : vector<2x8x8xf32> to vector<2x8xf32>
    %56 = vector.shape_cast %55 : vector<2x8xf32> to vector<2x8x1xf32>
    %57 = vector.broadcast %56 : vector<2x8x1xf32> to vector<2x8x8xf32>
    %58 = arith.subf %54, %57 : vector<2x8x8xf32>
    %59 = math.exp %58 : vector<2x8x8xf32>
    %cst_35 = arith.constant dense<0.000000e+00> : vector<2x8xf32>
    %60 = vector.multi_reduction <add>, %59, %cst_35 [2] : vector<2x8x8xf32> to vector<2x8xf32>
    %61 = vector.shape_cast %60 : vector<2x8xf32> to vector<2x8x1xf32>
    %62 = tpu.reciprocal %61 {approx = true} : vector<2x8x1xf32> -> vector<2x8x1xf32>
    %63 = vector.broadcast %62 : vector<2x8x1xf32> to vector<2x8x8xf32>
    %64 = arith.mulf %59, %63 : vector<2x8x8xf32>
    %65 = arith.truncf %64 : vector<2x8x8xf32> to vector<2x8x8xbf16>
    "tpu.trace_start"() <{level = 10 : i32, message = "bqk,bkd->bqd"}> : () -> ()
    %cst_36 = arith.constant dense<0.000000e+00> : vector<2x8x8xf32>
    %66 = tpu.matmul %65, %50, %cst_36 {dimension_numbers = #tpu.dot_dimension_numbers<[2], [1], [1], [2], [0, 0, 0, 1, 1, 2], [0], [0]>} : vector<2x8x8xbf16>, vector<2x8x8xbf16>, vector<2x8x8xf32> -> vector<2x8x8xf32>
    "tpu.trace_stop"() : () -> ()
    %67 = vector.shape_cast %66 : vector<2x8x8xf32> to vector<16x8xf32>
    %68 = vector.extract_strided_slice %21 {offsets = [0, 0, 16], sizes = [2, 8, 8], strides = [1, 1, 1]} : vector<2x8x96xf32> to vector<2x8x8xf32>
    %69 = arith.truncf %68 : vector<2x8x8xf32> to vector<2x8x8xbf16>
    %70 = vector.extract_strided_slice %21 {offsets = [0, 0, 48], sizes = [2, 8, 8], strides = [1, 1, 1]} : vector<2x8x96xf32> to vector<2x8x8xf32>
    %71 = arith.truncf %70 : vector<2x8x8xf32> to vector<2x8x8xbf16>
    %72 = vector.extract_strided_slice %21 {offsets = [0, 0, 80], sizes = [2, 8, 8], strides = [1, 1, 1]} : vector<2x8x96xf32> to vector<2x8x8xf32>
    %73 = arith.truncf %72 : vector<2x8x8xf32> to vector<2x8x8xbf16>
    "tpu.trace_start"() <{level = 10 : i32, message = "bqd,bkd->bqk"}> : () -> ()
    %cst_37 = arith.constant dense<0.000000e+00> : vector<2x8x8xf32>
    %74 = tpu.matmul %69, %71, %cst_37 {dimension_numbers = #tpu.dot_dimension_numbers<[2], [2], [1], [1], [0, 0, 0, 1, 1, 1], [0], [0]>} : vector<2x8x8xbf16>, vector<2x8x8xbf16>, vector<2x8x8xf32> -> vector<2x8x8xf32>
    "tpu.trace_stop"() : () -> ()
    %cst_38 = arith.constant 0.353553385 : f32
    %75 = vector.broadcast %cst_38 : f32 to vector<2x8x8xf32>
    %76 = arith.mulf %74, %75 : vector<2x8x8xf32>
    %77 = arith.addf %76, %3 : vector<2x8x8xf32>
    %cst_39 = arith.constant dense<0xFF800000> : vector<2x8xf32>
    %78 = vector.multi_reduction <maximumf>, %77, %cst_39 [2] : vector<2x8x8xf32> to vector<2x8xf32>
    %79 = vector.shape_cast %78 : vector<2x8xf32> to vector<2x8x1xf32>
    %80 = vector.broadcast %79 : vector<2x8x1xf32> to vector<2x8x8xf32>
    %81 = arith.subf %77, %80 : vector<2x8x8xf32>
    %82 = math.exp %81 : vector<2x8x8xf32>
    %cst_40 = arith.constant dense<0.000000e+00> : vector<2x8xf32>
    %83 = vector.multi_reduction <add>, %82, %cst_40 [2] : vector<2x8x8xf32> to vector<2x8xf32>
    %84 = vector.shape_cast %83 : vector<2x8xf32> to vector<2x8x1xf32>
    %85 = tpu.reciprocal %84 {approx = true} : vector<2x8x1xf32> -> vector<2x8x1xf32>
    %86 = vector.broadcast %85 : vector<2x8x1xf32> to vector<2x8x8xf32>
    %87 = arith.mulf %82, %86 : vector<2x8x8xf32>
    %88 = arith.truncf %87 : vector<2x8x8xf32> to vector<2x8x8xbf16>
    "tpu.trace_start"() <{level = 10 : i32, message = "bqk,bkd->bqd"}> : () -> ()
    %cst_41 = arith.constant dense<0.000000e+00> : vector<2x8x8xf32>
    %89 = tpu.matmul %88, %73, %cst_41 {dimension_numbers = #tpu.dot_dimension_numbers<[2], [1], [1], [2], [0, 0, 0, 1, 1, 2], [0], [0]>} : vector<2x8x8xbf16>, vector<2x8x8xbf16>, vector<2x8x8xf32> -> vector<2x8x8xf32>
    "tpu.trace_stop"() : () -> ()
    %90 = vector.shape_cast %89 : vector<2x8x8xf32> to vector<16x8xf32>
    %91 = vector.extract_strided_slice %21 {offsets = [0, 0, 24], sizes = [2, 8, 8], strides = [1, 1, 1]} : vector<2x8x96xf32> to vector<2x8x8xf32>
    %92 = arith.truncf %91 : vector<2x8x8xf32> to vector<2x8x8xbf16>
    %93 = vector.extract_strided_slice %21 {offsets = [0, 0, 56], sizes = [2, 8, 8], strides = [1, 1, 1]} : vector<2x8x96xf32> to vector<2x8x8xf32>
    %94 = arith.truncf %93 : vector<2x8x8xf32> to vector<2x8x8xbf16>
    %95 = vector.extract_strided_slice %21 {offsets = [0, 0, 88], sizes = [2, 8, 8], strides = [1, 1, 1]} : vector<2x8x96xf32> to vector<2x8x8xf32>
    %96 = arith.truncf %95 : vector<2x8x8xf32> to vector<2x8x8xbf16>
    "tpu.trace_start"() <{level = 10 : i32, message = "bqd,bkd->bqk"}> : () -> ()
    %cst_42 = arith.constant dense<0.000000e+00> : vector<2x8x8xf32>
    %97 = tpu.matmul %92, %94, %cst_42 {dimension_numbers = #tpu.dot_dimension_numbers<[2], [2], [1], [1], [0, 0, 0, 1, 1, 1], [0], [0]>} : vector<2x8x8xbf16>, vector<2x8x8xbf16>, vector<2x8x8xf32> -> vector<2x8x8xf32>
    "tpu.trace_stop"() : () -> ()
    %cst_43 = arith.constant 0.353553385 : f32
    %98 = vector.broadcast %cst_43 : f32 to vector<2x8x8xf32>
    %99 = arith.mulf %97, %98 : vector<2x8x8xf32>
    %100 = arith.addf %99, %3 : vector<2x8x8xf32>
    %cst_44 = arith.constant dense<0xFF800000> : vector<2x8xf32>
    %101 = vector.multi_reduction <maximumf>, %100, %cst_44 [2] : vector<2x8x8xf32> to vector<2x8xf32>
    %102 = vector.shape_cast %101 : vector<2x8xf32> to vector<2x8x1xf32>
    %103 = vector.broadcast %102 : vector<2x8x1xf32> to vector<2x8x8xf32>
    %104 = arith.subf %100, %103 : vector<2x8x8xf32>
    %105 = math.exp %104 : vector<2x8x8xf32>
    %cst_45 = arith.constant dense<0.000000e+00> : vector<2x8xf32>
    %106 = vector.multi_reduction <add>, %105, %cst_45 [2] : vector<2x8x8xf32> to vector<2x8xf32>
    %107 = vector.shape_cast %106 : vector<2x8xf32> to vector<2x8x1xf32>
    %108 = tpu.reciprocal %107 {approx = true} : vector<2x8x1xf32> -> vector<2x8x1xf32>
    %109 = vector.broadcast %108 : vector<2x8x1xf32> to vector<2x8x8xf32>
    %110 = arith.mulf %105, %109 : vector<2x8x8xf32>
    %111 = arith.truncf %110 : vector<2x8x8xf32> to vector<2x8x8xbf16>
    "tpu.trace_start"() <{level = 10 : i32, message = "bqk,bkd->bqd"}> : () -> ()
    %cst_46 = arith.constant dense<0.000000e+00> : vector<2x8x8xf32>
    %112 = tpu.matmul %111, %96, %cst_46 {dimension_numbers = #tpu.dot_dimension_numbers<[2], [1], [1], [2], [0, 0, 0, 1, 1, 2], [0], [0]>} : vector<2x8x8xbf16>, vector<2x8x8xbf16>, vector<2x8x8xf32> -> vector<2x8x8xf32>
    "tpu.trace_stop"() : () -> ()
    %113 = vector.shape_cast %112 : vector<2x8x8xf32> to vector<16x8xf32>
    %114 = tpu.concatenate %44, %67, %90, %113 in 1 : vector<16x8xf32>, vector<16x8xf32>, vector<16x8xf32>, vector<16x8xf32> -> vector<16x32xf32>
    %115 = arith.truncf %114 : vector<16x32xf32> to vector<16x32xbf16>
    %cst_47 = arith.constant dense<0.000000e+00> : vector<16x32xf32>
    %116 = tpu.matmul %115, %7, %cst_47 {dimension_numbers = #tpu.dot_dimension_numbers<[1], [0], [0], [1], [0, 0, 1, 1], [], []>} : vector<16x32xbf16>, vector<32x32xbf16>, vector<16x32xf32> -> vector<16x32xf32>
    %117 = vector.broadcast %8 : vector<1x32xf32> to vector<16x32xf32>
    %118 = arith.addf %116, %117 : vector<16x32xf32>
    %119 = arith.addf %118, %4 : vector<16x32xf32>
    %cst_48 = arith.constant dense<0.000000e+00> : vector<16xf32>
    %120 = vector.multi_reduction <add>, %119, %cst_48 [1] : vector<16x32xf32> to vector<16xf32>
    %121 = vector.shape_cast %120 : vector<16xf32> to vector<16x1xf32>
    %cst_49 = arith.constant 3.200000e+01 : f32
    %122 = vector.broadcast %cst_49 : f32 to vector<16x1xf32>
    %123 = arith.divf %121, %122 : vector<16x1xf32>
    %124 = vector.broadcast %123 : vector<16x1xf32> to vector<16x32xf32>
    %125 = arith.subf %119, %124 : vector<16x32xf32>
    %126 = arith.mulf %125, %125 : vector<16x32xf32>
    %cst_50 = arith.constant dense<0.000000e+00> : vector<16xf32>
    %127 = vector.multi_reduction <add>, %126, %cst_50 [1] : vector<16x32xf32> to vector<16xf32>
    %128 = vector.shape_cast %127 : vector<16xf32> to vector<16x1xf32>
    %cst_51 = arith.constant 3.200000e+01 : f32
    %129 = vector.broadcast %cst_51 : f32 to vector<16x1xf32>
    %130 = arith.divf %128, %129 : vector<16x1xf32>
    %cst_52 = arith.constant 9.99999974E-6 : f32
    %131 = vector.broadcast %cst_52 : f32 to vector<16x1xf32>
    %132 = arith.addf %130, %131 : vector<16x1xf32>
    %133 = math.rsqrt %132 : vector<16x1xf32>
    %134 = vector.broadcast %133 : vector<16x1xf32> to vector<16x32xf32>
    %135 = arith.mulf %125, %134 : vector<16x32xf32>
    %136 = vector.broadcast %9 : vector<1x32xf32> to vector<16x32xf32>
    %137 = arith.mulf %135, %136 : vector<16x32xf32>
    %138 = vector.broadcast %10 : vector<1x32xf32> to vector<16x32xf32>
    %139 = arith.addf %137, %138 : vector<16x32xf32>
    %140 = arith.truncf %139 : vector<16x32xf32> to vector<16x32xbf16>
    %cst_53 = arith.constant dense<0.000000e+00> : vector<16x64xf32>
    %141 = tpu.matmul %140, %11, %cst_53 {dimension_numbers = #tpu.dot_dimension_numbers<[1], [0], [0], [1], [0, 0, 1, 1], [], []>} : vector<16x32xbf16>, vector<32x64xbf16>, vector<16x64xf32> -> vector<16x64xf32>
    %142 = vector.broadcast %12 : vector<1x64xf32> to vector<16x64xf32>
    %143 = arith.addf %141, %142 : vector<16x64xf32>
    %cst_54 = arith.constant 5.000000e-01 : f32
    %144 = vector.broadcast %cst_54 : f32 to vector<16x64xf32>
    %145 = arith.mulf %144, %143 : vector<16x64xf32>
    %cst_55 = arith.constant 0.707106769 : f32
    %146 = vector.broadcast %cst_55 : f32 to vector<16x64xf32>
    %147 = arith.mulf %143, %146 : vector<16x64xf32>
    %148 = math.erf %147 : vector<16x64xf32>
    %cst_56 = arith.constant 1.000000e+00 : f32
    %149 = vector.broadcast %cst_56 : f32 to vector<16x64xf32>
    %150 = arith.addf %149, %148 : vector<16x64xf32>
    %151 = arith.mulf %145, %150 : vector<16x64xf32>
    %152 = arith.truncf %151 : vector<16x64xf32> to vector<16x64xbf16>
    %cst_57 = arith.constant dense<0.000000e+00> : vector<16x32xf32>
    %153 = tpu.matmul %152, %13, %cst_57 {dimension_numbers = #tpu.dot_dimension_numbers<[1], [0], [0], [1], [0, 0, 1, 1], [], []>} : vector<16x64xbf16>, vector<64x32xbf16>, vector<16x32xf32> -> vector<16x32xf32>
    %154 = vector.broadcast %14 : vector<1x32xf32> to vector<16x32xf32>
    %155 = arith.addf %153, %154 : vector<16x32xf32>
    %156 = arith.addf %155, %139 : vector<16x32xf32>
    %cst_58 = arith.constant dense<0.000000e+00> : vector<16xf32>
    %157 = vector.multi_reduction <add>, %156, %cst_58 [1] : vector<16x32xf32> to vector<16xf32>
    %158 = vector.shape_cast %157 : vector<16xf32> to vector<16x1xf32>
    %cst_59 = arith.constant 3.200000e+01 : f32
    %159 = vector.broadcast %cst_59 : f32 to vector<16x1xf32>
    %160 = arith.divf %158, %159 : vector<16x1xf32>
    %161 = vector.broadcast %160 : vector<16x1xf32> to vector<16x32xf32>
    %162 = arith.subf %156, %161 : vector<16x32xf32>
    %163 = arith.mulf %162, %162 : vector<16x32xf32>
    %cst_60 = arith.constant dense<0.000000e+00> : vector<16xf32>
    %164 = vector.multi_reduction <add>, %163, %cst_60 [1] : vector<16x32xf32> to vector<16xf32>
    %165 = vector.shape_cast %164 : vector<16xf32> to vector<16x1xf32>
    %cst_61 = arith.constant 3.200000e+01 : f32
    %166 = vector.broadcast %cst_61 : f32 to vector<16x1xf32>
    %167 = arith.divf %165, %166 : vector<16x1xf32>
    %cst_62 = arith.constant 9.99999974E-6 : f32
    %168 = vector.broadcast %cst_62 : f32 to vector<16x1xf32>
    %169 = arith.addf %167, %168 : vector<16x1xf32>
    %170 = math.rsqrt %169 : vector<16x1xf32>
    %171 = vector.broadcast %170 : vector<16x1xf32> to vector<16x32xf32>
    %172 = arith.mulf %162, %171 : vector<16x32xf32>
    %173 = vector.broadcast %15 : vector<1x32xf32> to vector<16x32xf32>
    %174 = arith.mulf %172, %173 : vector<16x32xf32>
    %175 = vector.broadcast %16 : vector<1x32xf32> to vector<16x32xf32>
    %176 = arith.addf %174, %175 : vector<16x32xf32>
    %177 = arith.truncf %176 : vector<16x32xf32> to vector<16x32xbf16>
    %c0_63 = arith.constant 0 : index
    %c0_64 = arith.constant 0 : index
    %178 = vector.load %arg14[%c0_63, %c0_64] : memref<32x16xbf16, #tpu.memory_space<vmem>>, vector<32x16xbf16>
    %cst_65 = arith.constant dense<0.000000e+00> : vector<16x16xf32>
    %179 = tpu.matmul %177, %178, %cst_65 {dimension_numbers = #tpu.dot_dimension_numbers<[1], [0], [0], [1], [0, 0, 1, 1], [], []>} : vector<16x32xbf16>, vector<32x16xbf16>, vector<16x16xf32> -> vector<16x16xf32>
    %c0_66 = arith.constant 0 : index
    %c0_67 = arith.constant 0 : index
    %180 = vector.load %arg15[%c0_66, %c0_67] : memref<1x16xf32, #tpu.memory_space<vmem>>, vector<1x16xf32>
    %181 = vector.broadcast %180 : vector<1x16xf32> to vector<16x16xf32>
    %182 = arith.addf %179, %181 : vector<16x16xf32>
    %183 = arith.truncf %182 : vector<16x16xf32> to vector<16x16xbf16>
    %c0_68 = arith.constant 0 : index
    %c0_69 = arith.constant 0 : index
    %184 = vector.load %arg16[%c0_68, %c0_69] : memref<16x32xbf16, #tpu.memory_space<vmem>>, vector<16x32xbf16>
    %cst_70 = arith.constant dense<0.000000e+00> : vector<16x32xf32>
    %185 = tpu.matmul %183, %184, %cst_70 {dimension_numbers = #tpu.dot_dimension_numbers<[1], [0], [0], [1], [0, 0, 1, 1], [], []>} : vector<16x16xbf16>, vector<16x32xbf16>, vector<16x32xf32> -> vector<16x32xf32>
    %c0_71 = arith.constant 0 : index
    %c0_72 = arith.constant 0 : index
    %186 = vector.load %arg17[%c0_71, %c0_72] : memref<1x32xf32, #tpu.memory_space<vmem>>, vector<1x32xf32>
    %187 = vector.broadcast %186 : vector<1x32xf32> to vector<16x32xf32>
    %188 = arith.addf %185, %187 : vector<16x32xf32>
    %189 = vector.shape_cast %188 : vector<16x32xf32> to vector<2x8x32xf32>
    %190 = vector.extract_strided_slice %189 {offsets = [0, 0, 0], sizes = [2, 1, 32], strides = [1, 1, 1]} : vector<2x8x32xf32> to vector<2x1x32xf32>
    %191 = vector.shape_cast %190 : vector<2x1x32xf32> to vector<2x32xf32>
    %192 = arith.truncf %191 : vector<2x32xf32> to vector<2x32xbf16>
    %c0_73 = arith.constant 0 : index
    %c0_74 = arith.constant 0 : index
    %193 = vector.load %arg18[%c0_73, %c0_74] : memref<32x32xbf16, #tpu.memory_space<vmem>>, vector<32x32xbf16>
    %cst_75 = arith.constant dense<0.000000e+00> : vector<2x32xf32>
    %194 = tpu.matmul %192, %193, %cst_75 {dimension_numbers = #tpu.dot_dimension_numbers<[1], [0], [0], [1], [0, 0, 1, 1], [], []>} : vector<2x32xbf16>, vector<32x32xbf16>, vector<2x32xf32> -> vector<2x32xf32>
    %c0_76 = arith.constant 0 : index
    %c0_77 = arith.constant 0 : index
    %195 = vector.load %arg19[%c0_76, %c0_77] : memref<1x32xf32, #tpu.memory_space<vmem>>, vector<1x32xf32>
    %196 = vector.broadcast %195 : vector<1x32xf32> to vector<2x32xf32>
    %197 = arith.addf %194, %196 : vector<2x32xf32>
    %198 = math.tanh %197 : vector<2x32xf32>
    %199 = arith.truncf %198 : vector<2x32xf32> to vector<2x32xbf16>
    %c0_78 = arith.constant 0 : index
    %c0_79 = arith.constant 0 : index
    %200 = vector.load %arg20[%c0_78, %c0_79] : memref<32x128xbf16, #tpu.memory_space<vmem>>, vector<32x128xbf16>
    %cst_80 = arith.constant dense<0.000000e+00> : vector<2x128xf32>
    %201 = tpu.matmul %199, %200, %cst_80 {dimension_numbers = #tpu.dot_dimension_numbers<[1], [0], [0], [1], [0, 0, 1, 1], [], []>} : vector<2x32xbf16>, vector<32x128xbf16>, vector<2x128xf32> -> vector<2x128xf32>
    %c0_81 = arith.constant 0 : index
    %c0_82 = arith.constant 0 : index
    %202 = vector.load %arg21[%c0_81, %c0_82] : memref<1x128xf32, #tpu.memory_space<vmem>>, vector<1x128xf32>
    %203 = vector.broadcast %202 : vector<1x128xf32> to vector<2x128xf32>
    %204 = arith.addf %201, %203 : vector<2x128xf32>
    %c0_83 = arith.constant 0 : index
    %c0_84 = arith.constant 0 : index
    %205 = vector.load %arg22[%c0_83, %c0_84] : memref<2x128xf32, #tpu.memory_space<vmem>>, vector<2x128xf32>
    tpu.vector_store %arg22[%c0_83, %c0_84], %204 {strides = array<i32>} : memref<2x128xf32, #tpu.memory_space<vmem>>, vector<2x128xf32>,
    return
  }
}

</mosaic_0001>

<llo_original>
// kernel: robertabase_linear4_forward.4
$region0: #{robertabase_linear4_forward.4}
  #allocation0 [shape = 'u32[]', space=smem, size = 0x4, offset = 0x4, fixed_abs, tag = 'smem constant byte address 0x4 - core index']
  #allocation1 [shape = 'u32[144,128]{1,0:T(1,128)}', space=vmem, size = 0x12000, scoped, tag = 'internal scratch']
  %s0 = inlined_call_operand.vmem [shape: f32[16,32], index: 0, kind: input, shape index: {}, may-alias: {0,14}]
  %s1 = inlined_call_operand.vmem [shape: f32[2,8], index: 1, kind: input, shape index: {}]
  %s2 = inlined_call_operand.vmem [shape: bf16[32,96], index: 2, kind: input, shape index: {}]
  %s3 = inlined_call_operand.vmem [shape: f32[1,96], index: 3, kind: input, shape index: {}]
  %s4 = inlined_call_operand.vmem [shape: bf16[32,32], index: 4, kind: input, shape index: {}]
  %s5 = inlined_call_operand.vmem [shape: f32[1,32], index: 5, kind: input, shape index: {}]
  %s6 = inlined_call_operand.vmem [shape: f32[1,32], index: 6, kind: input, shape index: {}]
  %s7 = inlined_call_operand.vmem [shape: f32[1,32], index: 7, kind: input, shape index: {}]
  %s8 = inlined_call_operand.vmem [shape: bf16[32,64], index: 8, kind: input, shape index: {}]
  %s9 = inlined_call_operand.vmem [shape: f32[1,64], index: 9, kind: input, shape index: {}]
  %s10 = inlined_call_operand.vmem [shape: bf16[64,32], index: 10, kind: input, shape index: {}]
  %s11 = inlined_call_operand.vmem [shape: f32[1,32], index: 11, kind: input, shape index: {}]
  %s12 = inlined_call_operand.vmem [shape: f32[1,32], index: 12, kind: input, shape index: {}]
  %s13 = inlined_call_operand.vmem [shape: f32[1,32], index: 13, kind: input, shape index: {}]
  %s14 = inlined_call_operand.vmem [shape: f32[16,32], index: 14, kind: output, shape index: {}, may-alias: {0,14}]
  %s15 = sld [smem:[#allocation0]]
  $region66: #{robertabase_linear4_forward.4} parent=0
    _
  %s17 = ssub.s32 1, %s15
  %s18 = scalar_select 0, %s17, %s15
  // Predicated region
  $region2: #{robertabase_linear4_forward.4} parent=0 // pred_check
    _
  $region3: #{robertabase_linear4_forward.4} parent=0 // pred_check_branch
    %20 = sbr.rel (0) target = $region5
  $region4: #{robertabase_linear4_forward.4} parent=0 // pred_region
    _
  $region5: #{robertabase_linear4_forward.4} parent=0 // pred_fallthru
    _
  // Predicated region
  $region6: #{robertabase_linear4_forward.4} parent=0 // pred_check
    _
  $region7: #{robertabase_linear4_forward.4} parent=0 // pred_check_branch
    %22 = sbr.rel (0) target = $region9
  $region8: #{robertabase_linear4_forward.4} parent=0 // pred_region
    _
  $region9: #{robertabase_linear4_forward.4} parent=0 // pred_fallthru
    _
  // Predicated region
  $region10: #{robertabase_linear4_forward.4} parent=0 // pred_check
    _
  $region11: #{robertabase_linear4_forward.4} parent=0 // pred_check_branch
    %24 = sbr.rel (0) target = $region13
  $region12: #{robertabase_linear4_forward.4} parent=0 // pred_region
    _
  $region13: #{robertabase_linear4_forward.4} parent=0 // pred_fallthru
    _
  // Predicated region
  $region14: #{robertabase_linear4_forward.4} parent=0 // pred_check
    _
  $region15: #{robertabase_linear4_forward.4} parent=0 // pred_check_branch
    %26 = sbr.rel (0) target = $region17
  $region16: #{robertabase_linear4_forward.4} parent=0 // pred_region
    _
  $region17: #{robertabase_linear4_forward.4} parent=0 // pred_fallthru
    _
  // Predicated region
  $region18: #{robertabase_linear4_forward.4} parent=0 // pred_check
    _
  $region19: #{robertabase_linear4_forward.4} parent=0 // pred_check_branch
    %28 = sbr.rel (0) target = $region21
  $region20: #{robertabase_linear4_forward.4} parent=0 // pred_region
    _
  $region21: #{robertabase_linear4_forward.4} parent=0 // pred_fallthru
    _
  // Predicated region
  $region22: #{robertabase_linear4_forward.4} parent=0 // pred_check
    _
  $region23: #{robertabase_linear4_forward.4} parent=0 // pred_check_branch
    %30 = sbr.rel (0) target = $region25
  $region24: #{robertabase_linear4_forward.4} parent=0 // pred_region
    _
  $region25: #{robertabase_linear4_forward.4} parent=0 // pred_fallthru
    _
  // Predicated region
  $region26: #{robertabase_linear4_forward.4} parent=0 // pred_check
    _
  $region27: #{robertabase_linear4_forward.4} parent=0 // pred_check_branch
    %32 = sbr.rel (0) target = $region29
  $region28: #{robertabase_linear4_forward.4} parent=0 // pred_region
    _
  $region29: #{robertabase_linear4_forward.4} parent=0 // pred_fallthru
    _
  // Predicated region
  $region30: #{robertabase_linear4_forward.4} parent=0 // pred_check
    _
  $region31: #{robertabase_linear4_forward.4} parent=0 // pred_check_branch
    %34 = sbr.rel (0) target = $region33
  $region32: #{robertabase_linear4_forward.4} parent=0 // pred_region
    _
  $region33: #{robertabase_linear4_forward.4} parent=0 // pred_fallthru
    _
  // Predicated region
  $region34: #{robertabase_linear4_forward.4} parent=0 // pred_check
    _
  $region35: #{robertabase_linear4_forward.4} parent=0 // pred_check_branch
    %36 = sbr.rel (0) target = $region37
  $region36: #{robertabase_linear4_forward.4} parent=0 // pred_region
    _
  $region37: #{robertabase_linear4_forward.4} parent=0 // pred_fallthru
    _
  // Predicated region
  $region38: #{robertabase_linear4_forward.4} parent=0 // pred_check
    _
  $region39: #{robertabase_linear4_forward.4} parent=0 // pred_check_branch
    %38 = sbr.rel (0) target = $region41
  $region40: #{robertabase_linear4_forward.4} parent=0 // pred_region
    _
  $region41: #{robertabase_linear4_forward.4} parent=0 // pred_fallthru
    _
  // Predicated region
  $region42: #{robertabase_linear4_forward.4} parent=0 // pred_check
    _
  $region43: #{robertabase_linear4_forward.4} parent=0 // pred_check_branch
    %40 = sbr.rel (0) target = $region45
  $region44: #{robertabase_linear4_forward.4} parent=0 // pred_region
    _
  $region45: #{robertabase_linear4_forward.4} parent=0 // pred_fallthru
    _
  // Predicated region
  $region46: #{robertabase_linear4_forward.4} parent=0 // pred_check
    _
  $region47: #{robertabase_linear4_forward.4} parent=0 // pred_check_branch
    %42 = sbr.rel (0) target = $region49
  $region48: #{robertabase_linear4_forward.4} parent=0 // pred_region
    _
  $region49: #{robertabase_linear4_forward.4} parent=0 // pred_fallthru
    _
  // Predicated region
  $region50: #{robertabase_linear4_forward.4} parent=0 // pred_check
    _
  $region51: #{robertabase_linear4_forward.4} parent=0 // pred_check_branch
    %44 = sbr.rel (0) target = $region53
  $region52: #{robertabase_linear4_forward.4} parent=0 // pred_region
    _
  $region53: #{robertabase_linear4_forward.4} parent=0 // pred_fallthru
    _
  // Predicated region
  $region54: #{robertabase_linear4_forward.4} parent=0 // pred_check
    _
  $region55: #{robertabase_linear4_forward.4} parent=0 // pred_check_branch
    %46 = sbr.rel (0) target = $region57
  $region56: #{robertabase_linear4_forward.4} parent=0 // pred_region
    _
  $region57: #{robertabase_linear4_forward.4} parent=0 // pred_fallthru
    _
  %v48 = vld [vmem:[%s1] sm:$0x3]
  %v51 = vunpack.c.l.s4 1966171168
  %v52 = vunpack.c.0.s8 %v51
  %v53 = vlaneseq
  %v54 = vshrl.u32 %v53, 7
  %v55 = vsub.s32 %v52, %v54
  %v56 = vrot.slane %v48, %v55
  %v57 = vcombine.high %v56, %v56
  %v59 = vunpack.c.l.s4 1966171168
  %v60 = vunpack.c.0.s8 %v59
  %v61 = vlaneseq
  %v62 = vshrl.u32 %v61, 7
  %v63 = vsub.s32 %v60, %v62
  %v64 = vrot.slane %v56, %v63
  %v66 = vunpack.c.l.s4 1966171168
  %v67 = vunpack.c.0.s8 %v66
  %v68 = vlaneseq
  %v69 = vshrl.u32 %v68, 7
  %v70 = vsub.s32 %v67, %v69
  %v71 = vrot.slane %v57, %v70
  %v72 = vlaneseq
  %v73 = vshrl.u32 %v72, 7
  %v74 = vsub.s32 0, %v73
  %v75 = vrot.slane %v64, %v74
  %v76 = vlaneseq
  %v77 = vshrl.u32 %v76, 7
  %v78 = vsub.s32 0, %v77
  %v79 = vrot.slane %v71, %v78
  %v82 = vld [vmem:[%s0] sm:$0xff]
  %v83 = vld [vmem:[%s0 + $0x8] sm:$0xff]
  %v84 = vld [vmem:[%s2] sm:$0xf]
  %v85 = vld [vmem:[%s2 + $0x4] sm:$0xf]
  %v86 = vld [vmem:[%s2 + $0x8] sm:$0xf]
  %v87 = vld [vmem:[%s2 + $0xc] sm:$0xf]
  %v88 = vld [vmem:[%s3] sm:$0x1]
  %v89 = vld [vmem:[%s4] sm:$0xf]
  %v90 = vld [vmem:[%s4 + $0x4] sm:$0xf]
  %v91 = vld [vmem:[%s4 + $0x8] sm:$0xf]
  %v92 = vld [vmem:[%s4 + $0xc] sm:$0xf]
  %v93 = vld [vmem:[%s5] sm:$0x1]
  %v94 = vld [vmem:[%s6] sm:$0x1]
  %v95 = vld [vmem:[%s7] sm:$0x1]
  %v96 = vld [vmem:[%s8] sm:$0xf]
  %v97 = vld [vmem:[%s8 + $0x4] sm:$0xf]
  %v98 = vld [vmem:[%s8 + $0x8] sm:$0xf]
  %v99 = vld [vmem:[%s8 + $0xc] sm:$0xf]
  %v100 = vld [vmem:[%s9] sm:$0x1]
  %v101 = vld [vmem:[%s10] sm:$0xf]
  %v102 = vld [vmem:[%s10 + $0x4] sm:$0xf]
  %v103 = vld [vmem:[%s10 + $0x8] sm:$0xf]
  %v104 = vld [vmem:[%s10 + $0xc] sm:$0xf]
  %v105 = vld [vmem:[%s10 + $0x10] sm:$0xf]
  %v106 = vld [vmem:[%s10 + $0x14] sm:$0xf]
  %v107 = vld [vmem:[%s10 + $0x18] sm:$0xf]
  %v108 = vld [vmem:[%s10 + $0x1c] sm:$0xf]
  %v109 = vld [vmem:[%s11] sm:$0x1]
  %v110 = vld [vmem:[%s12] sm:$0x1]
  %v111 = vld [vmem:[%s13] sm:$0x1]
  %v112 = vpack.c.bf16 %v83, %v82
  %v114 = vlaneseq
  %v115 = vshrl.u32 %v114, 7
  %v116 = vsub.s32 0, %v115
  %v117 = vrot.slane %v88, %v116
  %v123 = vunpack.c.l.b16 %v84
  %v124 = vunpack.c.l.b16 %v85
  %v125 = vunpack.c.l.b16 %v86
  %v126 = vunpack.c.l.b16 %v87
  %v127 = vpack.c.b16 %v124, %v123
  %v128 = vpack.c.b16 %v126, %v125
  %vm131 = vcmask 261120
  %v133 = vsel %vm131, %v112, 0
  %135 = vmatprep.subr.bf16.mxu0 0
  %136 = vmatpush1.bf16.msra.mxu0 %v127
  %137 = vmatprep.subr.bf16.mxu0 0
  %138 = vmatpush1.bf16.msra.mxu0 %v128
  %139 = vmatprep.subr.bf16.mxu0 0
  %140 = vmatpush1.bf16.msra.mxu0 0
  %141 = vmatprep.subr.bf16.mxu0 0
  %142 = vmatpush1.bf16.msra.mxu0 0
  %143 = vmatprep.subr.bf16.mxu0 0
  %144 = vmatpush1.bf16.msra.mxu0 0
  %145 = vmatprep.subr.bf16.mxu0 0
  %146 = vmatpush1.bf16.msra.mxu0 0
  %147 = vmatprep.subr.bf16.mxu0 0
  %148 = vmatpush1.bf16.msra.mxu0 0
  %149 = vmatprep.subr.bf16.mxu0 0
  %150 = vmatpush1.bf16.msra.mxu0 0
  %151 = vmatprep.subr.bf16.mxu0 0
  %152 = vmatpush1.bf16.msra.mxu0 0
  %153 = vmatprep.subr.bf16.mxu0 0
  %154 = vmatpush1.bf16.msra.mxu0 0
  %155 = vmatprep.subr.bf16.mxu0 0
  %156 = vmatpush1.bf16.msra.mxu0 0
  %157 = vmatprep.subr.bf16.mxu0 0
  %158 = vmatpush1.bf16.msra.mxu0 0
  %159 = vmatprep.subr.bf16.mxu0 0
  %160 = vmatpush1.bf16.msra.mxu0 0
  %161 = vmatprep.subr.bf16.mxu0 0
  %162 = vmatpush1.bf16.msra.mxu0 0
  %163 = vmatprep.subr.bf16.mxu0 0
  %164 = vmatpush1.bf16.msra.mxu0 0
  %165 = vmatprep.subr.bf16.mxu0 0
  %166 = vmatpush1.bf16.msra.mxu0 0
  %167 = vmatprep.mubr.bf16.mxu0 0
  %168 = vmatmul.mubr.bf16.gmra.mrb[0].mxu0 %v133
  %v169 = vpop.f32.mrb[0].mxu0
  %v170 = vadd.f32 %v117, %v169
  %v171 = vpop.f32.mrb[0].mxu0
  %v172 = vpop.f32.mrb[0].mxu0
  %v173 = vadd.f32 %v117, %v172
  %v174 = vpop.f32.mrb[0].mxu0
  %175 = vdwg.mxu0
  %v176 = vpack.c.bf16 %v170, %v170
  %v177 = vpack.c.bf16 %v173, %v173
  %179 = vrot.lane.b32.xlu0 %v176, 96
  %v180 = vpop.permute.xlu0 %179
  %vm181 = vcmask 64512
  %v183 = vsel %vm181, %v176, 0
  %v186 = vsel %vm181, %v180, 0
  %188 = vmatprep.subr.bf16.mxu0 0
  %189 = vmatpush1.bf16.xpose.msra.mxu0 %v186
  %190 = vmatprep.subr.bf16.mxu0 0
  %191 = vmatpush1.bf16.xpose.msra.mxu0 0
  %192 = vmatprep.subr.bf16.mxu0 0
  %193 = vmatpush1.bf16.xpose.msra.mxu0 0
  %194 = vmatprep.subr.bf16.mxu0 0
  %195 = vmatpush1.bf16.xpose.msra.mxu0 0
  %196 = vmatprep.subr.bf16.mxu0 0
  %197 = vmatpush1.bf16.xpose.msra.mxu0 0
  %198 = vmatprep.subr.bf16.mxu0 0
  %199 = vmatpush1.bf16.xpose.msra.mxu0 0
  %200 = vmatprep.subr.bf16.mxu0 0
  %201 = vmatpush1.bf16.xpose.msra.mxu0 0
  %202 = vmatprep.subr.bf16.mxu0 0
  %203 = vmatpush1.bf16.xpose.msra.mxu0 0
  %204 = vmatprep.subr.bf16.mxu0 0
  %205 = vmatpush1.bf16.xpose.msra.mxu0 0
  %206 = vmatprep.subr.bf16.mxu0 0
  %207 = vmatpush1.bf16.xpose.msra.mxu0 0
  %208 = vmatprep.subr.bf16.mxu0 0
  %209 = vmatpush1.bf16.xpose.msra.mxu0 0
  %210 = vmatprep.subr.bf16.mxu0 0
  %211 = vmatpush1.bf16.xpose.msra.mxu0 0
  %212 = vmatprep.subr.bf16.mxu0 0
  %213 = vmatpush1.bf16.xpose.msra.mxu0 0
  %214 = vmatprep.subr.bf16.mxu0 0
  %215 = vmatpush1.bf16.xpose.msra.mxu0 0
  %216 = vmatprep.subr.bf16.mxu0 0
  %217 = vmatpush1.bf16.xpose.msra.mxu0 0
  %218 = vmatprep.subr.bf16.mxu0 0
  %219 = vmatpush1.bf16.xpose.msra.mxu0 0
  %220 = vmatprep.mubr.bf16.mxu0 0
  %221 = vmatmul.mubr.bf16.gmra.mrb[0].mxu0 %v183
  %v222 = vpop.f32.mrb[0].mxu0
  %v223 = vadd.f32 0.0, %v222
  %v224 = vpop.f32.mrb[0].mxu0
  %v225 = vpop.f32.mrb[0].mxu0
  %v226 = vpop.f32.mrb[0].mxu0
  %227 = vdwg.mxu0
  %229 = vrot.lane.b32.xlu0 %v177, 96
  %v230 = vpop.permute.xlu0 %229
  %v232 = vsel %vm181, %v177, 0
  %v235 = vsel %vm181, %v230, 0
  %237 = vmatprep.subr.bf16.mxu0 0
  %238 = vmatpush1.bf16.xpose.msra.mxu0 %v235
  %239 = vmatprep.subr.bf16.mxu0 0
  %240 = vmatpush1.bf16.xpose.msra.mxu0 0
  %241 = vmatprep.subr.bf16.mxu0 0
  %242 = vmatpush1.bf16.xpose.msra.mxu0 0
  %243 = vmatprep.subr.bf16.mxu0 0
  %244 = vmatpush1.bf16.xpose.msra.mxu0 0
  %245 = vmatprep.subr.bf16.mxu0 0
  %246 = vmatpush1.bf16.xpose.msra.mxu0 0
  %247 = vmatprep.subr.bf16.mxu0 0
  %248 = vmatpush1.bf16.xpose.msra.mxu0 0
  %249 = vmatprep.subr.bf16.mxu0 0
  %250 = vmatpush1.bf16.xpose.msra.mxu0 0
  %251 = vmatprep.subr.bf16.mxu0 0
  %252 = vmatpush1.bf16.xpose.msra.mxu0 0
  %253 = vmatprep.subr.bf16.mxu0 0
  %254 = vmatpush1.bf16.xpose.msra.mxu0 0
  %255 = vmatprep.subr.bf16.mxu0 0
  %256 = vmatpush1.bf16.xpose.msra.mxu0 0
  %257 = vmatprep.subr.bf16.mxu0 0
  %258 = vmatpush1.bf16.xpose.msra.mxu0 0
  %259 = vmatprep.subr.bf16.mxu0 0
  %260 = vmatpush1.bf16.xpose.msra.mxu0 0
  %261 = vmatprep.subr.bf16.mxu0 0
  %262 = vmatpush1.bf16.xpose.msra.mxu0 0
  %263 = vmatprep.subr.bf16.mxu0 0
  %264 = vmatpush1.bf16.xpose.msra.mxu0 0
  %265 = vmatprep.subr.bf16.mxu0 0
  %266 = vmatpush1.bf16.xpose.msra.mxu0 0
  %267 = vmatprep.subr.bf16.mxu0 0
  %268 = vmatpush1.bf16.xpose.msra.mxu0 0
  %269 = vmatprep.mubr.bf16.mxu0 0
  %270 = vmatmul.mubr.bf16.gmra.mrb[0].mxu0 %v232
  %v271 = vpop.f32.mrb[0].mxu0
  %v272 = vadd.f32 0.0, %v271
  %v273 = vpop.f32.mrb[0].mxu0
  %v274 = vpop.f32.mrb[0].mxu0
  %v275 = vpop.f32.mrb[0].mxu0
  %276 = vdwg.mxu0
  %v277 = vmul.f32 %v223, 0.35355338
  %v278 = vmul.f32 %v272, 0.35355338
  %v279 = vadd.f32 %v277, %v75
  %v280 = vadd.f32 %v278, %v79
  %v281 = vsel %vm181, %v279, -inf
  %282 = vmax.xlane.f32.xlu0 %v281
  %v283 = vpop.xlane.xlu0 %282
  %v284 = vsel %vm181, %v280, -inf
  %285 = vmax.xlane.f32.xlu0 %v284
  %v286 = vpop.xlane.xlu0 %285
  %v287 = vsub.f32 %v279, %v283
  %v288 = vsub.f32 %v280, %v286
  %v289 = vmul.f32 %v287, 1.442695
  %v290 = vpow.pop %v289
  %v291 = vmul.f32 %v288, 1.442695
  %v292 = vpow.pop %v291
  %v293 = vsel %vm181, %v290, 0.0
  %294 = vadd.xlane.f32.xlu0 %v293
  %v295 = vpop.xlane.xlu0 %294
  %v296 = vsel %vm181, %v292, 0.0
  %297 = vadd.xlane.f32.xlu0 %v296
  %v298 = vpop.xlane.xlu0 %297
  %v299 = vrcp.pop %v295
  %v300 = vrcp.pop %v298
  %v301 = vmul.f32 %v290, %v299
  %v302 = vmul.f32 %v292, %v300
  %v303 = vpack.c.bf16 %v301, %v301
  %v304 = vpack.c.bf16 %v302, %v302
  %305 = vrot.lane.b32.xlu0 %v176, 64
  %v306 = vpop.permute.xlu0 %305
  %v308 = vsel %vm181, %v303, 0
  %vm310 = vcmask 1043456
  %v312 = vsel %vm310, %v306, 0
  %314 = vmatprep.subr.bf16.mxu0 0
  %315 = vmatpush1.bf16.msra.mxu0 %v312
  %316 = vmatprep.subr.bf16.mxu0 0
  %317 = vmatpush1.bf16.msra.mxu0 0
  %318 = vmatprep.subr.bf16.mxu0 0
  %319 = vmatpush1.bf16.msra.mxu0 0
  %320 = vmatprep.subr.bf16.mxu0 0
  %321 = vmatpush1.bf16.msra.mxu0 0
  %322 = vmatprep.subr.bf16.mxu0 0
  %323 = vmatpush1.bf16.msra.mxu0 0
  %324 = vmatprep.subr.bf16.mxu0 0
  %325 = vmatpush1.bf16.msra.mxu0 0
  %326 = vmatprep.subr.bf16.mxu0 0
  %327 = vmatpush1.bf16.msra.mxu0 0
  %328 = vmatprep.subr.bf16.mxu0 0
  %329 = vmatpush1.bf16.msra.mxu0 0
  %330 = vmatprep.subr.bf16.mxu0 0
  %331 = vmatpush1.bf16.msra.mxu0 0
  %332 = vmatprep.subr.bf16.mxu0 0
  %333 = vmatpush1.bf16.msra.mxu0 0
  %334 = vmatprep.subr.bf16.mxu0 0
  %335 = vmatpush1.bf16.msra.mxu0 0
  %336 = vmatprep.subr.bf16.mxu0 0
  %337 = vmatpush1.bf16.msra.mxu0 0
  %338 = vmatprep.subr.bf16.mxu0 0
  %339 = vmatpush1.bf16.msra.mxu0 0
  %340 = vmatprep.subr.bf16.mxu0 0
  %341 = vmatpush1.bf16.msra.mxu0 0
  %342 = vmatprep.subr.bf16.mxu0 0
  %343 = vmatpush1.bf16.msra.mxu0 0
  %344 = vmatprep.subr.bf16.mxu0 0
  %345 = vmatpush1.bf16.msra.mxu0 0
  %346 = vmatprep.mubr.bf16.mxu0 0
  %347 = vmatmul.mubr.bf16.gmra.mrb[0].mxu0 %v308
  %v348 = vpop.f32.mrb[0].mxu0
  %v349 = vadd.f32 0.0, %v348
  %v350 = vpop.f32.mrb[0].mxu0
  %v351 = vpop.f32.mrb[0].mxu0
  %v352 = vpop.f32.mrb[0].mxu0
  %353 = vdwg.mxu0
  %354 = vrot.lane.b32.xlu0 %v177, 64
  %v355 = vpop.permute.xlu0 %354
  %v357 = vsel %vm181, %v304, 0
  %v360 = vsel %vm310, %v355, 0
  %362 = vmatprep.subr.bf16.mxu0 0
  %363 = vmatpush1.bf16.msra.mxu0 %v360
  %364 = vmatprep.subr.bf16.mxu0 0
  %365 = vmatpush1.bf16.msra.mxu0 0
  %366 = vmatprep.subr.bf16.mxu0 0
  %367 = vmatpush1.bf16.msra.mxu0 0
  %368 = vmatprep.subr.bf16.mxu0 0
  %369 = vmatpush1.bf16.msra.mxu0 0
  %370 = vmatprep.subr.bf16.mxu0 0
  %371 = vmatpush1.bf16.msra.mxu0 0
  %372 = vmatprep.subr.bf16.mxu0 0
  %373 = vmatpush1.bf16.msra.mxu0 0
  %374 = vmatprep.subr.bf16.mxu0 0
  %375 = vmatpush1.bf16.msra.mxu0 0
  %376 = vmatprep.subr.bf16.mxu0 0
  %377 = vmatpush1.bf16.msra.mxu0 0
  %378 = vmatprep.subr.bf16.mxu0 0
  %379 = vmatpush1.bf16.msra.mxu0 0
  %380 = vmatprep.subr.bf16.mxu0 0
  %381 = vmatpush1.bf16.msra.mxu0 0
  %382 = vmatprep.subr.bf16.mxu0 0
  %383 = vmatpush1.bf16.msra.mxu0 0
  %384 = vmatprep.subr.bf16.mxu0 0
  %385 = vmatpush1.bf16.msra.mxu0 0
  %386 = vmatprep.subr.bf16.mxu0 0
  %387 = vmatpush1.bf16.msra.mxu0 0
  %388 = vmatprep.subr.bf16.mxu0 0
  %389 = vmatpush1.bf16.msra.mxu0 0
  %390 = vmatprep.subr.bf16.mxu0 0
  %391 = vmatpush1.bf16.msra.mxu0 0
  %392 = vmatprep.subr.bf16.mxu0 0
  %393 = vmatpush1.bf16.msra.mxu0 0
  %394 = vmatprep.mubr.bf16.mxu0 0
  %395 = vmatmul.mubr.bf16.gmra.mrb[0].mxu0 %v357
  %v396 = vpop.f32.mrb[0].mxu0
  %v397 = vadd.f32 0.0, %v396
  %v398 = vpop.f32.mrb[0].mxu0
  %v399 = vpop.f32.mrb[0].mxu0
  %v400 = vpop.f32.mrb[0].mxu0
  %401 = vdwg.mxu0
  %402 = vrot.lane.b32.xlu0 %v176, 120
  %v403 = vpop.permute.xlu0 %402
  %404 = vrot.lane.b32.xlu0 %v176, 88
  %v405 = vpop.permute.xlu0 %404
  %v407 = vsel %vm181, %v403, 0
  %v410 = vsel %vm181, %v405, 0
  %412 = vmatprep.subr.bf16.mxu0 0
  %413 = vmatpush1.bf16.xpose.msra.mxu0 %v410
  %414 = vmatprep.subr.bf16.mxu0 0
  %415 = vmatpush1.bf16.xpose.msra.mxu0 0
  %416 = vmatprep.subr.bf16.mxu0 0
  %417 = vmatpush1.bf16.xpose.msra.mxu0 0
  %418 = vmatprep.subr.bf16.mxu0 0
  %419 = vmatpush1.bf16.xpose.msra.mxu0 0
  %420 = vmatprep.subr.bf16.mxu0 0
  %421 = vmatpush1.bf16.xpose.msra.mxu0 0
  %422 = vmatprep.subr.bf16.mxu0 0
  %423 = vmatpush1.bf16.xpose.msra.mxu0 0
  %424 = vmatprep.subr.bf16.mxu0 0
  %425 = vmatpush1.bf16.xpose.msra.mxu0 0
  %426 = vmatprep.subr.bf16.mxu0 0
  %427 = vmatpush1.bf16.xpose.msra.mxu0 0
  %428 = vmatprep.subr.bf16.mxu0 0
  %429 = vmatpush1.bf16.xpose.msra.mxu0 0
  %430 = vmatprep.subr.bf16.mxu0 0
  %431 = vmatpush1.bf16.xpose.msra.mxu0 0
  %432 = vmatprep.subr.bf16.mxu0 0
  %433 = vmatpush1.bf16.xpose.msra.mxu0 0
  %434 = vmatprep.subr.bf16.mxu0 0
  %435 = vmatpush1.bf16.xpose.msra.mxu0 0
  %436 = vmatprep.subr.bf16.mxu0 0
  %437 = vmatpush1.bf16.xpose.msra.mxu0 0
  %438 = vmatprep.subr.bf16.mxu0 0
  %439 = vmatpush1.bf16.xpose.msra.mxu0 0
  %440 = vmatprep.subr.bf16.mxu0 0
  %441 = vmatpush1.bf16.xpose.msra.mxu0 0
  %442 = vmatprep.subr.bf16.mxu0 0
  %443 = vmatpush1.bf16.xpose.msra.mxu0 0
  %444 = vmatprep.mubr.bf16.mxu0 0
  %445 = vmatmul.mubr.bf16.gmra.mrb[0].mxu0 %v407
  %v446 = vpop.f32.mrb[0].mxu0
  %v447 = vadd.f32 0.0, %v446
  %v448 = vpop.f32.mrb[0].mxu0
  %v449 = vpop.f32.mrb[0].mxu0
  %v450 = vpop.f32.mrb[0].mxu0
  %451 = vdwg.mxu0
  %452 = vrot.lane.b32.xlu0 %v177, 120
  %v453 = vpop.permute.xlu0 %452
  %454 = vrot.lane.b32.xlu0 %v177, 88
  %v455 = vpop.permute.xlu0 %454
  %v457 = vsel %vm181, %v453, 0
  %v460 = vsel %vm181, %v455, 0
  %462 = vmatprep.subr.bf16.mxu0 0
  %463 = vmatpush1.bf16.xpose.msra.mxu0 %v460
  %464 = vmatprep.subr.bf16.mxu0 0
  %465 = vmatpush1.bf16.xpose.msra.mxu0 0
  %466 = vmatprep.subr.bf16.mxu0 0
  %467 = vmatpush1.bf16.xpose.msra.mxu0 0
  %468 = vmatprep.subr.bf16.mxu0 0
  %469 = vmatpush1.bf16.xpose.msra.mxu0 0
  %470 = vmatprep.subr.bf16.mxu0 0
  %471 = vmatpush1.bf16.xpose.msra.mxu0 0
  %472 = vmatprep.subr.bf16.mxu0 0
  %473 = vmatpush1.bf16.xpose.msra.mxu0 0
  %474 = vmatprep.subr.bf16.mxu0 0
  %475 = vmatpush1.bf16.xpose.msra.mxu0 0
  %476 = vmatprep.subr.bf16.mxu0 0
  %477 = vmatpush1.bf16.xpose.msra.mxu0 0
  %478 = vmatprep.subr.bf16.mxu0 0
  %479 = vmatpush1.bf16.xpose.msra.mxu0 0
  %480 = vmatprep.subr.bf16.mxu0 0
  %481 = vmatpush1.bf16.xpose.msra.mxu0 0
  %482 = vmatprep.subr.bf16.mxu0 0
  %483 = vmatpush1.bf16.xpose.msra.mxu0 0
  %484 = vmatprep.subr.bf16.mxu0 0
  %485 = vmatpush1.bf16.xpose.msra.mxu0 0
  %486 = vmatprep.subr.bf16.mxu0 0
  %487 = vmatpush1.bf16.xpose.msra.mxu0 0
  %488 = vmatprep.subr.bf16.mxu0 0
  %489 = vmatpush1.bf16.xpose.msra.mxu0 0
  %490 = vmatprep.subr.bf16.mxu0 0
  %491 = vmatpush1.bf16.xpose.msra.mxu0 0
  %492 = vmatprep.subr.bf16.mxu0 0
  %493 = vmatpush1.bf16.xpose.msra.mxu0 0
  %494 = vmatprep.mubr.bf16.mxu0 0
  %495 = vmatmul.mubr.bf16.gmra.mrb[0].mxu0 %v457
  %v496 = vpop.f32.mrb[0].mxu0
  %v497 = vadd.f32 0.0, %v496
  %v498 = vpop.f32.mrb[0].mxu0
  %v499 = vpop.f32.mrb[0].mxu0
  %v500 = vpop.f32.mrb[0].mxu0
  %501 = vdwg.mxu0
  %v502 = vmul.f32 %v447, 0.35355338
  %v503 = vmul.f32 %v497, 0.35355338
  %v504 = vadd.f32 %v502, %v75
  %v505 = vadd.f32 %v503, %v79
  %v506 = vsel %vm181, %v504, -inf
  %507 = vmax.xlane.f32.xlu0 %v506
  %v508 = vpop.xlane.xlu0 %507
  %v509 = vsel %vm181, %v505, -inf
  %510 = vmax.xlane.f32.xlu0 %v509
  %v511 = vpop.xlane.xlu0 %510
  %v512 = vsub.f32 %v504, %v508
  %v513 = vsub.f32 %v505, %v511
  %v514 = vmul.f32 %v512, 1.442695
  %v515 = vpow.pop %v514
  %v516 = vmul.f32 %v513, 1.442695
  %v517 = vpow.pop %v516
  %v518 = vsel %vm181, %v515, 0.0
  %519 = vadd.xlane.f32.xlu0 %v518
  %v520 = vpop.xlane.xlu0 %519
  %v521 = vsel %vm181, %v517, 0.0
  %522 = vadd.xlane.f32.xlu0 %v521
  %v523 = vpop.xlane.xlu0 %522
  %v524 = vrcp.pop %v520
  %v525 = vrcp.pop %v523
  %v526 = vmul.f32 %v515, %v524
  %v527 = vmul.f32 %v517, %v525
  %v528 = vpack.c.bf16 %v526, %v526
  %v529 = vpack.c.bf16 %v527, %v527
  %530 = vrot.lane.b32.xlu0 %v176, 56
  %v531 = vpop.permute.xlu0 %530
  %v533 = vsel %vm181, %v528, 0
  %v536 = vsel %vm310, %v531, 0
  %538 = vmatprep.subr.bf16.mxu0 0
  %539 = vmatpush1.bf16.msra.mxu0 %v536
  %540 = vmatprep.subr.bf16.mxu0 0
  %541 = vmatpush1.bf16.msra.mxu0 0
  %542 = vmatprep.subr.bf16.mxu0 0
  %543 = vmatpush1.bf16.msra.mxu0 0
  %544 = vmatprep.subr.bf16.mxu0 0
  %545 = vmatpush1.bf16.msra.mxu0 0
  %546 = vmatprep.subr.bf16.mxu0 0
  %547 = vmatpush1.bf16.msra.mxu0 0
  %548 = vmatprep.subr.bf16.mxu0 0
  %549 = vmatpush1.bf16.msra.mxu0 0
  %550 = vmatprep.subr.bf16.mxu0 0
  %551 = vmatpush1.bf16.msra.mxu0 0
  %552 = vmatprep.subr.bf16.mxu0 0
  %553 = vmatpush1.bf16.msra.mxu0 0
  %554 = vmatprep.subr.bf16.mxu0 0
  %555 = vmatpush1.bf16.msra.mxu0 0
  %556 = vmatprep.subr.bf16.mxu0 0
  %557 = vmatpush1.bf16.msra.mxu0 0
  %558 = vmatprep.subr.bf16.mxu0 0
  %559 = vmatpush1.bf16.msra.mxu0 0
  %560 = vmatprep.subr.bf16.mxu0 0
  %561 = vmatpush1.bf16.msra.mxu0 0
  %562 = vmatprep.subr.bf16.mxu0 0
  %563 = vmatpush1.bf16.msra.mxu0 0
  %564 = vmatprep.subr.bf16.mxu0 0
  %565 = vmatpush1.bf16.msra.mxu0 0
  %566 = vmatprep.subr.bf16.mxu0 0
  %567 = vmatpush1.bf16.msra.mxu0 0
  %568 = vmatprep.subr.bf16.mxu0 0
  %569 = vmatpush1.bf16.msra.mxu0 0
  %570 = vmatprep.mubr.bf16.mxu0 0
  %571 = vmatmul.mubr.bf16.gmra.mrb[0].mxu0 %v533
  %v572 = vpop.f32.mrb[0].mxu0
  %v573 = vadd.f32 0.0, %v572
  %v574 = vpop.f32.mrb[0].mxu0
  %v575 = vpop.f32.mrb[0].mxu0
  %v576 = vpop.f32.mrb[0].mxu0
  %577 = vdwg.mxu0
  %578 = vrot.lane.b32.xlu0 %v177, 56
  %v579 = vpop.permute.xlu0 %578
  %v581 = vsel %vm181, %v529, 0
  %v584 = vsel %vm310, %v579, 0
  %586 = vmatprep.subr.bf16.mxu0 0
  %587 = vmatpush1.bf16.msra.mxu0 %v584
  %588 = vmatprep.subr.bf16.mxu0 0
  %589 = vmatpush1.bf16.msra.mxu0 0
  %590 = vmatprep.subr.bf16.mxu0 0
  %591 = vmatpush1.bf16.msra.mxu0 0
  %592 = vmatprep.subr.bf16.mxu0 0
  %593 = vmatpush1.bf16.msra.mxu0 0
  %594 = vmatprep.subr.bf16.mxu0 0
  %595 = vmatpush1.bf16.msra.mxu0 0
  %596 = vmatprep.subr.bf16.mxu0 0
  %597 = vmatpush1.bf16.msra.mxu0 0
  %598 = vmatprep.subr.bf16.mxu0 0
  %599 = vmatpush1.bf16.msra.mxu0 0
  %600 = vmatprep.subr.bf16.mxu0 0
  %601 = vmatpush1.bf16.msra.mxu0 0
  %602 = vmatprep.subr.bf16.mxu0 0
  %603 = vmatpush1.bf16.msra.mxu0 0
  %604 = vmatprep.subr.bf16.mxu0 0
  %605 = vmatpush1.bf16.msra.mxu0 0
  %606 = vmatprep.subr.bf16.mxu0 0
  %607 = vmatpush1.bf16.msra.mxu0 0
  %608 = vmatprep.subr.bf16.mxu0 0
  %609 = vmatpush1.bf16.msra.mxu0 0
  %610 = vmatprep.subr.bf16.mxu0 0
  %611 = vmatpush1.bf16.msra.mxu0 0
  %612 = vmatprep.subr.bf16.mxu0 0
  %613 = vmatpush1.bf16.msra.mxu0 0
  %614 = vmatprep.subr.bf16.mxu0 0
  %615 = vmatpush1.bf16.msra.mxu0 0
  %616 = vmatprep.subr.bf16.mxu0 0
  %617 = vmatpush1.bf16.msra.mxu0 0
  %618 = vmatprep.mubr.bf16.mxu0 0
  %619 = vmatmul.mubr.bf16.gmra.mrb[0].mxu0 %v581
  %v620 = vpop.f32.mrb[0].mxu0
  %v621 = vadd.f32 0.0, %v620
  %v622 = vpop.f32.mrb[0].mxu0
  %v623 = vpop.f32.mrb[0].mxu0
  %v624 = vpop.f32.mrb[0].mxu0
  %625 = vdwg.mxu0
  %626 = vrot.lane.b32.xlu0 %v176, 112
  %v627 = vpop.permute.xlu0 %626
  %628 = vrot.lane.b32.xlu0 %v176, 80
  %v629 = vpop.permute.xlu0 %628
  %v631 = vsel %vm181, %v627, 0
  %v634 = vsel %vm181, %v629, 0
  %636 = vmatprep.subr.bf16.mxu0 0
  %637 = vmatpush1.bf16.xpose.msra.mxu0 %v634
  %638 = vmatprep.subr.bf16.mxu0 0
  %639 = vmatpush1.bf16.xpose.msra.mxu0 0
  %640 = vmatprep.subr.bf16.mxu0 0
  %641 = vmatpush1.bf16.xpose.msra.mxu0 0
  %642 = vmatprep.subr.bf16.mxu0 0
  %643 = vmatpush1.bf16.xpose.msra.mxu0 0
  %644 = vmatprep.subr.bf16.mxu0 0
  %645 = vmatpush1.bf16.xpose.msra.mxu0 0
  %646 = vmatprep.subr.bf16.mxu0 0
  %647 = vmatpush1.bf16.xpose.msra.mxu0 0
  %648 = vmatprep.subr.bf16.mxu0 0
  %649 = vmatpush1.bf16.xpose.msra.mxu0 0
  %650 = vmatprep.subr.bf16.mxu0 0
  %651 = vmatpush1.bf16.xpose.msra.mxu0 0
  %652 = vmatprep.subr.bf16.mxu0 0
  %653 = vmatpush1.bf16.xpose.msra.mxu0 0
  %654 = vmatprep.subr.bf16.mxu0 0
  %655 = vmatpush1.bf16.xpose.msra.mxu0 0
  %656 = vmatprep.subr.bf16.mxu0 0
  %657 = vmatpush1.bf16.xpose.msra.mxu0 0
  %658 = vmatprep.subr.bf16.mxu0 0
  %659 = vmatpush1.bf16.xpose.msra.mxu0 0
  %660 = vmatprep.subr.bf16.mxu0 0
  %661 = vmatpush1.bf16.xpose.msra.mxu0 0
  %662 = vmatprep.subr.bf16.mxu0 0
  %663 = vmatpush1.bf16.xpose.msra.mxu0 0
  %664 = vmatprep.subr.bf16.mxu0 0
  %665 = vmatpush1.bf16.xpose.msra.mxu0 0
  %666 = vmatprep.subr.bf16.mxu0 0
  %667 = vmatpush1.bf16.xpose.msra.mxu0 0
  %668 = vmatprep.mubr.bf16.mxu0 0
  %669 = vmatmul.mubr.bf16.gmra.mrb[0].mxu0 %v631
  %v670 = vpop.f32.mrb[0].mxu0
  %v671 = vadd.f32 0.0, %v670
  %v672 = vpop.f32.mrb[0].mxu0
  %v673 = vpop.f32.mrb[0].mxu0
  %v674 = vpop.f32.mrb[0].mxu0
  %675 = vdwg.mxu0
  %676 = vrot.lane.b32.xlu0 %v177, 112
  %v677 = vpop.permute.xlu0 %676
  %678 = vrot.lane.b32.xlu0 %v177, 80
  %v679 = vpop.permute.xlu0 %678
  %v681 = vsel %vm181, %v677, 0
  %v684 = vsel %vm181, %v679, 0
  %686 = vmatprep.subr.bf16.mxu0 0
  %687 = vmatpush1.bf16.xpose.msra.mxu0 %v684
  %688 = vmatprep.subr.bf16.mxu0 0
  %689 = vmatpush1.bf16.xpose.msra.mxu0 0
  %690 = vmatprep.subr.bf16.mxu0 0
  %691 = vmatpush1.bf16.xpose.msra.mxu0 0
  %692 = vmatprep.subr.bf16.mxu0 0
  %693 = vmatpush1.bf16.xpose.msra.mxu0 0
  %694 = vmatprep.subr.bf16.mxu0 0
  %695 = vmatpush1.bf16.xpose.msra.mxu0 0
  %696 = vmatprep.subr.bf16.mxu0 0
  %697 = vmatpush1.bf16.xpose.msra.mxu0 0
  %698 = vmatprep.subr.bf16.mxu0 0
  %699 = vmatpush1.bf16.xpose.msra.mxu0 0
  %700 = vmatprep.subr.bf16.mxu0 0
  %701 = vmatpush1.bf16.xpose.msra.mxu0 0
  %702 = vmatprep.subr.bf16.mxu0 0
  %703 = vmatpush1.bf16.xpose.msra.mxu0 0
  %704 = vmatprep.subr.bf16.mxu0 0
  %705 = vmatpush1.bf16.xpose.msra.mxu0 0
  %706 = vmatprep.subr.bf16.mxu0 0
  %707 = vmatpush1.bf16.xpose.msra.mxu0 0
  %708 = vmatprep.subr.bf16.mxu0 0
  %709 = vmatpush1.bf16.xpose.msra.mxu0 0
  %710 = vmatprep.subr.bf16.mxu0 0
  %711 = vmatpush1.bf16.xpose.msra.mxu0 0
  %712 = vmatprep.subr.bf16.mxu0 0
  %713 = vmatpush1.bf16.xpose.msra.mxu0 0
  %714 = vmatprep.subr.bf16.mxu0 0
  %715 = vmatpush1.bf16.xpose.msra.mxu0 0
  %716 = vmatprep.subr.bf16.mxu0 0
  %717 = vmatpush1.bf16.xpose.msra.mxu0 0
  %718 = vmatprep.mubr.bf16.mxu0 0
  %719 = vmatmul.mubr.bf16.gmra.mrb[0].mxu0 %v681
  %v720 = vpop.f32.mrb[0].mxu0
  %v721 = vadd.f32 0.0, %v720
  %v722 = vpop.f32.mrb[0].mxu0
  %v723 = vpop.f32.mrb[0].mxu0
  %v724 = vpop.f32.mrb[0].mxu0
  %725 = vdwg.mxu0
  %v726 = vmul.f32 %v671, 0.35355338
  %v727 = vmul.f32 %v721, 0.35355338
  %v728 = vadd.f32 %v726, %v75
  %v729 = vadd.f32 %v727, %v79
  %v730 = vsel %vm181, %v728, -inf
  %731 = vmax.xlane.f32.xlu0 %v730
  %v732 = vpop.xlane.xlu0 %731
  %v733 = vsel %vm181, %v729, -inf
  %734 = vmax.xlane.f32.xlu0 %v733
  %v735 = vpop.xlane.xlu0 %734
  %v736 = vsub.f32 %v728, %v732
  %v737 = vsub.f32 %v729, %v735
  %v738 = vmul.f32 %v736, 1.442695
  %v739 = vpow.pop %v738
  %v740 = vmul.f32 %v737, 1.442695
  %v741 = vpow.pop %v740
  %v742 = vsel %vm181, %v739, 0.0
  %743 = vadd.xlane.f32.xlu0 %v742
  %v744 = vpop.xlane.xlu0 %743
  %v745 = vsel %vm181, %v741, 0.0
  %746 = vadd.xlane.f32.xlu0 %v745
  %v747 = vpop.xlane.xlu0 %746
  %v748 = vrcp.pop %v744
  %v749 = vrcp.pop %v747
  %v750 = vmul.f32 %v739, %v748
  %v751 = vmul.f32 %v741, %v749
  %v752 = vpack.c.bf16 %v750, %v750
  %v753 = vpack.c.bf16 %v751, %v751
  %754 = vrot.lane.b32.xlu0 %v176, 48
  %v755 = vpop.permute.xlu0 %754
  %v757 = vsel %vm181, %v752, 0
  %v760 = vsel %vm310, %v755, 0
  %762 = vmatprep.subr.bf16.mxu0 0
  %763 = vmatpush1.bf16.msra.mxu0 %v760
  %764 = vmatprep.subr.bf16.mxu0 0
  %765 = vmatpush1.bf16.msra.mxu0 0
  %766 = vmatprep.subr.bf16.mxu0 0
  %767 = vmatpush1.bf16.msra.mxu0 0
  %768 = vmatprep.subr.bf16.mxu0 0
  %769 = vmatpush1.bf16.msra.mxu0 0
  %770 = vmatprep.subr.bf16.mxu0 0
  %771 = vmatpush1.bf16.msra.mxu0 0
  %772 = vmatprep.subr.bf16.mxu0 0
  %773 = vmatpush1.bf16.msra.mxu0 0
  %774 = vmatprep.subr.bf16.mxu0 0
  %775 = vmatpush1.bf16.msra.mxu0 0
  %776 = vmatprep.subr.bf16.mxu0 0
  %777 = vmatpush1.bf16.msra.mxu0 0
  %778 = vmatprep.subr.bf16.mxu0 0
  %779 = vmatpush1.bf16.msra.mxu0 0
  %780 = vmatprep.subr.bf16.mxu0 0
  %781 = vmatpush1.bf16.msra.mxu0 0
  %782 = vmatprep.subr.bf16.mxu0 0
  %783 = vmatpush1.bf16.msra.mxu0 0
  %784 = vmatprep.subr.bf16.mxu0 0
  %785 = vmatpush1.bf16.msra.mxu0 0
  %786 = vmatprep.subr.bf16.mxu0 0
  %787 = vmatpush1.bf16.msra.mxu0 0
  %788 = vmatprep.subr.bf16.mxu0 0
  %789 = vmatpush1.bf16.msra.mxu0 0
  %790 = vmatprep.subr.bf16.mxu0 0
  %791 = vmatpush1.bf16.msra.mxu0 0
  %792 = vmatprep.subr.bf16.mxu0 0
  %793 = vmatpush1.bf16.msra.mxu0 0
  %794 = vmatprep.mubr.bf16.mxu0 0
  %795 = vmatmul.mubr.bf16.gmra.mrb[0].mxu0 %v757
  %v796 = vpop.f32.mrb[0].mxu0
  %v797 = vadd.f32 0.0, %v796
  %v798 = vpop.f32.mrb[0].mxu0
  %v799 = vpop.f32.mrb[0].mxu0
  %v800 = vpop.f32.mrb[0].mxu0
  %801 = vdwg.mxu0
  %802 = vrot.lane.b32.xlu0 %v177, 48
  %v803 = vpop.permute.xlu0 %802
  %v805 = vsel %vm181, %v753, 0
  %v808 = vsel %vm310, %v803, 0
  %810 = vmatprep.subr.bf16.mxu0 0
  %811 = vmatpush1.bf16.msra.mxu0 %v808
  %812 = vmatprep.subr.bf16.mxu0 0
  %813 = vmatpush1.bf16.msra.mxu0 0
  %814 = vmatprep.subr.bf16.mxu0 0
  %815 = vmatpush1.bf16.msra.mxu0 0
  %816 = vmatprep.subr.bf16.mxu0 0
  %817 = vmatpush1.bf16.msra.mxu0 0
  %818 = vmatprep.subr.bf16.mxu0 0
  %819 = vmatpush1.bf16.msra.mxu0 0
  %820 = vmatprep.subr.bf16.mxu0 0
  %821 = vmatpush1.bf16.msra.mxu0 0
  %822 = vmatprep.subr.bf16.mxu0 0
  %823 = vmatpush1.bf16.msra.mxu0 0
  %824 = vmatprep.subr.bf16.mxu0 0
  %825 = vmatpush1.bf16.msra.mxu0 0
  %826 = vmatprep.subr.bf16.mxu0 0
  %827 = vmatpush1.bf16.msra.mxu0 0
  %828 = vmatprep.subr.bf16.mxu0 0
  %829 = vmatpush1.bf16.msra.mxu0 0
  %830 = vmatprep.subr.bf16.mxu0 0
  %831 = vmatpush1.bf16.msra.mxu0 0
  %832 = vmatprep.subr.bf16.mxu0 0
  %833 = vmatpush1.bf16.msra.mxu0 0
  %834 = vmatprep.subr.bf16.mxu0 0
  %835 = vmatpush1.bf16.msra.mxu0 0
  %836 = vmatprep.subr.bf16.mxu0 0
  %837 = vmatpush1.bf16.msra.mxu0 0
  %838 = vmatprep.subr.bf16.mxu0 0
  %839 = vmatpush1.bf16.msra.mxu0 0
  %840 = vmatprep.subr.bf16.mxu0 0
  %841 = vmatpush1.bf16.msra.mxu0 0
  %842 = vmatprep.mubr.bf16.mxu0 0
  %843 = vmatmul.mubr.bf16.gmra.mrb[0].mxu0 %v805
  %v844 = vpop.f32.mrb[0].mxu0
  %v845 = vadd.f32 0.0, %v844
  %v846 = vpop.f32.mrb[0].mxu0
  %v847 = vpop.f32.mrb[0].mxu0
  %v848 = vpop.f32.mrb[0].mxu0
  %849 = vdwg.mxu0
  %850 = vrot.lane.b32.xlu0 %v176, 104
  %v851 = vpop.permute.xlu0 %850
  %852 = vrot.lane.b32.xlu0 %v176, 72
  %v853 = vpop.permute.xlu0 %852
  %v855 = vsel %vm181, %v851, 0
  %v858 = vsel %vm181, %v853, 0
  %860 = vmatprep.subr.bf16.mxu0 0
  %861 = vmatpush1.bf16.xpose.msra.mxu0 %v858
  %862 = vmatprep.subr.bf16.mxu0 0
  %863 = vmatpush1.bf16.xpose.msra.mxu0 0
  %864 = vmatprep.subr.bf16.mxu0 0
  %865 = vmatpush1.bf16.xpose.msra.mxu0 0
  %866 = vmatprep.subr.bf16.mxu0 0
  %867 = vmatpush1.bf16.xpose.msra.mxu0 0
  %868 = vmatprep.subr.bf16.mxu0 0
  %869 = vmatpush1.bf16.xpose.msra.mxu0 0
  %870 = vmatprep.subr.bf16.mxu0 0
  %871 = vmatpush1.bf16.xpose.msra.mxu0 0
  %872 = vmatprep.subr.bf16.mxu0 0
  %873 = vmatpush1.bf16.xpose.msra.mxu0 0
  %874 = vmatprep.subr.bf16.mxu0 0
  %875 = vmatpush1.bf16.xpose.msra.mxu0 0
  %876 = vmatprep.subr.bf16.mxu0 0
  %877 = vmatpush1.bf16.xpose.msra.mxu0 0
  %878 = vmatprep.subr.bf16.mxu0 0
  %879 = vmatpush1.bf16.xpose.msra.mxu0 0
  %880 = vmatprep.subr.bf16.mxu0 0
  %881 = vmatpush1.bf16.xpose.msra.mxu0 0
  %882 = vmatprep.subr.bf16.mxu0 0
  %883 = vmatpush1.bf16.xpose.msra.mxu0 0
  %884 = vmatprep.subr.bf16.mxu0 0
  %885 = vmatpush1.bf16.xpose.msra.mxu0 0
  %886 = vmatprep.subr.bf16.mxu0 0
  %887 = vmatpush1.bf16.xpose.msra.mxu0 0
  %888 = vmatprep.subr.bf16.mxu0 0
  %889 = vmatpush1.bf16.xpose.msra.mxu0 0
  %890 = vmatprep.subr.bf16.mxu0 0
  %891 = vmatpush1.bf16.xpose.msra.mxu0 0
  %892 = vmatprep.mubr.bf16.mxu0 0
  %893 = vmatmul.mubr.bf16.gmra.mrb[0].mxu0 %v855
  %v894 = vpop.f32.mrb[0].mxu0
  %v895 = vadd.f32 0.0, %v894
  %v896 = vpop.f32.mrb[0].mxu0
  %v897 = vpop.f32.mrb[0].mxu0
  %v898 = vpop.f32.mrb[0].mxu0
  %899 = vdwg.mxu0
  %900 = vrot.lane.b32.xlu0 %v177, 104
  %v901 = vpop.permute.xlu0 %900
  %902 = vrot.lane.b32.xlu0 %v177, 72
  %v903 = vpop.permute.xlu0 %902
  %v905 = vsel %vm181, %v901, 0
  %v908 = vsel %vm181, %v903, 0
  %910 = vmatprep.subr.bf16.mxu0 0
  %911 = vmatpush1.bf16.xpose.msra.mxu0 %v908
  %912 = vmatprep.subr.bf16.mxu0 0
  %913 = vmatpush1.bf16.xpose.msra.mxu0 0
  %914 = vmatprep.subr.bf16.mxu0 0
  %915 = vmatpush1.bf16.xpose.msra.mxu0 0
  %916 = vmatprep.subr.bf16.mxu0 0
  %917 = vmatpush1.bf16.xpose.msra.mxu0 0
  %918 = vmatprep.subr.bf16.mxu0 0
  %919 = vmatpush1.bf16.xpose.msra.mxu0 0
  %920 = vmatprep.subr.bf16.mxu0 0
  %921 = vmatpush1.bf16.xpose.msra.mxu0 0
  %922 = vmatprep.subr.bf16.mxu0 0
  %923 = vmatpush1.bf16.xpose.msra.mxu0 0
  %924 = vmatprep.subr.bf16.mxu0 0
  %925 = vmatpush1.bf16.xpose.msra.mxu0 0
  %926 = vmatprep.subr.bf16.mxu0 0
  %927 = vmatpush1.bf16.xpose.msra.mxu0 0
  %928 = vmatprep.subr.bf16.mxu0 0
  %929 = vmatpush1.bf16.xpose.msra.mxu0 0
  %930 = vmatprep.subr.bf16.mxu0 0
  %931 = vmatpush1.bf16.xpose.msra.mxu0 0
  %932 = vmatprep.subr.bf16.mxu0 0
  %933 = vmatpush1.bf16.xpose.msra.mxu0 0
  %934 = vmatprep.subr.bf16.mxu0 0
  %935 = vmatpush1.bf16.xpose.msra.mxu0 0
  %936 = vmatprep.subr.bf16.mxu0 0
  %937 = vmatpush1.bf16.xpose.msra.mxu0 0
  %938 = vmatprep.subr.bf16.mxu0 0
  %939 = vmatpush1.bf16.xpose.msra.mxu0 0
  %940 = vmatprep.subr.bf16.mxu0 0
  %941 = vmatpush1.bf16.xpose.msra.mxu0 0
  %942 = vmatprep.mubr.bf16.mxu0 0
  %943 = vmatmul.mubr.bf16.gmra.mrb[0].mxu0 %v905
  %v944 = vpop.f32.mrb[0].mxu0
  %v945 = vadd.f32 0.0, %v944
  %v946 = vpop.f32.mrb[0].mxu0
  %v947 = vpop.f32.mrb[0].mxu0
  %v948 = vpop.f32.mrb[0].mxu0
  %949 = vdwg.mxu0
  %v950 = vmul.f32 %v895, 0.35355338
  %v951 = vmul.f32 %v945, 0.35355338
  %v952 = vadd.f32 %v950, %v75
  %v953 = vadd.f32 %v951, %v79
  %v954 = vsel %vm181, %v952, -inf
  %955 = vmax.xlane.f32.xlu0 %v954
  %v956 = vpop.xlane.xlu0 %955
  %v957 = vsel %vm181, %v953, -inf
  %958 = vmax.xlane.f32.xlu0 %v957
  %v959 = vpop.xlane.xlu0 %958
  %v960 = vsub.f32 %v952, %v956
  %v961 = vsub.f32 %v953, %v959
  %v962 = vmul.f32 %v960, 1.442695
  %v963 = vpow.pop %v962
  %v964 = vmul.f32 %v961, 1.442695
  %v965 = vpow.pop %v964
  %v966 = vsel %vm181, %v963, 0.0
  %967 = vadd.xlane.f32.xlu0 %v966
  %v968 = vpop.xlane.xlu0 %967
  %v969 = vsel %vm181, %v965, 0.0
  %970 = vadd.xlane.f32.xlu0 %v969
  %v971 = vpop.xlane.xlu0 %970
  %v972 = vrcp.pop %v968
  %v973 = vrcp.pop %v971
  %v974 = vmul.f32 %v963, %v972
  %v975 = vmul.f32 %v965, %v973
  %v976 = vpack.c.bf16 %v974, %v974
  %v977 = vpack.c.bf16 %v975, %v975
  %978 = vrot.lane.b32.xlu0 %v176, 40
  %v979 = vpop.permute.xlu0 %978
  %v981 = vsel %vm181, %v976, 0
  %v984 = vsel %vm310, %v979, 0
  %986 = vmatprep.subr.bf16.mxu0 0
  %987 = vmatpush1.bf16.msra.mxu0 %v984
  %988 = vmatprep.subr.bf16.mxu0 0
  %989 = vmatpush1.bf16.msra.mxu0 0
  %990 = vmatprep.subr.bf16.mxu0 0
  %991 = vmatpush1.bf16.msra.mxu0 0
  %992 = vmatprep.subr.bf16.mxu0 0
  %993 = vmatpush1.bf16.msra.mxu0 0
  %994 = vmatprep.subr.bf16.mxu0 0
  %995 = vmatpush1.bf16.msra.mxu0 0
  %996 = vmatprep.subr.bf16.mxu0 0
  %997 = vmatpush1.bf16.msra.mxu0 0
  %998 = vmatprep.subr.bf16.mxu0 0
  %999 = vmatpush1.bf16.msra.mxu0 0
  %1000 = vmatprep.subr.bf16.mxu0 0
  %1001 = vmatpush1.bf16.msra.mxu0 0
  %1002 = vmatprep.subr.bf16.mxu0 0
  %1003 = vmatpush1.bf16.msra.mxu0 0
  %1004 = vmatprep.subr.bf16.mxu0 0
  %1005 = vmatpush1.bf16.msra.mxu0 0
  %1006 = vmatprep.subr.bf16.mxu0 0
  %1007 = vmatpush1.bf16.msra.mxu0 0
  %1008 = vmatprep.subr.bf16.mxu0 0
  %1009 = vmatpush1.bf16.msra.mxu0 0
  %1010 = vmatprep.subr.bf16.mxu0 0
  %1011 = vmatpush1.bf16.msra.mxu0 0
  %1012 = vmatprep.subr.bf16.mxu0 0
  %1013 = vmatpush1.bf16.msra.mxu0 0
  %1014 = vmatprep.subr.bf16.mxu0 0
  %1015 = vmatpush1.bf16.msra.mxu0 0
  %1016 = vmatprep.subr.bf16.mxu0 0
  %1017 = vmatpush1.bf16.msra.mxu0 0
  %1018 = vmatprep.mubr.bf16.mxu0 0
  %1019 = vmatmul.mubr.bf16.gmra.mrb[0].mxu0 %v981
  %v1020 = vpop.f32.mrb[0].mxu0
  %v1021 = vadd.f32 0.0, %v1020
  %v1022 = vpop.f32.mrb[0].mxu0
  %v1023 = vpop.f32.mrb[0].mxu0
  %v1024 = vpop.f32.mrb[0].mxu0
  %1025 = vdwg.mxu0
  %1026 = vrot.lane.b32.xlu0 %v177, 40
  %v1027 = vpop.permute.xlu0 %1026
  %v1029 = vsel %vm181, %v977, 0
  %v1032 = vsel %vm310, %v1027, 0
  %1034 = vmatprep.subr.bf16.mxu0 0
  %1035 = vmatpush1.bf16.msra.mxu0 %v1032
  %1036 = vmatprep.subr.bf16.mxu0 0
  %1037 = vmatpush1.bf16.msra.mxu0 0
  %1038 = vmatprep.subr.bf16.mxu0 0
  %1039 = vmatpush1.bf16.msra.mxu0 0
  %1040 = vmatprep.subr.bf16.mxu0 0
  %1041 = vmatpush1.bf16.msra.mxu0 0
  %1042 = vmatprep.subr.bf16.mxu0 0
  %1043 = vmatpush1.bf16.msra.mxu0 0
  %1044 = vmatprep.subr.bf16.mxu0 0
  %1045 = vmatpush1.bf16.msra.mxu0 0
  %1046 = vmatprep.subr.bf16.mxu0 0
  %1047 = vmatpush1.bf16.msra.mxu0 0
  %1048 = vmatprep.subr.bf16.mxu0 0
  %1049 = vmatpush1.bf16.msra.mxu0 0
  %1050 = vmatprep.subr.bf16.mxu0 0
  %1051 = vmatpush1.bf16.msra.mxu0 0
  %1052 = vmatprep.subr.bf16.mxu0 0
  %1053 = vmatpush1.bf16.msra.mxu0 0
  %1054 = vmatprep.subr.bf16.mxu0 0
  %1055 = vmatpush1.bf16.msra.mxu0 0
  %1056 = vmatprep.subr.bf16.mxu0 0
  %1057 = vmatpush1.bf16.msra.mxu0 0
  %1058 = vmatprep.subr.bf16.mxu0 0
  %1059 = vmatpush1.bf16.msra.mxu0 0
  %1060 = vmatprep.subr.bf16.mxu0 0
  %1061 = vmatpush1.bf16.msra.mxu0 0
  %1062 = vmatprep.subr.bf16.mxu0 0
  %1063 = vmatpush1.bf16.msra.mxu0 0
  %1064 = vmatprep.subr.bf16.mxu0 0
  %1065 = vmatpush1.bf16.msra.mxu0 0
  %1066 = vmatprep.mubr.bf16.mxu0 0
  %1067 = vmatmul.mubr.bf16.gmra.mrb[0].mxu0 %v1029
  %v1068 = vpop.f32.mrb[0].mxu0
  %v1069 = vadd.f32 0.0, %v1068
  %v1070 = vpop.f32.mrb[0].mxu0
  %v1071 = vpop.f32.mrb[0].mxu0
  %v1072 = vpop.f32.mrb[0].mxu0
  %1073 = vdwg.mxu0
  %1076 = vrot.lane.b32.xlu0 %v573, 8
  %v1077 = vpop.permute.xlu0 %1076
  %1078 = vrot.lane.b32.xlu0 %v621, 8
  %v1079 = vpop.permute.xlu0 %1078
  %1084 = vrot.lane.b32.xlu0 %v797, 16
  %v1085 = vpop.permute.xlu0 %1084
  %1086 = vrot.lane.b32.xlu0 %v845, 16
  %v1087 = vpop.permute.xlu0 %1086
  %1092 = vrot.lane.b32.xlu0 %v1021, 24
  %v1093 = vpop.permute.xlu0 %1092
  %1094 = vrot.lane.b32.xlu0 %v1069, 24
  %v1095 = vpop.permute.xlu0 %1094
  %v1098 = vsel %vm181, %v349, %v1077
  %v1099 = vsel %vm181, %v397, %v1079
  %vm1100 = vcmask 130048
  %v1101 = vsel %vm1100, %v1098, %v1085
  %v1102 = vsel %vm1100, %v1099, %v1087
  %vm1103 = vcmask 195584
  %v1104 = vsel %vm1103, %v1101, %v1093
  %v1105 = vsel %vm1103, %v1102, %v1095
  %v1106 = vpack.c.bf16 %v1105, %v1104
  %v1108 = vlaneseq
  %v1109 = vshrl.u32 %v1108, 7
  %v1110 = vsub.s32 0, %v1109
  %v1111 = vrot.slane %v93, %v1110
  %v1117 = vunpack.c.l.b16 %v89
  %v1118 = vunpack.c.l.b16 %v90
  %v1119 = vunpack.c.l.b16 %v91
  %v1120 = vunpack.c.l.b16 %v92
  %v1121 = vpack.c.b16 %v1118, %v1117
  %v1122 = vpack.c.b16 %v1120, %v1119
  %v1126 = vsel %vm131, %v1106, 0
  %1128 = vmatprep.subr.bf16.mxu0 0
  %1129 = vmatpush1.bf16.msra.mxu0 %v1121
  %1130 = vmatprep.subr.bf16.mxu0 0
  %1131 = vmatpush1.bf16.msra.mxu0 %v1122
  %1132 = vmatprep.subr.bf16.mxu0 0
  %1133 = vmatpush1.bf16.msra.mxu0 0
  %1134 = vmatprep.subr.bf16.mxu0 0
  %1135 = vmatpush1.bf16.msra.mxu0 0
  %1136 = vmatprep.subr.bf16.mxu0 0
  %1137 = vmatpush1.bf16.msra.mxu0 0
  %1138 = vmatprep.subr.bf16.mxu0 0
  %1139 = vmatpush1.bf16.msra.mxu0 0
  %1140 = vmatprep.subr.bf16.mxu0 0
  %1141 = vmatpush1.bf16.msra.mxu0 0
  %1142 = vmatprep.subr.bf16.mxu0 0
  %1143 = vmatpush1.bf16.msra.mxu0 0
  %1144 = vmatprep.subr.bf16.mxu0 0
  %1145 = vmatpush1.bf16.msra.mxu0 0
  %1146 = vmatprep.subr.bf16.mxu0 0
  %1147 = vmatpush1.bf16.msra.mxu0 0
  %1148 = vmatprep.subr.bf16.mxu0 0
  %1149 = vmatpush1.bf16.msra.mxu0 0
  %1150 = vmatprep.subr.bf16.mxu0 0
  %1151 = vmatpush1.bf16.msra.mxu0 0
  %1152 = vmatprep.subr.bf16.mxu0 0
  %1153 = vmatpush1.bf16.msra.mxu0 0
  %1154 = vmatprep.subr.bf16.mxu0 0
  %1155 = vmatpush1.bf16.msra.mxu0 0
  %1156 = vmatprep.subr.bf16.mxu0 0
  %1157 = vmatpush1.bf16.msra.mxu0 0
  %1158 = vmatprep.subr.bf16.mxu0 0
  %1159 = vmatpush1.bf16.msra.mxu0 0
  %1160 = vmatprep.mubr.bf16.mxu0 0
  %1161 = vmatmul.mubr.bf16.gmra.mrb[0].mxu0 %v1126
  %v1162 = vpop.f32.mrb[0].mxu0
  %v1163 = vadd.f32 %v1111, %v1162
  %v1164 = vpop.f32.mrb[0].mxu0
  %v1165 = vpop.f32.mrb[0].mxu0
  %v1166 = vadd.f32 %v1111, %v1165
  %v1167 = vpop.f32.mrb[0].mxu0
  %1168 = vdwg.mxu0
  %v1169 = vadd.f32 %v1163, %v82
  %v1170 = vadd.f32 %v1166, %v83
  %v1171 = vsel %vm131, %v1169, 0.0
  %1172 = vadd.xlane.f32.xlu0 %v1171
  %v1173 = vpop.xlane.xlu0 %1172
  %v1174 = vsel %vm131, %v1170, 0.0
  %1175 = vadd.xlane.f32.xlu0 %v1174
  %v1176 = vpop.xlane.xlu0 %1175
  %v1177 = vrcp.pop 32.0
  %v1178 = vmul.f32 %v1173, %v1177
  %v1179 = vmul.f32 %v1176, %v1177
  %v1180 = vsub.f32 %v1169, %v1178
  %v1181 = vsub.f32 %v1170, %v1179
  %v1182 = vmul.f32 %v1180, %v1180
  %v1183 = vmul.f32 %v1181, %v1181
  %v1184 = vsel %vm131, %v1182, 0.0
  %1185 = vadd.xlane.f32.xlu0 %v1184
  %v1186 = vpop.xlane.xlu0 %1185
  %v1187 = vsel %vm131, %v1183, 0.0
  %1188 = vadd.xlane.f32.xlu0 %v1187
  %v1189 = vpop.xlane.xlu0 %1188
  %v1190 = vmul.f32 %v1186, %v1177
  %v1191 = vmul.f32 %v1189, %v1177
  %v1192 = vadd.f32 %v1190, 1e-05
  %v1193 = vadd.f32 %v1191, 1e-05
  %v1194 = vrsqrt.pop %v1192
  %v1195 = vrsqrt.pop %v1193
  %v1196 = vmul.f32 %v1180, %v1194
  %v1197 = vmul.f32 %v1181, %v1195
  %v1199 = vlaneseq
  %v1200 = vshrl.u32 %v1199, 7
  %v1201 = vsub.s32 0, %v1200
  %v1202 = vrot.slane %v94, %v1201
  %v1204 = vmul.f32 %v1196, %v1202
  %v1205 = vmul.f32 %v1197, %v1202
  %v1207 = vlaneseq
  %v1208 = vshrl.u32 %v1207, 7
  %v1209 = vsub.s32 0, %v1208
  %v1210 = vrot.slane %v95, %v1209
  %v1212 = vadd.f32 %v1204, %v1210
  %v1213 = vadd.f32 %v1205, %v1210
  %v1214 = vpack.c.bf16 %v1213, %v1212
  %v1216 = vlaneseq
  %v1217 = vshrl.u32 %v1216, 7
  %v1218 = vsub.s32 0, %v1217
  %v1219 = vrot.slane %v100, %v1218
  %v1225 = vunpack.c.l.b16 %v96
  %v1226 = vunpack.c.l.b16 %v97
  %v1227 = vunpack.c.l.b16 %v98
  %v1228 = vunpack.c.l.b16 %v99
  %v1229 = vpack.c.b16 %v1226, %v1225
  %v1230 = vpack.c.b16 %v1228, %v1227
  %v1234 = vsel %vm131, %v1214, 0
  %1236 = vmatprep.subr.bf16.mxu0 0
  %1237 = vmatpush1.bf16.msra.mxu0 %v1229
  %1238 = vmatprep.subr.bf16.mxu0 0
  %1239 = vmatpush1.bf16.msra.mxu0 %v1230
  %1240 = vmatprep.subr.bf16.mxu0 0
  %1241 = vmatpush1.bf16.msra.mxu0 0
  %1242 = vmatprep.subr.bf16.mxu0 0
  %1243 = vmatpush1.bf16.msra.mxu0 0
  %1244 = vmatprep.subr.bf16.mxu0 0
  %1245 = vmatpush1.bf16.msra.mxu0 0
  %1246 = vmatprep.subr.bf16.mxu0 0
  %1247 = vmatpush1.bf16.msra.mxu0 0
  %1248 = vmatprep.subr.bf16.mxu0 0
  %1249 = vmatpush1.bf16.msra.mxu0 0
  %1250 = vmatprep.subr.bf16.mxu0 0
  %1251 = vmatpush1.bf16.msra.mxu0 0
  %1252 = vmatprep.subr.bf16.mxu0 0
  %1253 = vmatpush1.bf16.msra.mxu0 0
  %1254 = vmatprep.subr.bf16.mxu0 0
  %1255 = vmatpush1.bf16.msra.mxu0 0
  %1256 = vmatprep.subr.bf16.mxu0 0
  %1257 = vmatpush1.bf16.msra.mxu0 0
  %1258 = vmatprep.subr.bf16.mxu0 0
  %1259 = vmatpush1.bf16.msra.mxu0 0
  %1260 = vmatprep.subr.bf16.mxu0 0
  %1261 = vmatpush1.bf16.msra.mxu0 0
  %1262 = vmatprep.subr.bf16.mxu0 0
  %1263 = vmatpush1.bf16.msra.mxu0 0
  %1264 = vmatprep.subr.bf16.mxu0 0
  %1265 = vmatpush1.bf16.msra.mxu0 0
  %1266 = vmatprep.subr.bf16.mxu0 0
  %1267 = vmatpush1.bf16.msra.mxu0 0
  %1268 = vmatprep.mubr.bf16.mxu0 0
  %1269 = vmatmul.mubr.bf16.gmra.mrb[0].mxu0 %v1234
  %v1270 = vpop.f32.mrb[0].mxu0
  %v1271 = vadd.f32 %v1219, %v1270
  %v1272 = vpop.f32.mrb[0].mxu0
  %v1273 = vpop.f32.mrb[0].mxu0
  %v1274 = vadd.f32 %v1219, %v1273
  %v1275 = vpop.f32.mrb[0].mxu0
  %1276 = vdwg.mxu0
  %v1277 = vmul.f32 %v1271, 0.5
  %v1278 = vmul.f32 %v1274, 0.5
  %v1279 = vmul.f32 %v1271, 0.70710677
  %v1280 = vmul.f32 %v1274, 0.70710677
  %v1281 = verf.f32.pop %v1279
  %v1282 = verf.f32.pop %v1280
  %v1283 = vadd.f32 %v1281, 1.0
  %v1284 = vadd.f32 %v1282, 1.0
  %v1285 = vmul.f32 %v1277, %v1283
  %v1286 = vmul.f32 %v1278, %v1284
  %v1287 = vpack.c.bf16 %v1286, %v1285
  %v1289 = vlaneseq
  %v1290 = vshrl.u32 %v1289, 7
  %v1291 = vsub.s32 0, %v1290
  %v1292 = vrot.slane %v109, %v1291
  %v1302 = vunpack.c.l.b16 %v101
  %v1303 = vunpack.c.l.b16 %v102
  %v1304 = vunpack.c.l.b16 %v103
  %v1305 = vunpack.c.l.b16 %v104
  %v1306 = vunpack.c.l.b16 %v105
  %v1307 = vunpack.c.l.b16 %v106
  %v1308 = vunpack.c.l.b16 %v107
  %v1309 = vunpack.c.l.b16 %v108
  %v1310 = vpack.c.b16 %v1303, %v1302
  %v1311 = vpack.c.b16 %v1305, %v1304
  %v1312 = vpack.c.b16 %v1307, %v1306
  %v1313 = vpack.c.b16 %v1309, %v1308
  %vm1318 = vcmask 523264
  %v1320 = vsel %vm1318, %v1287, 0
  %1322 = vmatprep.subr.bf16.mxu0 0
  %1323 = vmatpush1.bf16.msra.mxu0 %v1310
  %1324 = vmatprep.subr.bf16.mxu0 0
  %1325 = vmatpush1.bf16.msra.mxu0 %v1311
  %1326 = vmatprep.subr.bf16.mxu0 0
  %1327 = vmatpush1.bf16.msra.mxu0 %v1312
  %1328 = vmatprep.subr.bf16.mxu0 0
  %1329 = vmatpush1.bf16.msra.mxu0 %v1313
  %1330 = vmatprep.subr.bf16.mxu0 0
  %1331 = vmatpush1.bf16.msra.mxu0 0
  %1332 = vmatprep.subr.bf16.mxu0 0
  %1333 = vmatpush1.bf16.msra.mxu0 0
  %1334 = vmatprep.subr.bf16.mxu0 0
  %1335 = vmatpush1.bf16.msra.mxu0 0
  %1336 = vmatprep.subr.bf16.mxu0 0
  %1337 = vmatpush1.bf16.msra.mxu0 0
  %1338 = vmatprep.subr.bf16.mxu0 0
  %1339 = vmatpush1.bf16.msra.mxu0 0
  %1340 = vmatprep.subr.bf16.mxu0 0
  %1341 = vmatpush1.bf16.msra.mxu0 0
  %1342 = vmatprep.subr.bf16.mxu0 0
  %1343 = vmatpush1.bf16.msra.mxu0 0
  %1344 = vmatprep.subr.bf16.mxu0 0
  %1345 = vmatpush1.bf16.msra.mxu0 0
  %1346 = vmatprep.subr.bf16.mxu0 0
  %1347 = vmatpush1.bf16.msra.mxu0 0
  %1348 = vmatprep.subr.bf16.mxu0 0
  %1349 = vmatpush1.bf16.msra.mxu0 0
  %1350 = vmatprep.subr.bf16.mxu0 0
  %1351 = vmatpush1.bf16.msra.mxu0 0
  %1352 = vmatprep.subr.bf16.mxu0 0
  %1353 = vmatpush1.bf16.msra.mxu0 0
  %1354 = vmatprep.mubr.bf16.mxu0 0
  %1355 = vmatmul.mubr.bf16.gmra.mrb[0].mxu0 %v1320
  %v1356 = vpop.f32.mrb[0].mxu0
  %v1357 = vadd.f32 %v1292, %v1356
  %v1358 = vpop.f32.mrb[0].mxu0
  %v1359 = vpop.f32.mrb[0].mxu0
  %v1360 = vadd.f32 %v1292, %v1359
  %v1361 = vpop.f32.mrb[0].mxu0
  %1362 = vdwg.mxu0
  %v1363 = vadd.f32 %v1357, %v1212
  %v1364 = vadd.f32 %v1360, %v1213
  %v1365 = vsel %vm131, %v1363, 0.0
  %1366 = vadd.xlane.f32.xlu0 %v1365
  %v1367 = vpop.xlane.xlu0 %1366
  %v1368 = vsel %vm131, %v1364, 0.0
  %1369 = vadd.xlane.f32.xlu0 %v1368
  %v1370 = vpop.xlane.xlu0 %1369
  %v1371 = vmul.f32 %v1367, %v1177
  %v1372 = vmul.f32 %v1370, %v1177
  %v1373 = vsub.f32 %v1363, %v1371
  %v1374 = vsub.f32 %v1364, %v1372
  %v1375 = vmul.f32 %v1373, %v1373
  %v1376 = vmul.f32 %v1374, %v1374
  %v1377 = vsel %vm131, %v1375, 0.0
  %1378 = vadd.xlane.f32.xlu0 %v1377
  %v1379 = vpop.xlane.xlu0 %1378
  %v1380 = vsel %vm131, %v1376, 0.0
  %1381 = vadd.xlane.f32.xlu0 %v1380
  %v1382 = vpop.xlane.xlu0 %1381
  %v1383 = vmul.f32 %v1379, %v1177
  %v1384 = vmul.f32 %v1382, %v1177
  %v1385 = vadd.f32 %v1383, 1e-05
  %v1386 = vadd.f32 %v1384, 1e-05
  %v1387 = vrsqrt.pop %v1385
  %v1388 = vrsqrt.pop %v1386
  %v1389 = vmul.f32 %v1373, %v1387
  %v1390 = vmul.f32 %v1374, %v1388
  %v1392 = vlaneseq
  %v1393 = vshrl.u32 %v1392, 7
  %v1394 = vsub.s32 0, %v1393
  %v1395 = vrot.slane %v110, %v1394
  %v1397 = vmul.f32 %v1389, %v1395
  %v1398 = vmul.f32 %v1390, %v1395
  %v1400 = vlaneseq
  %v1401 = vshrl.u32 %v1400, 7
  %v1402 = vsub.s32 0, %v1401
  %v1403 = vrot.slane %v111, %v1402
  %v1405 = vadd.f32 %v1397, %v1403
  %v1406 = vadd.f32 %v1398, %v1403
  %1407 = vst.msk [vmem:[%s14] sm:$0xff] %vm131, %v1405
  %1408 = vst.msk [vmem:[%s14 + $0x8] sm:$0xff] %vm131, %v1406
  // Predicated region
  $region58: #{robertabase_linear4_forward.4} parent=0 // pred_check
    _
  $region59: #{robertabase_linear4_forward.4} parent=0 // pred_check_branch
    %1410 = sbr.rel (0) target = $region61
  $region60: #{robertabase_linear4_forward.4} parent=0 // pred_region
    _
  $region61: #{robertabase_linear4_forward.4} parent=0 // pred_fallthru
    _
  // Predicated region
  $region62: #{robertabase_linear4_forward.4} parent=0 // pred_check
    _
  $region63: #{robertabase_linear4_forward.4} parent=0 // pred_check_branch
    %1412 = sbr.rel (0) target = $region65
  $region64: #{robertabase_linear4_forward.4} parent=0 // pred_region
    _
  $region65: #{robertabase_linear4_forward.4} parent=0 // pred_fallthru
    _

// kernel: robertabase_linear4_forward.5
$region0: #{robertabase_linear4_forward.5}
  #allocation0 [shape = 'u32[]', space=smem, size = 0x4, offset = 0x4, fixed_abs, tag = 'smem constant byte address 0x4 - core index']
  #allocation1 [shape = 'u32[144,128]{1,0:T(1,128)}', space=vmem, size = 0x12000, scoped, tag = 'internal scratch']
  %s0 = inlined_call_operand.vmem [shape: f32[16,32], index: 0, kind: input, shape index: {}]
  %s1 = inlined_call_operand.vmem [shape: f32[2,8], index: 1, kind: input, shape index: {}]
  %s2 = inlined_call_operand.vmem [shape: bf16[32,96], index: 2, kind: input, shape index: {}]
  %s3 = inlined_call_operand.vmem [shape: f32[1,96], index: 3, kind: input, shape index: {}]
  %s4 = inlined_call_operand.vmem [shape: bf16[32,32], index: 4, kind: input, shape index: {}]
  %s5 = inlined_call_operand.vmem [shape: f32[1,32], index: 5, kind: input, shape index: {}]
  %s6 = inlined_call_operand.vmem [shape: f32[1,32], index: 6, kind: input, shape index: {}]
  %s7 = inlined_call_operand.vmem [shape: f32[1,32], index: 7, kind: input, shape index: {}]
  %s8 = inlined_call_operand.vmem [shape: bf16[32,64], index: 8, kind: input, shape index: {}]
  %s9 = inlined_call_operand.vmem [shape: f32[1,64], index: 9, kind: input, shape index: {}]
  %s10 = inlined_call_operand.vmem [shape: bf16[64,32], index: 10, kind: input, shape index: {}]
  %s11 = inlined_call_operand.vmem [shape: f32[1,32], index: 11, kind: input, shape index: {}]
  %s12 = inlined_call_operand.vmem [shape: f32[1,32], index: 12, kind: input, shape index: {}]
  %s13 = inlined_call_operand.vmem [shape: f32[1,32], index: 13, kind: input, shape index: {}]
  %s14 = inlined_call_operand.vmem [shape: bf16[32,16], index: 14, kind: input, shape index: {}]
  %s15 = inlined_call_operand.vmem [shape: f32[1,16], index: 15, kind: input, shape index: {}]
  %s16 = inlined_call_operand.vmem [shape: bf16[16,32], index: 16, kind: input, shape index: {}]
  %s17 = inlined_call_operand.vmem [shape: f32[1,32], index: 17, kind: input, shape index: {}]
  %s18 = inlined_call_operand.vmem [shape: bf16[32,32], index: 18, kind: input, shape index: {}]
  %s19 = inlined_call_operand.vmem [shape: f32[1,32], index: 19, kind: input, shape index: {}]
  %s20 = inlined_call_operand.vmem [shape: bf16[32,128], index: 20, kind: input, shape index: {}]
  %s21 = inlined_call_operand.vmem [shape: f32[1,128], index: 21, kind: input, shape index: {}]
  %s22 = inlined_call_operand.hbm [shape: f32[2,128], index: 22, kind: output, shape index: {}]
  %s23 = sld [smem:[#allocation0]]
  $region98: #{robertabase_linear4_forward.5} parent=0
    _
  %s25 = ssub.s32 1, %s23
  %s26 = scalar_select 0, %s25, %s23
  $region1: #{robertabase_linear4_forward.5} parent=0
    #allocation2 [shape = 'u8[1024]{0}', space=vmem, size = 0x400, scoped, tag = 'output window, operand 0, single buffered']
    #allocation3 [shape = 's32[1]{0}', space=sflag, size = 0x4, scoped, tag = 'scoped memory for robertabase_linear4_forward.5']
    %27 = vsyncpa [#allocation3], 0
    // Predicated region
    $region2: #{robertabase_linear4_forward.5} parent=1 // pred_check
      _
    $region3: #{robertabase_linear4_forward.5} parent=1 // pred_check_branch
      %29 = sbr.rel (0) target = $region5
    $region4: #{robertabase_linear4_forward.5} parent=1 // pred_region
      _
    $region5: #{robertabase_linear4_forward.5} parent=1 // pred_fallthru
      _
    // Predicated region
    $region6: #{robertabase_linear4_forward.5} parent=1 // pred_check
      _
    $region7: #{robertabase_linear4_forward.5} parent=1 // pred_check_branch
      %31 = sbr.rel (0) target = $region9
    $region8: #{robertabase_linear4_forward.5} parent=1 // pred_region
      _
    $region9: #{robertabase_linear4_forward.5} parent=1 // pred_fallthru
      _
    // Predicated region
    $region10: #{robertabase_linear4_forward.5} parent=1 // pred_check
      _
    $region11: #{robertabase_linear4_forward.5} parent=1 // pred_check_branch
      %33 = sbr.rel (0) target = $region13
    $region12: #{robertabase_linear4_forward.5} parent=1 // pred_region
      _
    $region13: #{robertabase_linear4_forward.5} parent=1 // pred_fallthru
      _
    // Predicated region
    $region14: #{robertabase_linear4_forward.5} parent=1 // pred_check
      _
    $region15: #{robertabase_linear4_forward.5} parent=1 // pred_check_branch
      %35 = sbr.rel (0) target = $region17
    $region16: #{robertabase_linear4_forward.5} parent=1 // pred_region
      _
    $region17: #{robertabase_linear4_forward.5} parent=1 // pred_fallthru
      _
    // Predicated region
    $region18: #{robertabase_linear4_forward.5} parent=1 // pred_check
      _
    $region19: #{robertabase_linear4_forward.5} parent=1 // pred_check_branch
      %37 = sbr.rel (0) target = $region21
    $region20: #{robertabase_linear4_forward.5} parent=1 // pred_region
      _
    $region21: #{robertabase_linear4_forward.5} parent=1 // pred_fallthru
      _
    // Predicated region
    $region22: #{robertabase_linear4_forward.5} parent=1 // pred_check
      _
    $region23: #{robertabase_linear4_forward.5} parent=1 // pred_check_branch
      %39 = sbr.rel (0) target = $region25
    $region24: #{robertabase_linear4_forward.5} parent=1 // pred_region
      _
    $region25: #{robertabase_linear4_forward.5} parent=1 // pred_fallthru
      _
    // Predicated region
    $region26: #{robertabase_linear4_forward.5} parent=1 // pred_check
      _
    $region27: #{robertabase_linear4_forward.5} parent=1 // pred_check_branch
      %41 = sbr.rel (0) target = $region29
    $region28: #{robertabase_linear4_forward.5} parent=1 // pred_region
      _
    $region29: #{robertabase_linear4_forward.5} parent=1 // pred_fallthru
      _
    // Predicated region
    $region30: #{robertabase_linear4_forward.5} parent=1 // pred_check
      _
    $region31: #{robertabase_linear4_forward.5} parent=1 // pred_check_branch
      %43 = sbr.rel (0) target = $region33
    $region32: #{robertabase_linear4_forward.5} parent=1 // pred_region
      _
    $region33: #{robertabase_linear4_forward.5} parent=1 // pred_fallthru
      _
    // Predicated region
    $region34: #{robertabase_linear4_forward.5} parent=1 // pred_check
      _
    $region35: #{robertabase_linear4_forward.5} parent=1 // pred_check_branch
      %45 = sbr.rel (0) target = $region37
    $region36: #{robertabase_linear4_forward.5} parent=1 // pred_region
      _
    $region37: #{robertabase_linear4_forward.5} parent=1 // pred_fallthru
      _
    // Predicated region
    $region38: #{robertabase_linear4_forward.5} parent=1 // pred_check
      _
    $region39: #{robertabase_linear4_forward.5} parent=1 // pred_check_branch
      %47 = sbr.rel (0) target = $region41
    $region40: #{robertabase_linear4_forward.5} parent=1 // pred_region
      _
    $region41: #{robertabase_linear4_forward.5} parent=1 // pred_fallthru
      _
    // Predicated region
    $region42: #{robertabase_linear4_forward.5} parent=1 // pred_check
      _
    $region43: #{robertabase_linear4_forward.5} parent=1 // pred_check_branch
      %49 = sbr.rel (0) target = $region45
    $region44: #{robertabase_linear4_forward.5} parent=1 // pred_region
      _
    $region45: #{robertabase_linear4_forward.5} parent=1 // pred_fallthru
      _
    // Predicated region
    $region46: #{robertabase_linear4_forward.5} parent=1 // pred_check
      _
    $region47: #{robertabase_linear4_forward.5} parent=1 // pred_check_branch
      %51 = sbr.rel (0) target = $region49
    $region48: #{robertabase_linear4_forward.5} parent=1 // pred_region
      _
    $region49: #{robertabase_linear4_forward.5} parent=1 // pred_fallthru
      _
    // Predicated region
    $region50: #{robertabase_linear4_forward.5} parent=1 // pred_check
      _
    $region51: #{robertabase_linear4_forward.5} parent=1 // pred_check_branch
      %53 = sbr.rel (0) target = $region53
    $region52: #{robertabase_linear4_forward.5} parent=1 // pred_region
      _
    $region53: #{robertabase_linear4_forward.5} parent=1 // pred_fallthru
      _
    // Predicated region
    $region54: #{robertabase_linear4_forward.5} parent=1 // pred_check
      _
    $region55: #{robertabase_linear4_forward.5} parent=1 // pred_check_branch
      %55 = sbr.rel (0) target = $region57
    $region56: #{robertabase_linear4_forward.5} parent=1 // pred_region
      _
    $region57: #{robertabase_linear4_forward.5} parent=1 // pred_fallthru
      _
    // Predicated region
    $region58: #{robertabase_linear4_forward.5} parent=1 // pred_check
      _
    $region59: #{robertabase_linear4_forward.5} parent=1 // pred_check_branch
      %57 = sbr.rel (0) target = $region61
    $region60: #{robertabase_linear4_forward.5} parent=1 // pred_region
      _
    $region61: #{robertabase_linear4_forward.5} parent=1 // pred_fallthru
      _
    // Predicated region
    $region62: #{robertabase_linear4_forward.5} parent=1 // pred_check
      _
    $region63: #{robertabase_linear4_forward.5} parent=1 // pred_check_branch
      %59 = sbr.rel (0) target = $region65
    $region64: #{robertabase_linear4_forward.5} parent=1 // pred_region
      _
    $region65: #{robertabase_linear4_forward.5} parent=1 // pred_fallthru
      _
    // Predicated region
    $region66: #{robertabase_linear4_forward.5} parent=1 // pred_check
      _
    $region67: #{robertabase_linear4_forward.5} parent=1 // pred_check_branch
      %61 = sbr.rel (0) target = $region69
    $region68: #{robertabase_linear4_forward.5} parent=1 // pred_region
      _
    $region69: #{robertabase_linear4_forward.5} parent=1 // pred_fallthru
      _
    // Predicated region
    $region70: #{robertabase_linear4_forward.5} parent=1 // pred_check
      _
    $region71: #{robertabase_linear4_forward.5} parent=1 // pred_check_branch
      %63 = sbr.rel (0) target = $region73
    $region72: #{robertabase_linear4_forward.5} parent=1 // pred_region
      _
    $region73: #{robertabase_linear4_forward.5} parent=1 // pred_fallthru
      _
    // Predicated region
    $region74: #{robertabase_linear4_forward.5} parent=1 // pred_check
      _
    $region75: #{robertabase_linear4_forward.5} parent=1 // pred_check_branch
      %65 = sbr.rel (0) target = $region77
    $region76: #{robertabase_linear4_forward.5} parent=1 // pred_region
      _
    $region77: #{robertabase_linear4_forward.5} parent=1 // pred_fallthru
      _
    // Predicated region
    $region78: #{robertabase_linear4_forward.5} parent=1 // pred_check
      _
    $region79: #{robertabase_linear4_forward.5} parent=1 // pred_check_branch
      %67 = sbr.rel (0) target = $region81
    $region80: #{robertabase_linear4_forward.5} parent=1 // pred_region
      _
    $region81: #{robertabase_linear4_forward.5} parent=1 // pred_fallthru
      _
    // Predicated region
    $region82: #{robertabase_linear4_forward.5} parent=1 // pred_check
      _
    $region83: #{robertabase_linear4_forward.5} parent=1 // pred_check_branch
      %69 = sbr.rel (0) target = $region85
    $region84: #{robertabase_linear4_forward.5} parent=1 // pred_region
      _
    $region85: #{robertabase_linear4_forward.5} parent=1 // pred_fallthru
      _
    // Predicated region
    $region86: #{robertabase_linear4_forward.5} parent=1 // pred_check
      _
    $region87: #{robertabase_linear4_forward.5} parent=1 // pred_check_branch
      %71 = sbr.rel (0) target = $region89
    $region88: #{robertabase_linear4_forward.5} parent=1 // pred_region
      _
    $region89: #{robertabase_linear4_forward.5} parent=1 // pred_fallthru
      _
    %v73 = vld [vmem:[%s1] sm:$0x3]
    %v76 = vunpack.c.l.s4 1966171168
    %v77 = vunpack.c.0.s8 %v76
    %v78 = vlaneseq
    %v79 = vshrl.u32 %v78, 7
    %v80 = vsub.s32 %v77, %v79
    %v81 = vrot.slane %v73, %v80
    %v82 = vcombine.high %v81, %v81
    %v84 = vunpack.c.l.s4 1966171168
    %v85 = vunpack.c.0.s8 %v84
    %v86 = vlaneseq
    %v87 = vshrl.u32 %v86, 7
    %v88 = vsub.s32 %v85, %v87
    %v89 = vrot.slane %v81, %v88
    %v91 = vunpack.c.l.s4 1966171168
    %v92 = vunpack.c.0.s8 %v91
    %v93 = vlaneseq
    %v94 = vshrl.u32 %v93, 7
    %v95 = vsub.s32 %v92, %v94
    %v96 = vrot.slane %v82, %v95
    %v97 = vlaneseq
    %v98 = vshrl.u32 %v97, 7
    %v99 = vsub.s32 0, %v98
    %v100 = vrot.slane %v89, %v99
    %v101 = vlaneseq
    %v102 = vshrl.u32 %v101, 7
    %v103 = vsub.s32 0, %v102
    %v104 = vrot.slane %v96, %v103
    %v107 = vld [vmem:[%s0] sm:$0xff]
    %v108 = vld [vmem:[%s0 + $0x8] sm:$0xff]
    %v109 = vld [vmem:[%s2] sm:$0xf]
    %v110 = vld [vmem:[%s2 + $0x4] sm:$0xf]
    %v111 = vld [vmem:[%s2 + $0x8] sm:$0xf]
    %v112 = vld [vmem:[%s2 + $0xc] sm:$0xf]
    %v113 = vld [vmem:[%s3] sm:$0x1]
    %v114 = vld [vmem:[%s4] sm:$0xf]
    %v115 = vld [vmem:[%s4 + $0x4] sm:$0xf]
    %v116 = vld [vmem:[%s4 + $0x8] sm:$0xf]
    %v117 = vld [vmem:[%s4 + $0xc] sm:$0xf]
    %v118 = vld [vmem:[%s5] sm:$0x1]
    %v119 = vld [vmem:[%s6] sm:$0x1]
    %v120 = vld [vmem:[%s7] sm:$0x1]
    %v121 = vld [vmem:[%s8] sm:$0xf]
    %v122 = vld [vmem:[%s8 + $0x4] sm:$0xf]
    %v123 = vld [vmem:[%s8 + $0x8] sm:$0xf]
    %v124 = vld [vmem:[%s8 + $0xc] sm:$0xf]
    %v125 = vld [vmem:[%s9] sm:$0x1]
    %v126 = vld [vmem:[%s10] sm:$0xf]
    %v127 = vld [vmem:[%s10 + $0x4] sm:$0xf]
    %v128 = vld [vmem:[%s10 + $0x8] sm:$0xf]
    %v129 = vld [vmem:[%s10 + $0xc] sm:$0xf]
    %v130 = vld [vmem:[%s10 + $0x10] sm:$0xf]
    %v131 = vld [vmem:[%s10 + $0x14] sm:$0xf]
    %v132 = vld [vmem:[%s10 + $0x18] sm:$0xf]
    %v133 = vld [vmem:[%s10 + $0x1c] sm:$0xf]
    %v134 = vld [vmem:[%s11] sm:$0x1]
    %v135 = vld [vmem:[%s12] sm:$0x1]
    %v136 = vld [vmem:[%s13] sm:$0x1]
    %v137 = vpack.c.bf16 %v108, %v107
    %v139 = vlaneseq
    %v140 = vshrl.u32 %v139, 7
    %v141 = vsub.s32 0, %v140
    %v142 = vrot.slane %v113, %v141
    %v148 = vunpack.c.l.b16 %v109
    %v149 = vunpack.c.l.b16 %v110
    %v150 = vunpack.c.l.b16 %v111
    %v151 = vunpack.c.l.b16 %v112
    %v152 = vpack.c.b16 %v149, %v148
    %v153 = vpack.c.b16 %v151, %v150
    %vm156 = vcmask 261120
    %v158 = vsel %vm156, %v137, 0
    %160 = vmatprep.subr.bf16.mxu0 0
    %161 = vmatpush1.bf16.msra.mxu0 %v152
    %162 = vmatprep.subr.bf16.mxu0 0
    %163 = vmatpush1.bf16.msra.mxu0 %v153
    %164 = vmatprep.subr.bf16.mxu0 0
    %165 = vmatpush1.bf16.msra.mxu0 0
    %166 = vmatprep.subr.bf16.mxu0 0
    %167 = vmatpush1.bf16.msra.mxu0 0
    %168 = vmatprep.subr.bf16.mxu0 0
    %169 = vmatpush1.bf16.msra.mxu0 0
    %170 = vmatprep.subr.bf16.mxu0 0
    %171 = vmatpush1.bf16.msra.mxu0 0
    %172 = vmatprep.subr.bf16.mxu0 0
    %173 = vmatpush1.bf16.msra.mxu0 0
    %174 = vmatprep.subr.bf16.mxu0 0
    %175 = vmatpush1.bf16.msra.mxu0 0
    %176 = vmatprep.subr.bf16.mxu0 0
    %177 = vmatpush1.bf16.msra.mxu0 0
    %178 = vmatprep.subr.bf16.mxu0 0
    %179 = vmatpush1.bf16.msra.mxu0 0
    %180 = vmatprep.subr.bf16.mxu0 0
    %181 = vmatpush1.bf16.msra.mxu0 0
    %182 = vmatprep.subr.bf16.mxu0 0
    %183 = vmatpush1.bf16.msra.mxu0 0
    %184 = vmatprep.subr.bf16.mxu0 0
    %185 = vmatpush1.bf16.msra.mxu0 0
    %186 = vmatprep.subr.bf16.mxu0 0
    %187 = vmatpush1.bf16.msra.mxu0 0
    %188 = vmatprep.subr.bf16.mxu0 0
    %189 = vmatpush1.bf16.msra.mxu0 0
    %190 = vmatprep.subr.bf16.mxu0 0
    %191 = vmatpush1.bf16.msra.mxu0 0
    %192 = vmatprep.mubr.bf16.mxu0 0
    %193 = vmatmul.mubr.bf16.gmra.mrb[0].mxu0 %v158
    %v194 = vpop.f32.mrb[0].mxu0
    %v195 = vadd.f32 %v142, %v194
    %v196 = vpop.f32.mrb[0].mxu0
    %v197 = vpop.f32.mrb[0].mxu0
    %v198 = vadd.f32 %v142, %v197
    %v199 = vpop.f32.mrb[0].mxu0
    %200 = vdwg.mxu0
    %v201 = vpack.c.bf16 %v195, %v195
    %v202 = vpack.c.bf16 %v198, %v198
    %204 = vrot.lane.b32.xlu0 %v201, 96
    %v205 = vpop.permute.xlu0 %204
    %vm206 = vcmask 64512
    %v208 = vsel %vm206, %v201, 0
    %v211 = vsel %vm206, %v205, 0
    %213 = vmatprep.subr.bf16.mxu0 0
    %214 = vmatpush1.bf16.xpose.msra.mxu0 %v211
    %215 = vmatprep.subr.bf16.mxu0 0
    %216 = vmatpush1.bf16.xpose.msra.mxu0 0
    %217 = vmatprep.subr.bf16.mxu0 0
    %218 = vmatpush1.bf16.xpose.msra.mxu0 0
    %219 = vmatprep.subr.bf16.mxu0 0
    %220 = vmatpush1.bf16.xpose.msra.mxu0 0
    %221 = vmatprep.subr.bf16.mxu0 0
    %222 = vmatpush1.bf16.xpose.msra.mxu0 0
    %223 = vmatprep.subr.bf16.mxu0 0
    %224 = vmatpush1.bf16.xpose.msra.mxu0 0
    %225 = vmatprep.subr.bf16.mxu0 0
    %226 = vmatpush1.bf16.xpose.msra.mxu0 0
    %227 = vmatprep.subr.bf16.mxu0 0
    %228 = vmatpush1.bf16.xpose.msra.mxu0 0
    %229 = vmatprep.subr.bf16.mxu0 0
    %230 = vmatpush1.bf16.xpose.msra.mxu0 0
    %231 = vmatprep.subr.bf16.mxu0 0
    %232 = vmatpush1.bf16.xpose.msra.mxu0 0
    %233 = vmatprep.subr.bf16.mxu0 0
    %234 = vmatpush1.bf16.xpose.msra.mxu0 0
    %235 = vmatprep.subr.bf16.mxu0 0
    %236 = vmatpush1.bf16.xpose.msra.mxu0 0
    %237 = vmatprep.subr.bf16.mxu0 0
    %238 = vmatpush1.bf16.xpose.msra.mxu0 0
    %239 = vmatprep.subr.bf16.mxu0 0
    %240 = vmatpush1.bf16.xpose.msra.mxu0 0
    %241 = vmatprep.subr.bf16.mxu0 0
    %242 = vmatpush1.bf16.xpose.msra.mxu0 0
    %243 = vmatprep.subr.bf16.mxu0 0
    %244 = vmatpush1.bf16.xpose.msra.mxu0 0
    %245 = vmatprep.mubr.bf16.mxu0 0
    %246 = vmatmul.mubr.bf16.gmra.mrb[0].mxu0 %v208
    %v247 = vpop.f32.mrb[0].mxu0
    %v248 = vadd.f32 0.0, %v247
    %v249 = vpop.f32.mrb[0].mxu0
    %v250 = vpop.f32.mrb[0].mxu0
    %v251 = vpop.f32.mrb[0].mxu0
    %252 = vdwg.mxu0
    %254 = vrot.lane.b32.xlu0 %v202, 96
    %v255 = vpop.permute.xlu0 %254
    %v257 = vsel %vm206, %v202, 0
    %v260 = vsel %vm206, %v255, 0
    %262 = vmatprep.subr.bf16.mxu0 0
    %263 = vmatpush1.bf16.xpose.msra.mxu0 %v260
    %264 = vmatprep.subr.bf16.mxu0 0
    %265 = vmatpush1.bf16.xpose.msra.mxu0 0
    %266 = vmatprep.subr.bf16.mxu0 0
    %267 = vmatpush1.bf16.xpose.msra.mxu0 0
    %268 = vmatprep.subr.bf16.mxu0 0
    %269 = vmatpush1.bf16.xpose.msra.mxu0 0
    %270 = vmatprep.subr.bf16.mxu0 0
    %271 = vmatpush1.bf16.xpose.msra.mxu0 0
    %272 = vmatprep.subr.bf16.mxu0 0
    %273 = vmatpush1.bf16.xpose.msra.mxu0 0
    %274 = vmatprep.subr.bf16.mxu0 0
    %275 = vmatpush1.bf16.xpose.msra.mxu0 0
    %276 = vmatprep.subr.bf16.mxu0 0
    %277 = vmatpush1.bf16.xpose.msra.mxu0 0
    %278 = vmatprep.subr.bf16.mxu0 0
    %279 = vmatpush1.bf16.xpose.msra.mxu0 0
    %280 = vmatprep.subr.bf16.mxu0 0
    %281 = vmatpush1.bf16.xpose.msra.mxu0 0
    %282 = vmatprep.subr.bf16.mxu0 0
    %283 = vmatpush1.bf16.xpose.msra.mxu0 0
    %284 = vmatprep.subr.bf16.mxu0 0
    %285 = vmatpush1.bf16.xpose.msra.mxu0 0
    %286 = vmatprep.subr.bf16.mxu0 0
    %287 = vmatpush1.bf16.xpose.msra.mxu0 0
    %288 = vmatprep.subr.bf16.mxu0 0
    %289 = vmatpush1.bf16.xpose.msra.mxu0 0
    %290 = vmatprep.subr.bf16.mxu0 0
    %291 = vmatpush1.bf16.xpose.msra.mxu0 0
    %292 = vmatprep.subr.bf16.mxu0 0
    %293 = vmatpush1.bf16.xpose.msra.mxu0 0
    %294 = vmatprep.mubr.bf16.mxu0 0
    %295 = vmatmul.mubr.bf16.gmra.mrb[0].mxu0 %v257
    %v296 = vpop.f32.mrb[0].mxu0
    %v297 = vadd.f32 0.0, %v296
    %v298 = vpop.f32.mrb[0].mxu0
    %v299 = vpop.f32.mrb[0].mxu0
    %v300 = vpop.f32.mrb[0].mxu0
    %301 = vdwg.mxu0
    %v302 = vmul.f32 %v248, 0.35355338
    %v303 = vmul.f32 %v297, 0.35355338
    %v304 = vadd.f32 %v302, %v100
    %v305 = vadd.f32 %v303, %v104
    %v306 = vsel %vm206, %v304, -inf
    %307 = vmax.xlane.f32.xlu0 %v306
    %v308 = vpop.xlane.xlu0 %307
    %v309 = vsel %vm206, %v305, -inf
    %310 = vmax.xlane.f32.xlu0 %v309
    %v311 = vpop.xlane.xlu0 %310
    %v312 = vsub.f32 %v304, %v308
    %v313 = vsub.f32 %v305, %v311
    %v314 = vmul.f32 %v312, 1.442695
    %v315 = vpow.pop %v314
    %v316 = vmul.f32 %v313, 1.442695
    %v317 = vpow.pop %v316
    %v318 = vsel %vm206, %v315, 0.0
    %319 = vadd.xlane.f32.xlu0 %v318
    %v320 = vpop.xlane.xlu0 %319
    %v321 = vsel %vm206, %v317, 0.0
    %322 = vadd.xlane.f32.xlu0 %v321
    %v323 = vpop.xlane.xlu0 %322
    %v324 = vrcp.pop %v320
    %v325 = vrcp.pop %v323
    %v326 = vmul.f32 %v315, %v324
    %v327 = vmul.f32 %v317, %v325
    %v328 = vpack.c.bf16 %v326, %v326
    %v329 = vpack.c.bf16 %v327, %v327
    %330 = vrot.lane.b32.xlu0 %v201, 64
    %v331 = vpop.permute.xlu0 %330
    %v333 = vsel %vm206, %v328, 0
    %vm335 = vcmask 1043456
    %v337 = vsel %vm335, %v331, 0
    %339 = vmatprep.subr.bf16.mxu0 0
    %340 = vmatpush1.bf16.msra.mxu0 %v337
    %341 = vmatprep.subr.bf16.mxu0 0
    %342 = vmatpush1.bf16.msra.mxu0 0
    %343 = vmatprep.subr.bf16.mxu0 0
    %344 = vmatpush1.bf16.msra.mxu0 0
    %345 = vmatprep.subr.bf16.mxu0 0
    %346 = vmatpush1.bf16.msra.mxu0 0
    %347 = vmatprep.subr.bf16.mxu0 0
    %348 = vmatpush1.bf16.msra.mxu0 0
    %349 = vmatprep.subr.bf16.mxu0 0
    %350 = vmatpush1.bf16.msra.mxu0 0
    %351 = vmatprep.subr.bf16.mxu0 0
    %352 = vmatpush1.bf16.msra.mxu0 0
    %353 = vmatprep.subr.bf16.mxu0 0
    %354 = vmatpush1.bf16.msra.mxu0 0
    %355 = vmatprep.subr.bf16.mxu0 0
    %356 = vmatpush1.bf16.msra.mxu0 0
    %357 = vmatprep.subr.bf16.mxu0 0
    %358 = vmatpush1.bf16.msra.mxu0 0
    %359 = vmatprep.subr.bf16.mxu0 0
    %360 = vmatpush1.bf16.msra.mxu0 0
    %361 = vmatprep.subr.bf16.mxu0 0
    %362 = vmatpush1.bf16.msra.mxu0 0
    %363 = vmatprep.subr.bf16.mxu0 0
    %364 = vmatpush1.bf16.msra.mxu0 0
    %365 = vmatprep.subr.bf16.mxu0 0
    %366 = vmatpush1.bf16.msra.mxu0 0
    %367 = vmatprep.subr.bf16.mxu0 0
    %368 = vmatpush1.bf16.msra.mxu0 0
    %369 = vmatprep.subr.bf16.mxu0 0
    %370 = vmatpush1.bf16.msra.mxu0 0
    %371 = vmatprep.mubr.bf16.mxu0 0
    %372 = vmatmul.mubr.bf16.gmra.mrb[0].mxu0 %v333
    %v373 = vpop.f32.mrb[0].mxu0
    %v374 = vadd.f32 0.0, %v373
    %v375 = vpop.f32.mrb[0].mxu0
    %v376 = vpop.f32.mrb[0].mxu0
    %v377 = vpop.f32.mrb[0].mxu0
    %378 = vdwg.mxu0
    %379 = vrot.lane.b32.xlu0 %v202, 64
    %v380 = vpop.permute.xlu0 %379
    %v382 = vsel %vm206, %v329, 0
    %v385 = vsel %vm335, %v380, 0
    %387 = vmatprep.subr.bf16.mxu0 0
    %388 = vmatpush1.bf16.msra.mxu0 %v385
    %389 = vmatprep.subr.bf16.mxu0 0
    %390 = vmatpush1.bf16.msra.mxu0 0
    %391 = vmatprep.subr.bf16.mxu0 0
    %392 = vmatpush1.bf16.msra.mxu0 0
    %393 = vmatprep.subr.bf16.mxu0 0
    %394 = vmatpush1.bf16.msra.mxu0 0
    %395 = vmatprep.subr.bf16.mxu0 0
    %396 = vmatpush1.bf16.msra.mxu0 0
    %397 = vmatprep.subr.bf16.mxu0 0
    %398 = vmatpush1.bf16.msra.mxu0 0
    %399 = vmatprep.subr.bf16.mxu0 0
    %400 = vmatpush1.bf16.msra.mxu0 0
    %401 = vmatprep.subr.bf16.mxu0 0
    %402 = vmatpush1.bf16.msra.mxu0 0
    %403 = vmatprep.subr.bf16.mxu0 0
    %404 = vmatpush1.bf16.msra.mxu0 0
    %405 = vmatprep.subr.bf16.mxu0 0
    %406 = vmatpush1.bf16.msra.mxu0 0
    %407 = vmatprep.subr.bf16.mxu0 0
    %408 = vmatpush1.bf16.msra.mxu0 0
    %409 = vmatprep.subr.bf16.mxu0 0
    %410 = vmatpush1.bf16.msra.mxu0 0
    %411 = vmatprep.subr.bf16.mxu0 0
    %412 = vmatpush1.bf16.msra.mxu0 0
    %413 = vmatprep.subr.bf16.mxu0 0
    %414 = vmatpush1.bf16.msra.mxu0 0
    %415 = vmatprep.subr.bf16.mxu0 0
    %416 = vmatpush1.bf16.msra.mxu0 0
    %417 = vmatprep.subr.bf16.mxu0 0
    %418 = vmatpush1.bf16.msra.mxu0 0
    %419 = vmatprep.mubr.bf16.mxu0 0
    %420 = vmatmul.mubr.bf16.gmra.mrb[0].mxu0 %v382
    %v421 = vpop.f32.mrb[0].mxu0
    %v422 = vadd.f32 0.0, %v421
    %v423 = vpop.f32.mrb[0].mxu0
    %v424 = vpop.f32.mrb[0].mxu0
    %v425 = vpop.f32.mrb[0].mxu0
    %426 = vdwg.mxu0
    %427 = vrot.lane.b32.xlu0 %v201, 120
    %v428 = vpop.permute.xlu0 %427
    %429 = vrot.lane.b32.xlu0 %v201, 88
    %v430 = vpop.permute.xlu0 %429
    %v432 = vsel %vm206, %v428, 0
    %v435 = vsel %vm206, %v430, 0
    %437 = vmatprep.subr.bf16.mxu0 0
    %438 = vmatpush1.bf16.xpose.msra.mxu0 %v435
    %439 = vmatprep.subr.bf16.mxu0 0
    %440 = vmatpush1.bf16.xpose.msra.mxu0 0
    %441 = vmatprep.subr.bf16.mxu0 0
    %442 = vmatpush1.bf16.xpose.msra.mxu0 0
    %443 = vmatprep.subr.bf16.mxu0 0
    %444 = vmatpush1.bf16.xpose.msra.mxu0 0
    %445 = vmatprep.subr.bf16.mxu0 0
    %446 = vmatpush1.bf16.xpose.msra.mxu0 0
    %447 = vmatprep.subr.bf16.mxu0 0
    %448 = vmatpush1.bf16.xpose.msra.mxu0 0
    %449 = vmatprep.subr.bf16.mxu0 0
    %450 = vmatpush1.bf16.xpose.msra.mxu0 0
    %451 = vmatprep.subr.bf16.mxu0 0
    %452 = vmatpush1.bf16.xpose.msra.mxu0 0
    %453 = vmatprep.subr.bf16.mxu0 0
    %454 = vmatpush1.bf16.xpose.msra.mxu0 0
    %455 = vmatprep.subr.bf16.mxu0 0
    %456 = vmatpush1.bf16.xpose.msra.mxu0 0
    %457 = vmatprep.subr.bf16.mxu0 0
    %458 = vmatpush1.bf16.xpose.msra.mxu0 0
    %459 = vmatprep.subr.bf16.mxu0 0
    %460 = vmatpush1.bf16.xpose.msra.mxu0 0
    %461 = vmatprep.subr.bf16.mxu0 0
    %462 = vmatpush1.bf16.xpose.msra.mxu0 0
    %463 = vmatprep.subr.bf16.mxu0 0
    %464 = vmatpush1.bf16.xpose.msra.mxu0 0
    %465 = vmatprep.subr.bf16.mxu0 0
    %466 = vmatpush1.bf16.xpose.msra.mxu0 0
    %467 = vmatprep.subr.bf16.mxu0 0
    %468 = vmatpush1.bf16.xpose.msra.mxu0 0
    %469 = vmatprep.mubr.bf16.mxu0 0
    %470 = vmatmul.mubr.bf16.gmra.mrb[0].mxu0 %v432
    %v471 = vpop.f32.mrb[0].mxu0
    %v472 = vadd.f32 0.0, %v471
    %v473 = vpop.f32.mrb[0].mxu0
    %v474 = vpop.f32.mrb[0].mxu0
    %v475 = vpop.f32.mrb[0].mxu0
    %476 = vdwg.mxu0
    %477 = vrot.lane.b32.xlu0 %v202, 120
    %v478 = vpop.permute.xlu0 %477
    %479 = vrot.lane.b32.xlu0 %v202, 88
    %v480 = vpop.permute.xlu0 %479
    %v482 = vsel %vm206, %v478, 0
    %v485 = vsel %vm206, %v480, 0
    %487 = vmatprep.subr.bf16.mxu0 0
    %488 = vmatpush1.bf16.xpose.msra.mxu0 %v485
    %489 = vmatprep.subr.bf16.mxu0 0
    %490 = vmatpush1.bf16.xpose.msra.mxu0 0
    %491 = vmatprep.subr.bf16.mxu0 0
    %492 = vmatpush1.bf16.xpose.msra.mxu0 0
    %493 = vmatprep.subr.bf16.mxu0 0
    %494 = vmatpush1.bf16.xpose.msra.mxu0 0
    %495 = vmatprep.subr.bf16.mxu0 0
    %496 = vmatpush1.bf16.xpose.msra.mxu0 0
    %497 = vmatprep.subr.bf16.mxu0 0
    %498 = vmatpush1.bf16.xpose.msra.mxu0 0
    %499 = vmatprep.subr.bf16.mxu0 0
    %500 = vmatpush1.bf16.xpose.msra.mxu0 0
    %501 = vmatprep.subr.bf16.mxu0 0
    %502 = vmatpush1.bf16.xpose.msra.mxu0 0
    %503 = vmatprep.subr.bf16.mxu0 0
    %504 = vmatpush1.bf16.xpose.msra.mxu0 0
    %505 = vmatprep.subr.bf16.mxu0 0
    %506 = vmatpush1.bf16.xpose.msra.mxu0 0
    %507 = vmatprep.subr.bf16.mxu0 0
    %508 = vmatpush1.bf16.xpose.msra.mxu0 0
    %509 = vmatprep.subr.bf16.mxu0 0
    %510 = vmatpush1.bf16.xpose.msra.mxu0 0
    %511 = vmatprep.subr.bf16.mxu0 0
    %512 = vmatpush1.bf16.xpose.msra.mxu0 0
    %513 = vmatprep.subr.bf16.mxu0 0
    %514 = vmatpush1.bf16.xpose.msra.mxu0 0
    %515 = vmatprep.subr.bf16.mxu0 0
    %516 = vmatpush1.bf16.xpose.msra.mxu0 0
    %517 = vmatprep.subr.bf16.mxu0 0
    %518 = vmatpush1.bf16.xpose.msra.mxu0 0
    %519 = vmatprep.mubr.bf16.mxu0 0
    %520 = vmatmul.mubr.bf16.gmra.mrb[0].mxu0 %v482
    %v521 = vpop.f32.mrb[0].mxu0
    %v522 = vadd.f32 0.0, %v521
    %v523 = vpop.f32.mrb[0].mxu0
    %v524 = vpop.f32.mrb[0].mxu0
    %v525 = vpop.f32.mrb[0].mxu0
    %526 = vdwg.mxu0
    %v527 = vmul.f32 %v472, 0.35355338
    %v528 = vmul.f32 %v522, 0.35355338
    %v529 = vadd.f32 %v527, %v100
    %v530 = vadd.f32 %v528, %v104
    %v531 = vsel %vm206, %v529, -inf
    %532 = vmax.xlane.f32.xlu0 %v531
    %v533 = vpop.xlane.xlu0 %532
    %v534 = vsel %vm206, %v530, -inf
    %535 = vmax.xlane.f32.xlu0 %v534
    %v536 = vpop.xlane.xlu0 %535
    %v537 = vsub.f32 %v529, %v533
    %v538 = vsub.f32 %v530, %v536
    %v539 = vmul.f32 %v537, 1.442695
    %v540 = vpow.pop %v539
    %v541 = vmul.f32 %v538, 1.442695
    %v542 = vpow.pop %v541
    %v543 = vsel %vm206, %v540, 0.0
    %544 = vadd.xlane.f32.xlu0 %v543
    %v545 = vpop.xlane.xlu0 %544
    %v546 = vsel %vm206, %v542, 0.0
    %547 = vadd.xlane.f32.xlu0 %v546
    %v548 = vpop.xlane.xlu0 %547
    %v549 = vrcp.pop %v545
    %v550 = vrcp.pop %v548
    %v551 = vmul.f32 %v540, %v549
    %v552 = vmul.f32 %v542, %v550
    %v553 = vpack.c.bf16 %v551, %v551
    %v554 = vpack.c.bf16 %v552, %v552
    %555 = vrot.lane.b32.xlu0 %v201, 56
    %v556 = vpop.permute.xlu0 %555
    %v558 = vsel %vm206, %v553, 0
    %v561 = vsel %vm335, %v556, 0
    %563 = vmatprep.subr.bf16.mxu0 0
    %564 = vmatpush1.bf16.msra.mxu0 %v561
    %565 = vmatprep.subr.bf16.mxu0 0
    %566 = vmatpush1.bf16.msra.mxu0 0
    %567 = vmatprep.subr.bf16.mxu0 0
    %568 = vmatpush1.bf16.msra.mxu0 0
    %569 = vmatprep.subr.bf16.mxu0 0
    %570 = vmatpush1.bf16.msra.mxu0 0
    %571 = vmatprep.subr.bf16.mxu0 0
    %572 = vmatpush1.bf16.msra.mxu0 0
    %573 = vmatprep.subr.bf16.mxu0 0
    %574 = vmatpush1.bf16.msra.mxu0 0
    %575 = vmatprep.subr.bf16.mxu0 0
    %576 = vmatpush1.bf16.msra.mxu0 0
    %577 = vmatprep.subr.bf16.mxu0 0
    %578 = vmatpush1.bf16.msra.mxu0 0
    %579 = vmatprep.subr.bf16.mxu0 0
    %580 = vmatpush1.bf16.msra.mxu0 0
    %581 = vmatprep.subr.bf16.mxu0 0
    %582 = vmatpush1.bf16.msra.mxu0 0
    %583 = vmatprep.subr.bf16.mxu0 0
    %584 = vmatpush1.bf16.msra.mxu0 0
    %585 = vmatprep.subr.bf16.mxu0 0
    %586 = vmatpush1.bf16.msra.mxu0 0
    %587 = vmatprep.subr.bf16.mxu0 0
    %588 = vmatpush1.bf16.msra.mxu0 0
    %589 = vmatprep.subr.bf16.mxu0 0
    %590 = vmatpush1.bf16.msra.mxu0 0
    %591 = vmatprep.subr.bf16.mxu0 0
    %592 = vmatpush1.bf16.msra.mxu0 0
    %593 = vmatprep.subr.bf16.mxu0 0
    %594 = vmatpush1.bf16.msra.mxu0 0
    %595 = vmatprep.mubr.bf16.mxu0 0
    %596 = vmatmul.mubr.bf16.gmra.mrb[0].mxu0 %v558
    %v597 = vpop.f32.mrb[0].mxu0
    %v598 = vadd.f32 0.0, %v597
    %v599 = vpop.f32.mrb[0].mxu0
    %v600 = vpop.f32.mrb[0].mxu0
    %v601 = vpop.f32.mrb[0].mxu0
    %602 = vdwg.mxu0
    %603 = vrot.lane.b32.xlu0 %v202, 56
    %v604 = vpop.permute.xlu0 %603
    %v606 = vsel %vm206, %v554, 0
    %v609 = vsel %vm335, %v604, 0
    %611 = vmatprep.subr.bf16.mxu0 0
    %612 = vmatpush1.bf16.msra.mxu0 %v609
    %613 = vmatprep.subr.bf16.mxu0 0
    %614 = vmatpush1.bf16.msra.mxu0 0
    %615 = vmatprep.subr.bf16.mxu0 0
    %616 = vmatpush1.bf16.msra.mxu0 0
    %617 = vmatprep.subr.bf16.mxu0 0
    %618 = vmatpush1.bf16.msra.mxu0 0
    %619 = vmatprep.subr.bf16.mxu0 0
    %620 = vmatpush1.bf16.msra.mxu0 0
    %621 = vmatprep.subr.bf16.mxu0 0
    %622 = vmatpush1.bf16.msra.mxu0 0
    %623 = vmatprep.subr.bf16.mxu0 0
    %624 = vmatpush1.bf16.msra.mxu0 0
    %625 = vmatprep.subr.bf16.mxu0 0
    %626 = vmatpush1.bf16.msra.mxu0 0
    %627 = vmatprep.subr.bf16.mxu0 0
    %628 = vmatpush1.bf16.msra.mxu0 0
    %629 = vmatprep.subr.bf16.mxu0 0
    %630 = vmatpush1.bf16.msra.mxu0 0
    %631 = vmatprep.subr.bf16.mxu0 0
    %632 = vmatpush1.bf16.msra.mxu0 0
    %633 = vmatprep.subr.bf16.mxu0 0
    %634 = vmatpush1.bf16.msra.mxu0 0
    %635 = vmatprep.subr.bf16.mxu0 0
    %636 = vmatpush1.bf16.msra.mxu0 0
    %637 = vmatprep.subr.bf16.mxu0 0
    %638 = vmatpush1.bf16.msra.mxu0 0
    %639 = vmatprep.subr.bf16.mxu0 0
    %640 = vmatpush1.bf16.msra.mxu0 0
    %641 = vmatprep.subr.bf16.mxu0 0
    %642 = vmatpush1.bf16.msra.mxu0 0
    %643 = vmatprep.mubr.bf16.mxu0 0
    %644 = vmatmul.mubr.bf16.gmra.mrb[0].mxu0 %v606
    %v645 = vpop.f32.mrb[0].mxu0
    %v646 = vadd.f32 0.0, %v645
    %v647 = vpop.f32.mrb[0].mxu0
    %v648 = vpop.f32.mrb[0].mxu0
    %v649 = vpop.f32.mrb[0].mxu0
    %650 = vdwg.mxu0
    %651 = vrot.lane.b32.xlu0 %v201, 112
    %v652 = vpop.permute.xlu0 %651
    %653 = vrot.lane.b32.xlu0 %v201, 80
    %v654 = vpop.permute.xlu0 %653
    %v656 = vsel %vm206, %v652, 0
    %v659 = vsel %vm206, %v654, 0
    %661 = vmatprep.subr.bf16.mxu0 0
    %662 = vmatpush1.bf16.xpose.msra.mxu0 %v659
    %663 = vmatprep.subr.bf16.mxu0 0
    %664 = vmatpush1.bf16.xpose.msra.mxu0 0
    %665 = vmatprep.subr.bf16.mxu0 0
    %666 = vmatpush1.bf16.xpose.msra.mxu0 0
    %667 = vmatprep.subr.bf16.mxu0 0
    %668 = vmatpush1.bf16.xpose.msra.mxu0 0
    %669 = vmatprep.subr.bf16.mxu0 0
    %670 = vmatpush1.bf16.xpose.msra.mxu0 0
    %671 = vmatprep.subr.bf16.mxu0 0
    %672 = vmatpush1.bf16.xpose.msra.mxu0 0
    %673 = vmatprep.subr.bf16.mxu0 0
    %674 = vmatpush1.bf16.xpose.msra.mxu0 0
    %675 = vmatprep.subr.bf16.mxu0 0
    %676 = vmatpush1.bf16.xpose.msra.mxu0 0
    %677 = vmatprep.subr.bf16.mxu0 0
    %678 = vmatpush1.bf16.xpose.msra.mxu0 0
    %679 = vmatprep.subr.bf16.mxu0 0
    %680 = vmatpush1.bf16.xpose.msra.mxu0 0
    %681 = vmatprep.subr.bf16.mxu0 0
    %682 = vmatpush1.bf16.xpose.msra.mxu0 0
    %683 = vmatprep.subr.bf16.mxu0 0
    %684 = vmatpush1.bf16.xpose.msra.mxu0 0
    %685 = vmatprep.subr.bf16.mxu0 0
    %686 = vmatpush1.bf16.xpose.msra.mxu0 0
    %687 = vmatprep.subr.bf16.mxu0 0
    %688 = vmatpush1.bf16.xpose.msra.mxu0 0
    %689 = vmatprep.subr.bf16.mxu0 0
    %690 = vmatpush1.bf16.xpose.msra.mxu0 0
    %691 = vmatprep.subr.bf16.mxu0 0
    %692 = vmatpush1.bf16.xpose.msra.mxu0 0
    %693 = vmatprep.mubr.bf16.mxu0 0
    %694 = vmatmul.mubr.bf16.gmra.mrb[0].mxu0 %v656
    %v695 = vpop.f32.mrb[0].mxu0
    %v696 = vadd.f32 0.0, %v695
    %v697 = vpop.f32.mrb[0].mxu0
    %v698 = vpop.f32.mrb[0].mxu0
    %v699 = vpop.f32.mrb[0].mxu0
    %700 = vdwg.mxu0
    %701 = vrot.lane.b32.xlu0 %v202, 112
    %v702 = vpop.permute.xlu0 %701
    %703 = vrot.lane.b32.xlu0 %v202, 80
    %v704 = vpop.permute.xlu0 %703
    %v706 = vsel %vm206, %v702, 0
    %v709 = vsel %vm206, %v704, 0
    %711 = vmatprep.subr.bf16.mxu0 0
    %712 = vmatpush1.bf16.xpose.msra.mxu0 %v709
    %713 = vmatprep.subr.bf16.mxu0 0
    %714 = vmatpush1.bf16.xpose.msra.mxu0 0
    %715 = vmatprep.subr.bf16.mxu0 0
    %716 = vmatpush1.bf16.xpose.msra.mxu0 0
    %717 = vmatprep.subr.bf16.mxu0 0
    %718 = vmatpush1.bf16.xpose.msra.mxu0 0
    %719 = vmatprep.subr.bf16.mxu0 0
    %720 = vmatpush1.bf16.xpose.msra.mxu0 0
    %721 = vmatprep.subr.bf16.mxu0 0
    %722 = vmatpush1.bf16.xpose.msra.mxu0 0
    %723 = vmatprep.subr.bf16.mxu0 0
    %724 = vmatpush1.bf16.xpose.msra.mxu0 0
    %725 = vmatprep.subr.bf16.mxu0 0
    %726 = vmatpush1.bf16.xpose.msra.mxu0 0
    %727 = vmatprep.subr.bf16.mxu0 0
    %728 = vmatpush1.bf16.xpose.msra.mxu0 0
    %729 = vmatprep.subr.bf16.mxu0 0
    %730 = vmatpush1.bf16.xpose.msra.mxu0 0
    %731 = vmatprep.subr.bf16.mxu0 0
    %732 = vmatpush1.bf16.xpose.msra.mxu0 0
    %733 = vmatprep.subr.bf16.mxu0 0
    %734 = vmatpush1.bf16.xpose.msra.mxu0 0
    %735 = vmatprep.subr.bf16.mxu0 0
    %736 = vmatpush1.bf16.xpose.msra.mxu0 0
    %737 = vmatprep.subr.bf16.mxu0 0
    %738 = vmatpush1.bf16.xpose.msra.mxu0 0
    %739 = vmatprep.subr.bf16.mxu0 0
    %740 = vmatpush1.bf16.xpose.msra.mxu0 0
    %741 = vmatprep.subr.bf16.mxu0 0
    %742 = vmatpush1.bf16.xpose.msra.mxu0 0
    %743 = vmatprep.mubr.bf16.mxu0 0
    %744 = vmatmul.mubr.bf16.gmra.mrb[0].mxu0 %v706
    %v745 = vpop.f32.mrb[0].mxu0
    %v746 = vadd.f32 0.0, %v745
    %v747 = vpop.f32.mrb[0].mxu0
    %v748 = vpop.f32.mrb[0].mxu0
    %v749 = vpop.f32.mrb[0].mxu0
    %750 = vdwg.mxu0
    %v751 = vmul.f32 %v696, 0.35355338
    %v752 = vmul.f32 %v746, 0.35355338
    %v753 = vadd.f32 %v751, %v100
    %v754 = vadd.f32 %v752, %v104
    %v755 = vsel %vm206, %v753, -inf
    %756 = vmax.xlane.f32.xlu0 %v755
    %v757 = vpop.xlane.xlu0 %756
    %v758 = vsel %vm206, %v754, -inf
    %759 = vmax.xlane.f32.xlu0 %v758
    %v760 = vpop.xlane.xlu0 %759
    %v761 = vsub.f32 %v753, %v757
    %v762 = vsub.f32 %v754, %v760
    %v763 = vmul.f32 %v761, 1.442695
    %v764 = vpow.pop %v763
    %v765 = vmul.f32 %v762, 1.442695
    %v766 = vpow.pop %v765
    %v767 = vsel %vm206, %v764, 0.0
    %768 = vadd.xlane.f32.xlu0 %v767
    %v769 = vpop.xlane.xlu0 %768
    %v770 = vsel %vm206, %v766, 0.0
    %771 = vadd.xlane.f32.xlu0 %v770
    %v772 = vpop.xlane.xlu0 %771
    %v773 = vrcp.pop %v769
    %v774 = vrcp.pop %v772
    %v775 = vmul.f32 %v764, %v773
    %v776 = vmul.f32 %v766, %v774
    %v777 = vpack.c.bf16 %v775, %v775
    %v778 = vpack.c.bf16 %v776, %v776
    %779 = vrot.lane.b32.xlu0 %v201, 48
    %v780 = vpop.permute.xlu0 %779
    %v782 = vsel %vm206, %v777, 0
    %v785 = vsel %vm335, %v780, 0
    %787 = vmatprep.subr.bf16.mxu0 0
    %788 = vmatpush1.bf16.msra.mxu0 %v785
    %789 = vmatprep.subr.bf16.mxu0 0
    %790 = vmatpush1.bf16.msra.mxu0 0
    %791 = vmatprep.subr.bf16.mxu0 0
    %792 = vmatpush1.bf16.msra.mxu0 0
    %793 = vmatprep.subr.bf16.mxu0 0
    %794 = vmatpush1.bf16.msra.mxu0 0
    %795 = vmatprep.subr.bf16.mxu0 0
    %796 = vmatpush1.bf16.msra.mxu0 0
    %797 = vmatprep.subr.bf16.mxu0 0
    %798 = vmatpush1.bf16.msra.mxu0 0
    %799 = vmatprep.subr.bf16.mxu0 0
    %800 = vmatpush1.bf16.msra.mxu0 0
    %801 = vmatprep.subr.bf16.mxu0 0
    %802 = vmatpush1.bf16.msra.mxu0 0
    %803 = vmatprep.subr.bf16.mxu0 0
    %804 = vmatpush1.bf16.msra.mxu0 0
    %805 = vmatprep.subr.bf16.mxu0 0
    %806 = vmatpush1.bf16.msra.mxu0 0
    %807 = vmatprep.subr.bf16.mxu0 0
    %808 = vmatpush1.bf16.msra.mxu0 0
    %809 = vmatprep.subr.bf16.mxu0 0
    %810 = vmatpush1.bf16.msra.mxu0 0
    %811 = vmatprep.subr.bf16.mxu0 0
    %812 = vmatpush1.bf16.msra.mxu0 0
    %813 = vmatprep.subr.bf16.mxu0 0
    %814 = vmatpush1.bf16.msra.mxu0 0
    %815 = vmatprep.subr.bf16.mxu0 0
    %816 = vmatpush1.bf16.msra.mxu0 0
    %817 = vmatprep.subr.bf16.mxu0 0
    %818 = vmatpush1.bf16.msra.mxu0 0
    %819 = vmatprep.mubr.bf16.mxu0 0
    %820 = vmatmul.mubr.bf16.gmra.mrb[0].mxu0 %v782
    %v821 = vpop.f32.mrb[0].mxu0
    %v822 = vadd.f32 0.0, %v821
    %v823 = vpop.f32.mrb[0].mxu0
    %v824 = vpop.f32.mrb[0].mxu0
    %v825 = vpop.f32.mrb[0].mxu0
    %826 = vdwg.mxu0
    %827 = vrot.lane.b32.xlu0 %v202, 48
    %v828 = vpop.permute.xlu0 %827
    %v830 = vsel %vm206, %v778, 0
    %v833 = vsel %vm335, %v828, 0
    %835 = vmatprep.subr.bf16.mxu0 0
    %836 = vmatpush1.bf16.msra.mxu0 %v833
    %837 = vmatprep.subr.bf16.mxu0 0
    %838 = vmatpush1.bf16.msra.mxu0 0
    %839 = vmatprep.subr.bf16.mxu0 0
    %840 = vmatpush1.bf16.msra.mxu0 0
    %841 = vmatprep.subr.bf16.mxu0 0
    %842 = vmatpush1.bf16.msra.mxu0 0
    %843 = vmatprep.subr.bf16.mxu0 0
    %844 = vmatpush1.bf16.msra.mxu0 0
    %845 = vmatprep.subr.bf16.mxu0 0
    %846 = vmatpush1.bf16.msra.mxu0 0
    %847 = vmatprep.subr.bf16.mxu0 0
    %848 = vmatpush1.bf16.msra.mxu0 0
    %849 = vmatprep.subr.bf16.mxu0 0
    %850 = vmatpush1.bf16.msra.mxu0 0
    %851 = vmatprep.subr.bf16.mxu0 0
    %852 = vmatpush1.bf16.msra.mxu0 0
    %853 = vmatprep.subr.bf16.mxu0 0
    %854 = vmatpush1.bf16.msra.mxu0 0
    %855 = vmatprep.subr.bf16.mxu0 0
    %856 = vmatpush1.bf16.msra.mxu0 0
    %857 = vmatprep.subr.bf16.mxu0 0
    %858 = vmatpush1.bf16.msra.mxu0 0
    %859 = vmatprep.subr.bf16.mxu0 0
    %860 = vmatpush1.bf16.msra.mxu0 0
    %861 = vmatprep.subr.bf16.mxu0 0
    %862 = vmatpush1.bf16.msra.mxu0 0
    %863 = vmatprep.subr.bf16.mxu0 0
    %864 = vmatpush1.bf16.msra.mxu0 0
    %865 = vmatprep.subr.bf16.mxu0 0
    %866 = vmatpush1.bf16.msra.mxu0 0
    %867 = vmatprep.mubr.bf16.mxu0 0
    %868 = vmatmul.mubr.bf16.gmra.mrb[0].mxu0 %v830
    %v869 = vpop.f32.mrb[0].mxu0
    %v870 = vadd.f32 0.0, %v869
    %v871 = vpop.f32.mrb[0].mxu0
    %v872 = vpop.f32.mrb[0].mxu0
    %v873 = vpop.f32.mrb[0].mxu0
    %874 = vdwg.mxu0
    %875 = vrot.lane.b32.xlu0 %v201, 104
    %v876 = vpop.permute.xlu0 %875
    %877 = vrot.lane.b32.xlu0 %v201, 72
    %v878 = vpop.permute.xlu0 %877
    %v880 = vsel %vm206, %v876, 0
    %v883 = vsel %vm206, %v878, 0
    %885 = vmatprep.subr.bf16.mxu0 0
    %886 = vmatpush1.bf16.xpose.msra.mxu0 %v883
    %887 = vmatprep.subr.bf16.mxu0 0
    %888 = vmatpush1.bf16.xpose.msra.mxu0 0
    %889 = vmatprep.subr.bf16.mxu0 0
    %890 = vmatpush1.bf16.xpose.msra.mxu0 0
    %891 = vmatprep.subr.bf16.mxu0 0
    %892 = vmatpush1.bf16.xpose.msra.mxu0 0
    %893 = vmatprep.subr.bf16.mxu0 0
    %894 = vmatpush1.bf16.xpose.msra.mxu0 0
    %895 = vmatprep.subr.bf16.mxu0 0
    %896 = vmatpush1.bf16.xpose.msra.mxu0 0
    %897 = vmatprep.subr.bf16.mxu0 0
    %898 = vmatpush1.bf16.xpose.msra.mxu0 0
    %899 = vmatprep.subr.bf16.mxu0 0
    %900 = vmatpush1.bf16.xpose.msra.mxu0 0
    %901 = vmatprep.subr.bf16.mxu0 0
    %902 = vmatpush1.bf16.xpose.msra.mxu0 0
    %903 = vmatprep.subr.bf16.mxu0 0
    %904 = vmatpush1.bf16.xpose.msra.mxu0 0
    %905 = vmatprep.subr.bf16.mxu0 0
    %906 = vmatpush1.bf16.xpose.msra.mxu0 0
    %907 = vmatprep.subr.bf16.mxu0 0
    %908 = vmatpush1.bf16.xpose.msra.mxu0 0
    %909 = vmatprep.subr.bf16.mxu0 0
    %910 = vmatpush1.bf16.xpose.msra.mxu0 0
    %911 = vmatprep.subr.bf16.mxu0 0
    %912 = vmatpush1.bf16.xpose.msra.mxu0 0
    %913 = vmatprep.subr.bf16.mxu0 0
    %914 = vmatpush1.bf16.xpose.msra.mxu0 0
    %915 = vmatprep.subr.bf16.mxu0 0
    %916 = vmatpush1.bf16.xpose.msra.mxu0 0
    %917 = vmatprep.mubr.bf16.mxu0 0
    %918 = vmatmul.mubr.bf16.gmra.mrb[0].mxu0 %v880
    %v919 = vpop.f32.mrb[0].mxu0
    %v920 = vadd.f32 0.0, %v919
    %v921 = vpop.f32.mrb[0].mxu0
    %v922 = vpop.f32.mrb[0].mxu0
    %v923 = vpop.f32.mrb[0].mxu0
    %924 = vdwg.mxu0
    %925 = vrot.lane.b32.xlu0 %v202, 104
    %v926 = vpop.permute.xlu0 %925
    %927 = vrot.lane.b32.xlu0 %v202, 72
    %v928 = vpop.permute.xlu0 %927
    %v930 = vsel %vm206, %v926, 0
    %v933 = vsel %vm206, %v928, 0
    %935 = vmatprep.subr.bf16.mxu0 0
    %936 = vmatpush1.bf16.xpose.msra.mxu0 %v933
    %937 = vmatprep.subr.bf16.mxu0 0
    %938 = vmatpush1.bf16.xpose.msra.mxu0 0
    %939 = vmatprep.subr.bf16.mxu0 0
    %940 = vmatpush1.bf16.xpose.msra.mxu0 0
    %941 = vmatprep.subr.bf16.mxu0 0
    %942 = vmatpush1.bf16.xpose.msra.mxu0 0
    %943 = vmatprep.subr.bf16.mxu0 0
    %944 = vmatpush1.bf16.xpose.msra.mxu0 0
    %945 = vmatprep.subr.bf16.mxu0 0
    %946 = vmatpush1.bf16.xpose.msra.mxu0 0
    %947 = vmatprep.subr.bf16.mxu0 0
    %948 = vmatpush1.bf16.xpose.msra.mxu0 0
    %949 = vmatprep.subr.bf16.mxu0 0
    %950 = vmatpush1.bf16.xpose.msra.mxu0 0
    %951 = vmatprep.subr.bf16.mxu0 0
    %952 = vmatpush1.bf16.xpose.msra.mxu0 0
    %953 = vmatprep.subr.bf16.mxu0 0
    %954 = vmatpush1.bf16.xpose.msra.mxu0 0
    %955 = vmatprep.subr.bf16.mxu0 0
    %956 = vmatpush1.bf16.xpose.msra.mxu0 0
    %957 = vmatprep.subr.bf16.mxu0 0
    %958 = vmatpush1.bf16.xpose.msra.mxu0 0
    %959 = vmatprep.subr.bf16.mxu0 0
    %960 = vmatpush1.bf16.xpose.msra.mxu0 0
    %961 = vmatprep.subr.bf16.mxu0 0
    %962 = vmatpush1.bf16.xpose.msra.mxu0 0
    %963 = vmatprep.subr.bf16.mxu0 0
    %964 = vmatpush1.bf16.xpose.msra.mxu0 0
    %965 = vmatprep.subr.bf16.mxu0 0
    %966 = vmatpush1.bf16.xpose.msra.mxu0 0
    %967 = vmatprep.mubr.bf16.mxu0 0
    %968 = vmatmul.mubr.bf16.gmra.mrb[0].mxu0 %v930
    %v969 = vpop.f32.mrb[0].mxu0
    %v970 = vadd.f32 0.0, %v969
    %v971 = vpop.f32.mrb[0].mxu0
    %v972 = vpop.f32.mrb[0].mxu0
    %v973 = vpop.f32.mrb[0].mxu0
    %974 = vdwg.mxu0
    %v975 = vmul.f32 %v920, 0.35355338
    %v976 = vmul.f32 %v970, 0.35355338
    %v977 = vadd.f32 %v975, %v100
    %v978 = vadd.f32 %v976, %v104
    %v979 = vsel %vm206, %v977, -inf
    %980 = vmax.xlane.f32.xlu0 %v979
    %v981 = vpop.xlane.xlu0 %980
    %v982 = vsel %vm206, %v978, -inf
    %983 = vmax.xlane.f32.xlu0 %v982
    %v984 = vpop.xlane.xlu0 %983
    %v985 = vsub.f32 %v977, %v981
    %v986 = vsub.f32 %v978, %v984
    %v987 = vmul.f32 %v985, 1.442695
    %v988 = vpow.pop %v987
    %v989 = vmul.f32 %v986, 1.442695
    %v990 = vpow.pop %v989
    %v991 = vsel %vm206, %v988, 0.0
    %992 = vadd.xlane.f32.xlu0 %v991
    %v993 = vpop.xlane.xlu0 %992
    %v994 = vsel %vm206, %v990, 0.0
    %995 = vadd.xlane.f32.xlu0 %v994
    %v996 = vpop.xlane.xlu0 %995
    %v997 = vrcp.pop %v993
    %v998 = vrcp.pop %v996
    %v999 = vmul.f32 %v988, %v997
    %v1000 = vmul.f32 %v990, %v998
    %v1001 = vpack.c.bf16 %v999, %v999
    %v1002 = vpack.c.bf16 %v1000, %v1000
    %1003 = vrot.lane.b32.xlu0 %v201, 40
    %v1004 = vpop.permute.xlu0 %1003
    %v1006 = vsel %vm206, %v1001, 0
    %v1009 = vsel %vm335, %v1004, 0
    %1011 = vmatprep.subr.bf16.mxu0 0
    %1012 = vmatpush1.bf16.msra.mxu0 %v1009
    %1013 = vmatprep.subr.bf16.mxu0 0
    %1014 = vmatpush1.bf16.msra.mxu0 0
    %1015 = vmatprep.subr.bf16.mxu0 0
    %1016 = vmatpush1.bf16.msra.mxu0 0
    %1017 = vmatprep.subr.bf16.mxu0 0
    %1018 = vmatpush1.bf16.msra.mxu0 0
    %1019 = vmatprep.subr.bf16.mxu0 0
    %1020 = vmatpush1.bf16.msra.mxu0 0
    %1021 = vmatprep.subr.bf16.mxu0 0
    %1022 = vmatpush1.bf16.msra.mxu0 0
    %1023 = vmatprep.subr.bf16.mxu0 0
    %1024 = vmatpush1.bf16.msra.mxu0 0
    %1025 = vmatprep.subr.bf16.mxu0 0
    %1026 = vmatpush1.bf16.msra.mxu0 0
    %1027 = vmatprep.subr.bf16.mxu0 0
    %1028 = vmatpush1.bf16.msra.mxu0 0
    %1029 = vmatprep.subr.bf16.mxu0 0
    %1030 = vmatpush1.bf16.msra.mxu0 0
    %1031 = vmatprep.subr.bf16.mxu0 0
    %1032 = vmatpush1.bf16.msra.mxu0 0
    %1033 = vmatprep.subr.bf16.mxu0 0
    %1034 = vmatpush1.bf16.msra.mxu0 0
    %1035 = vmatprep.subr.bf16.mxu0 0
    %1036 = vmatpush1.bf16.msra.mxu0 0
    %1037 = vmatprep.subr.bf16.mxu0 0
    %1038 = vmatpush1.bf16.msra.mxu0 0
    %1039 = vmatprep.subr.bf16.mxu0 0
    %1040 = vmatpush1.bf16.msra.mxu0 0
    %1041 = vmatprep.subr.bf16.mxu0 0
    %1042 = vmatpush1.bf16.msra.mxu0 0
    %1043 = vmatprep.mubr.bf16.mxu0 0
    %1044 = vmatmul.mubr.bf16.gmra.mrb[0].mxu0 %v1006
    %v1045 = vpop.f32.mrb[0].mxu0
    %v1046 = vadd.f32 0.0, %v1045
    %v1047 = vpop.f32.mrb[0].mxu0
    %v1048 = vpop.f32.mrb[0].mxu0
    %v1049 = vpop.f32.mrb[0].mxu0
    %1050 = vdwg.mxu0
    %1051 = vrot.lane.b32.xlu0 %v202, 40
    %v1052 = vpop.permute.xlu0 %1051
    %v1054 = vsel %vm206, %v1002, 0
    %v1057 = vsel %vm335, %v1052, 0
    %1059 = vmatprep.subr.bf16.mxu0 0
    %1060 = vmatpush1.bf16.msra.mxu0 %v1057
    %1061 = vmatprep.subr.bf16.mxu0 0
    %1062 = vmatpush1.bf16.msra.mxu0 0
    %1063 = vmatprep.subr.bf16.mxu0 0
    %1064 = vmatpush1.bf16.msra.mxu0 0
    %1065 = vmatprep.subr.bf16.mxu0 0
    %1066 = vmatpush1.bf16.msra.mxu0 0
    %1067 = vmatprep.subr.bf16.mxu0 0
    %1068 = vmatpush1.bf16.msra.mxu0 0
    %1069 = vmatprep.subr.bf16.mxu0 0
    %1070 = vmatpush1.bf16.msra.mxu0 0
    %1071 = vmatprep.subr.bf16.mxu0 0
    %1072 = vmatpush1.bf16.msra.mxu0 0
    %1073 = vmatprep.subr.bf16.mxu0 0
    %1074 = vmatpush1.bf16.msra.mxu0 0
    %1075 = vmatprep.subr.bf16.mxu0 0
    %1076 = vmatpush1.bf16.msra.mxu0 0
    %1077 = vmatprep.subr.bf16.mxu0 0
    %1078 = vmatpush1.bf16.msra.mxu0 0
    %1079 = vmatprep.subr.bf16.mxu0 0
    %1080 = vmatpush1.bf16.msra.mxu0 0
    %1081 = vmatprep.subr.bf16.mxu0 0
    %1082 = vmatpush1.bf16.msra.mxu0 0
    %1083 = vmatprep.subr.bf16.mxu0 0
    %1084 = vmatpush1.bf16.msra.mxu0 0
    %1085 = vmatprep.subr.bf16.mxu0 0
    %1086 = vmatpush1.bf16.msra.mxu0 0
    %1087 = vmatprep.subr.bf16.mxu0 0
    %1088 = vmatpush1.bf16.msra.mxu0 0
    %1089 = vmatprep.subr.bf16.mxu0 0
    %1090 = vmatpush1.bf16.msra.mxu0 0
    %1091 = vmatprep.mubr.bf16.mxu0 0
    %1092 = vmatmul.mubr.bf16.gmra.mrb[0].mxu0 %v1054
    %v1093 = vpop.f32.mrb[0].mxu0
    %v1094 = vadd.f32 0.0, %v1093
    %v1095 = vpop.f32.mrb[0].mxu0
    %v1096 = vpop.f32.mrb[0].mxu0
    %v1097 = vpop.f32.mrb[0].mxu0
    %1098 = vdwg.mxu0
    %1101 = vrot.lane.b32.xlu0 %v598, 8
    %v1102 = vpop.permute.xlu0 %1101
    %1103 = vrot.lane.b32.xlu0 %v646, 8
    %v1104 = vpop.permute.xlu0 %1103
    %1109 = vrot.lane.b32.xlu0 %v822, 16
    %v1110 = vpop.permute.xlu0 %1109
    %1111 = vrot.lane.b32.xlu0 %v870, 16
    %v1112 = vpop.permute.xlu0 %1111
    %1117 = vrot.lane.b32.xlu0 %v1046, 24
    %v1118 = vpop.permute.xlu0 %1117
    %1119 = vrot.lane.b32.xlu0 %v1094, 24
    %v1120 = vpop.permute.xlu0 %1119
    %v1123 = vsel %vm206, %v374, %v1102
    %v1124 = vsel %vm206, %v422, %v1104
    %vm1125 = vcmask 130048
    %v1126 = vsel %vm1125, %v1123, %v1110
    %v1127 = vsel %vm1125, %v1124, %v1112
    %vm1128 = vcmask 195584
    %v1129 = vsel %vm1128, %v1126, %v1118
    %v1130 = vsel %vm1128, %v1127, %v1120
    %v1131 = vpack.c.bf16 %v1130, %v1129
    %v1133 = vlaneseq
    %v1134 = vshrl.u32 %v1133, 7
    %v1135 = vsub.s32 0, %v1134
    %v1136 = vrot.slane %v118, %v1135
    %v1142 = vunpack.c.l.b16 %v114
    %v1143 = vunpack.c.l.b16 %v115
    %v1144 = vunpack.c.l.b16 %v116
    %v1145 = vunpack.c.l.b16 %v117
    %v1146 = vpack.c.b16 %v1143, %v1142
    %v1147 = vpack.c.b16 %v1145, %v1144
    %v1151 = vsel %vm156, %v1131, 0
    %1153 = vmatprep.subr.bf16.mxu0 0
    %1154 = vmatpush1.bf16.msra.mxu0 %v1146
    %1155 = vmatprep.subr.bf16.mxu0 0
    %1156 = vmatpush1.bf16.msra.mxu0 %v1147
    %1157 = vmatprep.subr.bf16.mxu0 0
    %1158 = vmatpush1.bf16.msra.mxu0 0
    %1159 = vmatprep.subr.bf16.mxu0 0
    %1160 = vmatpush1.bf16.msra.mxu0 0
    %1161 = vmatprep.subr.bf16.mxu0 0
    %1162 = vmatpush1.bf16.msra.mxu0 0
    %1163 = vmatprep.subr.bf16.mxu0 0
    %1164 = vmatpush1.bf16.msra.mxu0 0
    %1165 = vmatprep.subr.bf16.mxu0 0
    %1166 = vmatpush1.bf16.msra.mxu0 0
    %1167 = vmatprep.subr.bf16.mxu0 0
    %1168 = vmatpush1.bf16.msra.mxu0 0
    %1169 = vmatprep.subr.bf16.mxu0 0
    %1170 = vmatpush1.bf16.msra.mxu0 0
    %1171 = vmatprep.subr.bf16.mxu0 0
    %1172 = vmatpush1.bf16.msra.mxu0 0
    %1173 = vmatprep.subr.bf16.mxu0 0
    %1174 = vmatpush1.bf16.msra.mxu0 0
    %1175 = vmatprep.subr.bf16.mxu0 0
    %1176 = vmatpush1.bf16.msra.mxu0 0
    %1177 = vmatprep.subr.bf16.mxu0 0
    %1178 = vmatpush1.bf16.msra.mxu0 0
    %1179 = vmatprep.subr.bf16.mxu0 0
    %1180 = vmatpush1.bf16.msra.mxu0 0
    %1181 = vmatprep.subr.bf16.mxu0 0
    %1182 = vmatpush1.bf16.msra.mxu0 0
    %1183 = vmatprep.subr.bf16.mxu0 0
    %1184 = vmatpush1.bf16.msra.mxu0 0
    %1185 = vmatprep.mubr.bf16.mxu0 0
    %1186 = vmatmul.mubr.bf16.gmra.mrb[0].mxu0 %v1151
    %v1187 = vpop.f32.mrb[0].mxu0
    %v1188 = vadd.f32 %v1136, %v1187
    %v1189 = vpop.f32.mrb[0].mxu0
    %v1190 = vpop.f32.mrb[0].mxu0
    %v1191 = vadd.f32 %v1136, %v1190
    %v1192 = vpop.f32.mrb[0].mxu0
    %1193 = vdwg.mxu0
    %v1194 = vadd.f32 %v1188, %v107
    %v1195 = vadd.f32 %v1191, %v108
    %v1196 = vsel %vm156, %v1194, 0.0
    %1197 = vadd.xlane.f32.xlu0 %v1196
    %v1198 = vpop.xlane.xlu0 %1197
    %v1199 = vsel %vm156, %v1195, 0.0
    %1200 = vadd.xlane.f32.xlu0 %v1199
    %v1201 = vpop.xlane.xlu0 %1200
    %v1202 = vrcp.pop 32.0
    %v1203 = vmul.f32 %v1198, %v1202
    %v1204 = vmul.f32 %v1201, %v1202
    %v1205 = vsub.f32 %v1194, %v1203
    %v1206 = vsub.f32 %v1195, %v1204
    %v1207 = vmul.f32 %v1205, %v1205
    %v1208 = vmul.f32 %v1206, %v1206
    %v1209 = vsel %vm156, %v1207, 0.0
    %1210 = vadd.xlane.f32.xlu0 %v1209
    %v1211 = vpop.xlane.xlu0 %1210
    %v1212 = vsel %vm156, %v1208, 0.0
    %1213 = vadd.xlane.f32.xlu0 %v1212
    %v1214 = vpop.xlane.xlu0 %1213
    %v1215 = vmul.f32 %v1211, %v1202
    %v1216 = vmul.f32 %v1214, %v1202
    %v1217 = vadd.f32 %v1215, 1e-05
    %v1218 = vadd.f32 %v1216, 1e-05
    %v1219 = vrsqrt.pop %v1217
    %v1220 = vrsqrt.pop %v1218
    %v1221 = vmul.f32 %v1205, %v1219
    %v1222 = vmul.f32 %v1206, %v1220
    %v1224 = vlaneseq
    %v1225 = vshrl.u32 %v1224, 7
    %v1226 = vsub.s32 0, %v1225
    %v1227 = vrot.slane %v119, %v1226
    %v1229 = vmul.f32 %v1221, %v1227
    %v1230 = vmul.f32 %v1222, %v1227
    %v1232 = vlaneseq
    %v1233 = vshrl.u32 %v1232, 7
    %v1234 = vsub.s32 0, %v1233
    %v1235 = vrot.slane %v120, %v1234
    %v1237 = vadd.f32 %v1229, %v1235
    %v1238 = vadd.f32 %v1230, %v1235
    %v1239 = vpack.c.bf16 %v1238, %v1237
    %v1241 = vlaneseq
    %v1242 = vshrl.u32 %v1241, 7
    %v1243 = vsub.s32 0, %v1242
    %v1244 = vrot.slane %v125, %v1243
    %v1250 = vunpack.c.l.b16 %v121
    %v1251 = vunpack.c.l.b16 %v122
    %v1252 = vunpack.c.l.b16 %v123
    %v1253 = vunpack.c.l.b16 %v124
    %v1254 = vpack.c.b16 %v1251, %v1250
    %v1255 = vpack.c.b16 %v1253, %v1252
    %v1259 = vsel %vm156, %v1239, 0
    %1261 = vmatprep.subr.bf16.mxu0 0
    %1262 = vmatpush1.bf16.msra.mxu0 %v1254
    %1263 = vmatprep.subr.bf16.mxu0 0
    %1264 = vmatpush1.bf16.msra.mxu0 %v1255
    %1265 = vmatprep.subr.bf16.mxu0 0
    %1266 = vmatpush1.bf16.msra.mxu0 0
    %1267 = vmatprep.subr.bf16.mxu0 0
    %1268 = vmatpush1.bf16.msra.mxu0 0
    %1269 = vmatprep.subr.bf16.mxu0 0
    %1270 = vmatpush1.bf16.msra.mxu0 0
    %1271 = vmatprep.subr.bf16.mxu0 0
    %1272 = vmatpush1.bf16.msra.mxu0 0
    %1273 = vmatprep.subr.bf16.mxu0 0
    %1274 = vmatpush1.bf16.msra.mxu0 0
    %1275 = vmatprep.subr.bf16.mxu0 0
    %1276 = vmatpush1.bf16.msra.mxu0 0
    %1277 = vmatprep.subr.bf16.mxu0 0
    %1278 = vmatpush1.bf16.msra.mxu0 0
    %1279 = vmatprep.subr.bf16.mxu0 0
    %1280 = vmatpush1.bf16.msra.mxu0 0
    %1281 = vmatprep.subr.bf16.mxu0 0
    %1282 = vmatpush1.bf16.msra.mxu0 0
    %1283 = vmatprep.subr.bf16.mxu0 0
    %1284 = vmatpush1.bf16.msra.mxu0 0
    %1285 = vmatprep.subr.bf16.mxu0 0
    %1286 = vmatpush1.bf16.msra.mxu0 0
    %1287 = vmatprep.subr.bf16.mxu0 0
    %1288 = vmatpush1.bf16.msra.mxu0 0
    %1289 = vmatprep.subr.bf16.mxu0 0
    %1290 = vmatpush1.bf16.msra.mxu0 0
    %1291 = vmatprep.subr.bf16.mxu0 0
    %1292 = vmatpush1.bf16.msra.mxu0 0
    %1293 = vmatprep.mubr.bf16.mxu0 0
    %1294 = vmatmul.mubr.bf16.gmra.mrb[0].mxu0 %v1259
    %v1295 = vpop.f32.mrb[0].mxu0
    %v1296 = vadd.f32 %v1244, %v1295
    %v1297 = vpop.f32.mrb[0].mxu0
    %v1298 = vpop.f32.mrb[0].mxu0
    %v1299 = vadd.f32 %v1244, %v1298
    %v1300 = vpop.f32.mrb[0].mxu0
    %1301 = vdwg.mxu0
    %v1302 = vmul.f32 %v1296, 0.5
    %v1303 = vmul.f32 %v1299, 0.5
    %v1304 = vmul.f32 %v1296, 0.70710677
    %v1305 = vmul.f32 %v1299, 0.70710677
    %v1306 = verf.f32.pop %v1304
    %v1307 = verf.f32.pop %v1305
    %v1308 = vadd.f32 %v1306, 1.0
    %v1309 = vadd.f32 %v1307, 1.0
    %v1310 = vmul.f32 %v1302, %v1308
    %v1311 = vmul.f32 %v1303, %v1309
    %v1312 = vpack.c.bf16 %v1311, %v1310
    %v1314 = vlaneseq
    %v1315 = vshrl.u32 %v1314, 7
    %v1316 = vsub.s32 0, %v1315
    %v1317 = vrot.slane %v134, %v1316
    %v1327 = vunpack.c.l.b16 %v126
    %v1328 = vunpack.c.l.b16 %v127
    %v1329 = vunpack.c.l.b16 %v128
    %v1330 = vunpack.c.l.b16 %v129
    %v1331 = vunpack.c.l.b16 %v130
    %v1332 = vunpack.c.l.b16 %v131
    %v1333 = vunpack.c.l.b16 %v132
    %v1334 = vunpack.c.l.b16 %v133
    %v1335 = vpack.c.b16 %v1328, %v1327
    %v1336 = vpack.c.b16 %v1330, %v1329
    %v1337 = vpack.c.b16 %v1332, %v1331
    %v1338 = vpack.c.b16 %v1334, %v1333
    %vm1343 = vcmask 523264
    %v1345 = vsel %vm1343, %v1312, 0
    %1347 = vmatprep.subr.bf16.mxu0 0
    %1348 = vmatpush1.bf16.msra.mxu0 %v1335
    %1349 = vmatprep.subr.bf16.mxu0 0
    %1350 = vmatpush1.bf16.msra.mxu0 %v1336
    %1351 = vmatprep.subr.bf16.mxu0 0
    %1352 = vmatpush1.bf16.msra.mxu0 %v1337
    %1353 = vmatprep.subr.bf16.mxu0 0
    %1354 = vmatpush1.bf16.msra.mxu0 %v1338
    %1355 = vmatprep.subr.bf16.mxu0 0
    %1356 = vmatpush1.bf16.msra.mxu0 0
    %1357 = vmatprep.subr.bf16.mxu0 0
    %1358 = vmatpush1.bf16.msra.mxu0 0
    %1359 = vmatprep.subr.bf16.mxu0 0
    %1360 = vmatpush1.bf16.msra.mxu0 0
    %1361 = vmatprep.subr.bf16.mxu0 0
    %1362 = vmatpush1.bf16.msra.mxu0 0
    %1363 = vmatprep.subr.bf16.mxu0 0
    %1364 = vmatpush1.bf16.msra.mxu0 0
    %1365 = vmatprep.subr.bf16.mxu0 0
    %1366 = vmatpush1.bf16.msra.mxu0 0
    %1367 = vmatprep.subr.bf16.mxu0 0
    %1368 = vmatpush1.bf16.msra.mxu0 0
    %1369 = vmatprep.subr.bf16.mxu0 0
    %1370 = vmatpush1.bf16.msra.mxu0 0
    %1371 = vmatprep.subr.bf16.mxu0 0
    %1372 = vmatpush1.bf16.msra.mxu0 0
    %1373 = vmatprep.subr.bf16.mxu0 0
    %1374 = vmatpush1.bf16.msra.mxu0 0
    %1375 = vmatprep.subr.bf16.mxu0 0
    %1376 = vmatpush1.bf16.msra.mxu0 0
    %1377 = vmatprep.subr.bf16.mxu0 0
    %1378 = vmatpush1.bf16.msra.mxu0 0
    %1379 = vmatprep.mubr.bf16.mxu0 0
    %1380 = vmatmul.mubr.bf16.gmra.mrb[0].mxu0 %v1345
    %v1381 = vpop.f32.mrb[0].mxu0
    %v1382 = vadd.f32 %v1317, %v1381
    %v1383 = vpop.f32.mrb[0].mxu0
    %v1384 = vpop.f32.mrb[0].mxu0
    %v1385 = vadd.f32 %v1317, %v1384
    %v1386 = vpop.f32.mrb[0].mxu0
    %1387 = vdwg.mxu0
    %v1388 = vadd.f32 %v1382, %v1237
    %v1389 = vadd.f32 %v1385, %v1238
    %v1390 = vsel %vm156, %v1388, 0.0
    %1391 = vadd.xlane.f32.xlu0 %v1390
    %v1392 = vpop.xlane.xlu0 %1391
    %v1393 = vsel %vm156, %v1389, 0.0
    %1394 = vadd.xlane.f32.xlu0 %v1393
    %v1395 = vpop.xlane.xlu0 %1394
    %v1396 = vmul.f32 %v1392, %v1202
    %v1397 = vmul.f32 %v1395, %v1202
    %v1398 = vsub.f32 %v1388, %v1396
    %v1399 = vsub.f32 %v1389, %v1397
    %v1400 = vmul.f32 %v1398, %v1398
    %v1401 = vmul.f32 %v1399, %v1399
    %v1402 = vsel %vm156, %v1400, 0.0
    %1403 = vadd.xlane.f32.xlu0 %v1402
    %v1404 = vpop.xlane.xlu0 %1403
    %v1405 = vsel %vm156, %v1401, 0.0
    %1406 = vadd.xlane.f32.xlu0 %v1405
    %v1407 = vpop.xlane.xlu0 %1406
    %v1408 = vmul.f32 %v1404, %v1202
    %v1409 = vmul.f32 %v1407, %v1202
    %v1410 = vadd.f32 %v1408, 1e-05
    %v1411 = vadd.f32 %v1409, 1e-05
    %v1412 = vrsqrt.pop %v1410
    %v1413 = vrsqrt.pop %v1411
    %v1414 = vmul.f32 %v1398, %v1412
    %v1415 = vmul.f32 %v1399, %v1413
    %v1417 = vlaneseq
    %v1418 = vshrl.u32 %v1417, 7
    %v1419 = vsub.s32 0, %v1418
    %v1420 = vrot.slane %v135, %v1419
    %v1422 = vmul.f32 %v1414, %v1420
    %v1423 = vmul.f32 %v1415, %v1420
    %v1425 = vlaneseq
    %v1426 = vshrl.u32 %v1425, 7
    %v1427 = vsub.s32 0, %v1426
    %v1428 = vrot.slane %v136, %v1427
    %v1430 = vadd.f32 %v1422, %v1428
    %v1431 = vadd.f32 %v1423, %v1428
    %v1432 = vpack.c.bf16 %v1431, %v1430
    %v1433 = vld [vmem:[%s14] sm:$0xf]
    %v1434 = vld [vmem:[%s14 + $0x4] sm:$0xf]
    %v1435 = vld [vmem:[%s14 + $0x8] sm:$0xf]
    %v1436 = vld [vmem:[%s14 + $0xc] sm:$0xf]
    %v1437 = vld [vmem:[%s15] sm:$0x1]
    %v1439 = vlaneseq
    %v1440 = vshrl.u32 %v1439, 7
    %v1441 = vsub.s32 0, %v1440
    %v1442 = vrot.slane %v1437, %v1441
    %v1448 = vunpack.c.l.b16 %v1433
    %v1449 = vunpack.c.l.b16 %v1434
    %v1450 = vunpack.c.l.b16 %v1435
    %v1451 = vunpack.c.l.b16 %v1436
    %v1452 = vpack.c.b16 %v1449, %v1448
    %v1453 = vpack.c.b16 %v1451, %v1450
    %v1457 = vsel %vm156, %v1432, 0
    %1459 = vmatprep.subr.bf16.mxu0 0
    %1460 = vmatpush1.bf16.msra.mxu0 %v1452
    %1461 = vmatprep.subr.bf16.mxu0 0
    %1462 = vmatpush1.bf16.msra.mxu0 %v1453
    %1463 = vmatprep.subr.bf16.mxu0 0
    %1464 = vmatpush1.bf16.msra.mxu0 0
    %1465 = vmatprep.subr.bf16.mxu0 0
    %1466 = vmatpush1.bf16.msra.mxu0 0
    %1467 = vmatprep.subr.bf16.mxu0 0
    %1468 = vmatpush1.bf16.msra.mxu0 0
    %1469 = vmatprep.subr.bf16.mxu0 0
    %1470 = vmatpush1.bf16.msra.mxu0 0
    %1471 = vmatprep.subr.bf16.mxu0 0
    %1472 = vmatpush1.bf16.msra.mxu0 0
    %1473 = vmatprep.subr.bf16.mxu0 0
    %1474 = vmatpush1.bf16.msra.mxu0 0
    %1475 = vmatprep.subr.bf16.mxu0 0
    %1476 = vmatpush1.bf16.msra.mxu0 0
    %1477 = vmatprep.subr.bf16.mxu0 0
    %1478 = vmatpush1.bf16.msra.mxu0 0
    %1479 = vmatprep.subr.bf16.mxu0 0
    %1480 = vmatpush1.bf16.msra.mxu0 0
    %1481 = vmatprep.subr.bf16.mxu0 0
    %1482 = vmatpush1.bf16.msra.mxu0 0
    %1483 = vmatprep.subr.bf16.mxu0 0
    %1484 = vmatpush1.bf16.msra.mxu0 0
    %1485 = vmatprep.subr.bf16.mxu0 0
    %1486 = vmatpush1.bf16.msra.mxu0 0
    %1487 = vmatprep.subr.bf16.mxu0 0
    %1488 = vmatpush1.bf16.msra.mxu0 0
    %1489 = vmatprep.subr.bf16.mxu0 0
    %1490 = vmatpush1.bf16.msra.mxu0 0
    %1491 = vmatprep.mubr.bf16.mxu0 0
    %1492 = vmatmul.mubr.bf16.gmra.mrb[0].mxu0 %v1457
    %v1493 = vpop.f32.mrb[0].mxu0
    %v1494 = vadd.f32 %v1442, %v1493
    %v1495 = vpop.f32.mrb[0].mxu0
    %v1496 = vpop.f32.mrb[0].mxu0
    %v1497 = vadd.f32 %v1442, %v1496
    %v1498 = vpop.f32.mrb[0].mxu0
    %1499 = vdwg.mxu0
    %v1500 = vpack.c.bf16 %v1497, %v1494
    %v1501 = vld [vmem:[%s16] sm:$0xf]
    %v1502 = vld [vmem:[%s16 + $0x4] sm:$0xf]
    %v1503 = vld [vmem:[%s17] sm:$0x1]
    %v1505 = vlaneseq
    %v1506 = vshrl.u32 %v1505, 7
    %v1507 = vsub.s32 0, %v1506
    %v1508 = vrot.slane %v1503, %v1507
    %v1512 = vunpack.c.l.b16 %v1501
    %v1513 = vunpack.c.l.b16 %v1502
    %v1514 = vpack.c.b16 %v1513, %v1512
    %v1517 = vsel %vm1125, %v1500, 0
    %1519 = vmatprep.subr.bf16.mxu0 0
    %1520 = vmatpush1.bf16.msra.mxu0 %v1514
    %1521 = vmatprep.subr.bf16.mxu0 0
    %1522 = vmatpush1.bf16.msra.mxu0 0
    %1523 = vmatprep.subr.bf16.mxu0 0
    %1524 = vmatpush1.bf16.msra.mxu0 0
    %1525 = vmatprep.subr.bf16.mxu0 0
    %1526 = vmatpush1.bf16.msra.mxu0 0
    %1527 = vmatprep.subr.bf16.mxu0 0
    %1528 = vmatpush1.bf16.msra.mxu0 0
    %1529 = vmatprep.subr.bf16.mxu0 0
    %1530 = vmatpush1.bf16.msra.mxu0 0
    %1531 = vmatprep.subr.bf16.mxu0 0
    %1532 = vmatpush1.bf16.msra.mxu0 0
    %1533 = vmatprep.subr.bf16.mxu0 0
    %1534 = vmatpush1.bf16.msra.mxu0 0
    %1535 = vmatprep.subr.bf16.mxu0 0
    %1536 = vmatpush1.bf16.msra.mxu0 0
    %1537 = vmatprep.subr.bf16.mxu0 0
    %1538 = vmatpush1.bf16.msra.mxu0 0
    %1539 = vmatprep.subr.bf16.mxu0 0
    %1540 = vmatpush1.bf16.msra.mxu0 0
    %1541 = vmatprep.subr.bf16.mxu0 0
    %1542 = vmatpush1.bf16.msra.mxu0 0
    %1543 = vmatprep.subr.bf16.mxu0 0
    %1544 = vmatpush1.bf16.msra.mxu0 0
    %1545 = vmatprep.subr.bf16.mxu0 0
    %1546 = vmatpush1.bf16.msra.mxu0 0
    %1547 = vmatprep.subr.bf16.mxu0 0
    %1548 = vmatpush1.bf16.msra.mxu0 0
    %1549 = vmatprep.subr.bf16.mxu0 0
    %1550 = vmatpush1.bf16.msra.mxu0 0
    %1551 = vmatprep.mubr.bf16.mxu0 0
    %1552 = vmatmul.mubr.bf16.gmra.mrb[0].mxu0 %v1517
    %v1553 = vpop.f32.mrb[0].mxu0
    %v1554 = vadd.f32 %v1508, %v1553
    %v1555 = vpop.f32.mrb[0].mxu0
    %v1556 = vpop.f32.mrb[0].mxu0
    %v1557 = vadd.f32 %v1508, %v1556
    %v1558 = vpop.f32.mrb[0].mxu0
    %1559 = vdwg.mxu0
    %v1560 = vpack.c.bf16 %v1554, %v1554
    %v1561 = vpack.c.bf16 %v1557, %v1557
    %v1562 = vld [vmem:[%s18] sm:$0xf]
    %v1563 = vld [vmem:[%s18 + $0x4] sm:$0xf]
    %v1564 = vld [vmem:[%s18 + $0x8] sm:$0xf]
    %v1565 = vld [vmem:[%s18 + $0xc] sm:$0xf]
    %v1566 = vld [vmem:[%s19] sm:$0x1]
    %v1568 = vlaneseq
    %v1569 = vshrl.u32 %v1568, 7
    %v1570 = vsub.s32 0, %v1569
    %v1571 = vrot.slane %v1566, %v1570
    %v1575 = vunpack.c.l.b16 %v1560
    %v1576 = vunpack.c.l.b16 %v1561
    %v1577 = vrot.slane %v1576, 7
    %vm1578 = vcmask 1041409
    %v1579 = vsel %vm1578, %v1577, %v1575
    %v1580 = vpack.c.b16 %v1579, %v1579
    %v1585 = vunpack.c.l.b16 %v1562
    %v1586 = vunpack.c.l.b16 %v1563
    %v1587 = vunpack.c.l.b16 %v1564
    %v1588 = vunpack.c.l.b16 %v1565
    %v1589 = vpack.c.b16 %v1586, %v1585
    %v1590 = vpack.c.b16 %v1588, %v1587
    %v1594 = vsel %vm156, %v1580, 0
    %1596 = vmatprep.subr.bf16.mxu0 0
    %1597 = vmatpush1.bf16.msra.mxu0 %v1589
    %1598 = vmatprep.subr.bf16.mxu0 0
    %1599 = vmatpush1.bf16.msra.mxu0 %v1590
    %1600 = vmatprep.subr.bf16.mxu0 0
    %1601 = vmatpush1.bf16.msra.mxu0 0
    %1602 = vmatprep.subr.bf16.mxu0 0
    %1603 = vmatpush1.bf16.msra.mxu0 0
    %1604 = vmatprep.subr.bf16.mxu0 0
    %1605 = vmatpush1.bf16.msra.mxu0 0
    %1606 = vmatprep.subr.bf16.mxu0 0
    %1607 = vmatpush1.bf16.msra.mxu0 0
    %1608 = vmatprep.subr.bf16.mxu0 0
    %1609 = vmatpush1.bf16.msra.mxu0 0
    %1610 = vmatprep.subr.bf16.mxu0 0
    %1611 = vmatpush1.bf16.msra.mxu0 0
    %1612 = vmatprep.subr.bf16.mxu0 0
    %1613 = vmatpush1.bf16.msra.mxu0 0
    %1614 = vmatprep.subr.bf16.mxu0 0
    %1615 = vmatpush1.bf16.msra.mxu0 0
    %1616 = vmatprep.subr.bf16.mxu0 0
    %1617 = vmatpush1.bf16.msra.mxu0 0
    %1618 = vmatprep.subr.bf16.mxu0 0
    %1619 = vmatpush1.bf16.msra.mxu0 0
    %1620 = vmatprep.subr.bf16.mxu0 0
    %1621 = vmatpush1.bf16.msra.mxu0 0
    %1622 = vmatprep.subr.bf16.mxu0 0
    %1623 = vmatpush1.bf16.msra.mxu0 0
    %1624 = vmatprep.subr.bf16.mxu0 0
    %1625 = vmatpush1.bf16.msra.mxu0 0
    %1626 = vmatprep.subr.bf16.mxu0 0
    %1627 = vmatpush1.bf16.msra.mxu0 0
    %1628 = vmatprep.mubr.bf16.mxu0 0
    %1629 = vmatmul.mubr.bf16.gmra.mrb[0].mxu0 %v1594
    %v1630 = vpop.f32.mrb[0].mxu0
    %v1631 = vadd.f32 %v1571, %v1630
    %v1632 = vpop.f32.mrb[0].mxu0
    %v1633 = vpop.f32.mrb[0].mxu0
    %v1634 = vpop.f32.mrb[0].mxu0
    %1635 = vdwg.mxu0
    %v1636 = vtanh.pop %v1631
    %v1637 = vpack.c.bf16 %v1636, %v1636
    %v1638 = vld [vmem:[%s20] sm:$0xf]
    %v1639 = vld [vmem:[%s20 + $0x4] sm:$0xf]
    %v1640 = vld [vmem:[%s20 + $0x8] sm:$0xf]
    %v1641 = vld [vmem:[%s20 + $0xc] sm:$0xf]
    %v1642 = vld [vmem:[%s21] sm:$0x1]
    %v1644 = vlaneseq
    %v1645 = vshrl.u32 %v1644, 7
    %v1646 = vsub.s32 0, %v1645
    %v1647 = vrot.slane %v1642, %v1646
    %v1653 = vunpack.c.l.b16 %v1638
    %v1654 = vunpack.c.l.b16 %v1639
    %v1655 = vunpack.c.l.b16 %v1640
    %v1656 = vunpack.c.l.b16 %v1641
    %v1657 = vpack.c.b16 %v1654, %v1653
    %v1658 = vpack.c.b16 %v1656, %v1655
    %v1662 = vsel %vm156, %v1637, 0
    %1664 = vmatprep.subr.bf16.mxu0 0
    %1665 = vmatpush1.bf16.msra.mxu0 %v1657
    %1666 = vmatprep.subr.bf16.mxu0 0
    %1667 = vmatpush1.bf16.msra.mxu0 %v1658
    %1668 = vmatprep.subr.bf16.mxu0 0
    %1669 = vmatpush1.bf16.msra.mxu0 0
    %1670 = vmatprep.subr.bf16.mxu0 0
    %1671 = vmatpush1.bf16.msra.mxu0 0
    %1672 = vmatprep.subr.bf16.mxu0 0
    %1673 = vmatpush1.bf16.msra.mxu0 0
    %1674 = vmatprep.subr.bf16.mxu0 0
    %1675 = vmatpush1.bf16.msra.mxu0 0
    %1676 = vmatprep.subr.bf16.mxu0 0
    %1677 = vmatpush1.bf16.msra.mxu0 0
    %1678 = vmatprep.subr.bf16.mxu0 0
    %1679 = vmatpush1.bf16.msra.mxu0 0
    %1680 = vmatprep.subr.bf16.mxu0 0
    %1681 = vmatpush1.bf16.msra.mxu0 0
    %1682 = vmatprep.subr.bf16.mxu0 0
    %1683 = vmatpush1.bf16.msra.mxu0 0
    %1684 = vmatprep.subr.bf16.mxu0 0
    %1685 = vmatpush1.bf16.msra.mxu0 0
    %1686 = vmatprep.subr.bf16.mxu0 0
    %1687 = vmatpush1.bf16.msra.mxu0 0
    %1688 = vmatprep.subr.bf16.mxu0 0
    %1689 = vmatpush1.bf16.msra.mxu0 0
    %1690 = vmatprep.subr.bf16.mxu0 0
    %1691 = vmatpush1.bf16.msra.mxu0 0
    %1692 = vmatprep.subr.bf16.mxu0 0
    %1693 = vmatpush1.bf16.msra.mxu0 0
    %1694 = vmatprep.subr.bf16.mxu0 0
    %1695 = vmatpush1.bf16.msra.mxu0 0
    %1696 = vmatprep.mubr.bf16.mxu0 0
    %1697 = vmatmul.mubr.bf16.gmra.mrb[0].mxu0 %v1662
    %v1698 = vpop.f32.mrb[0].mxu0
    %v1699 = vadd.f32 %v1647, %v1698
    %v1700 = vpop.f32.mrb[0].mxu0
    %v1701 = vpop.f32.mrb[0].mxu0
    %v1702 = vpop.f32.mrb[0].mxu0
    %1703 = vdwg.mxu0
    %1704 = vst [vmem:[#allocation2] sm:$0x3] %v1699
    // Predicated region
    $region90: #{robertabase_linear4_forward.5} parent=1 // pred_check
      _
    $region91: #{robertabase_linear4_forward.5} parent=1 // pred_check_branch
      %1706 = sbr.rel (0) target = $region93
    $region92: #{robertabase_linear4_forward.5} parent=1 // pred_region
      %s1708 = ssub.s32 32, 32
      %1709 = vsyncadd [#allocation3], %s1708
      %s1711 = sshll.u32 [#allocation2], 4
      %s1712 = int_to_ptr.vmem [resolvable:$true] %s1711
      %1714 = dma.vmem_to_hbm [thread:$0]  %s1712, 32, %s22, [#allocation3]
    $region93: #{robertabase_linear4_forward.5} parent=1 // pred_fallthru
      _
    // Predicated region
    $region94: #{robertabase_linear4_forward.5} parent=1 // pred_check
      _
    $region95: #{robertabase_linear4_forward.5} parent=1 // pred_check_branch
      %1716 = sbr.rel (0) target = $region97
    $region96: #{robertabase_linear4_forward.5} parent=1 // pred_region
      %1717 = dma.done [#allocation3], 32
    $region97: #{robertabase_linear4_forward.5} parent=1 // pred_fallthru
      _
    %1718 = vsyncpa [#allocation3], 1

// kernel: robertabase_linear4_forward.3
$region0: #{robertabase_linear4_forward.3}
  #allocation0 [shape = 'u32[]', space=smem, size = 0x4, offset = 0x4, fixed_abs, tag = 'smem constant byte address 0x4 - core index']
  #allocation1 [shape = 'u32[144,128]{1,0:T(1,128)}', space=vmem, size = 0x12000, scoped, tag = 'internal scratch']
  %s0 = inlined_call_operand.vmem [shape: f32[16,32], index: 0, kind: input, shape index: {}, may-alias: {0,20}]
  %s1 = inlined_call_operand.vmem [shape: f32[2,8], index: 1, kind: input, shape index: {}]
  %s2 = inlined_call_operand.vmem [shape: f32[1,32], index: 2, kind: input, shape index: {}]
  %s3 = inlined_call_operand.vmem [shape: f32[1,32], index: 3, kind: input, shape index: {}]
  %s4 = inlined_call_operand.vmem [shape: bf16[32,96], index: 4, kind: input, shape index: {}]
  %s5 = inlined_call_operand.vmem [shape: f32[1,96], index: 5, kind: input, shape index: {}]
  %s6 = inlined_call_operand.vmem [shape: bf16[32,32], index: 6, kind: input, shape index: {}]
  %s7 = inlined_call_operand.vmem [shape: f32[1,32], index: 7, kind: input, shape index: {}]
  %s8 = inlined_call_operand.vmem [shape: f32[1,32], index: 8, kind: input, shape index: {}]
  %s9 = inlined_call_operand.vmem [shape: f32[1,32], index: 9, kind: input, shape index: {}]
  %s10 = inlined_call_operand.vmem [shape: bf16[32,64], index: 10, kind: input, shape index: {}]
  %s11 = inlined_call_operand.vmem [shape: f32[1,64], index: 11, kind: input, shape index: {}]
  %s12 = inlined_call_operand.vmem [shape: bf16[64,32], index: 12, kind: input, shape index: {}]
  %s13 = inlined_call_operand.vmem [shape: f32[1,32], index: 13, kind: input, shape index: {}]
  %s14 = inlined_call_operand.vmem [shape: f32[1,32], index: 14, kind: input, shape index: {}]
  %s15 = inlined_call_operand.vmem [shape: f32[1,32], index: 15, kind: input, shape index: {}]
  %s16 = inlined_call_operand.vmem [shape: bf16[32,16], index: 16, kind: input, shape index: {}]
  %s17 = inlined_call_operand.vmem [shape: f32[1,16], index: 17, kind: input, shape index: {}]
  %s18 = inlined_call_operand.vmem [shape: bf16[16,32], index: 18, kind: input, shape index: {}]
  %s19 = inlined_call_operand.vmem [shape: f32[1,32], index: 19, kind: input, shape index: {}]
  %s20 = inlined_call_operand.vmem [shape: f32[16,32], index: 20, kind: output, shape index: {}, may-alias: {0,20}]
  %s21 = sld [smem:[#allocation0]]
  $region90: #{robertabase_linear4_forward.3} parent=0
    _
  %s23 = ssub.s32 1, %s21
  %s24 = scalar_select 0, %s23, %s21
  // Predicated region
  $region2: #{robertabase_linear4_forward.3} parent=0 // pred_check
    _
  $region3: #{robertabase_linear4_forward.3} parent=0 // pred_check_branch
    %26 = sbr.rel (0) target = $region5
  $region4: #{robertabase_linear4_forward.3} parent=0 // pred_region
    _
  $region5: #{robertabase_linear4_forward.3} parent=0 // pred_fallthru
    _
  // Predicated region
  $region6: #{robertabase_linear4_forward.3} parent=0 // pred_check
    _
  $region7: #{robertabase_linear4_forward.3} parent=0 // pred_check_branch
    %28 = sbr.rel (0) target = $region9
  $region8: #{robertabase_linear4_forward.3} parent=0 // pred_region
    _
  $region9: #{robertabase_linear4_forward.3} parent=0 // pred_fallthru
    _
  // Predicated region
  $region10: #{robertabase_linear4_forward.3} parent=0 // pred_check
    _
  $region11: #{robertabase_linear4_forward.3} parent=0 // pred_check_branch
    %30 = sbr.rel (0) target = $region13
  $region12: #{robertabase_linear4_forward.3} parent=0 // pred_region
    _
  $region13: #{robertabase_linear4_forward.3} parent=0 // pred_fallthru
    _
  // Predicated region
  $region14: #{robertabase_linear4_forward.3} parent=0 // pred_check
    _
  $region15: #{robertabase_linear4_forward.3} parent=0 // pred_check_branch
    %32 = sbr.rel (0) target = $region17
  $region16: #{robertabase_linear4_forward.3} parent=0 // pred_region
    _
  $region17: #{robertabase_linear4_forward.3} parent=0 // pred_fallthru
    _
  // Predicated region
  $region18: #{robertabase_linear4_forward.3} parent=0 // pred_check
    _
  $region19: #{robertabase_linear4_forward.3} parent=0 // pred_check_branch
    %34 = sbr.rel (0) target = $region21
  $region20: #{robertabase_linear4_forward.3} parent=0 // pred_region
    _
  $region21: #{robertabase_linear4_forward.3} parent=0 // pred_fallthru
    _
  // Predicated region
  $region22: #{robertabase_linear4_forward.3} parent=0 // pred_check
    _
  $region23: #{robertabase_linear4_forward.3} parent=0 // pred_check_branch
    %36 = sbr.rel (0) target = $region25
  $region24: #{robertabase_linear4_forward.3} parent=0 // pred_region
    _
  $region25: #{robertabase_linear4_forward.3} parent=0 // pred_fallthru
    _
  // Predicated region
  $region26: #{robertabase_linear4_forward.3} parent=0 // pred_check
    _
  $region27: #{robertabase_linear4_forward.3} parent=0 // pred_check_branch
    %38 = sbr.rel (0) target = $region29
  $region28: #{robertabase_linear4_forward.3} parent=0 // pred_region
    _
  $region29: #{robertabase_linear4_forward.3} parent=0 // pred_fallthru
    _
  // Predicated region
  $region30: #{robertabase_linear4_forward.3} parent=0 // pred_check
    _
  $region31: #{robertabase_linear4_forward.3} parent=0 // pred_check_branch
    %40 = sbr.rel (0) target = $region33
  $region32: #{robertabase_linear4_forward.3} parent=0 // pred_region
    _
  $region33: #{robertabase_linear4_forward.3} parent=0 // pred_fallthru
    _
  // Predicated region
  $region34: #{robertabase_linear4_forward.3} parent=0 // pred_check
    _
  $region35: #{robertabase_linear4_forward.3} parent=0 // pred_check_branch
    %42 = sbr.rel (0) target = $region37
  $region36: #{robertabase_linear4_forward.3} parent=0 // pred_region
    _
  $region37: #{robertabase_linear4_forward.3} parent=0 // pred_fallthru
    _
  // Predicated region
  $region38: #{robertabase_linear4_forward.3} parent=0 // pred_check
    _
  $region39: #{robertabase_linear4_forward.3} parent=0 // pred_check_branch
    %44 = sbr.rel (0) target = $region41
  $region40: #{robertabase_linear4_forward.3} parent=0 // pred_region
    _
  $region41: #{robertabase_linear4_forward.3} parent=0 // pred_fallthru
    _
  // Predicated region
  $region42: #{robertabase_linear4_forward.3} parent=0 // pred_check
    _
  $region43: #{robertabase_linear4_forward.3} parent=0 // pred_check_branch
    %46 = sbr.rel (0) target = $region45
  $region44: #{robertabase_linear4_forward.3} parent=0 // pred_region
    _
  $region45: #{robertabase_linear4_forward.3} parent=0 // pred_fallthru
    _
  // Predicated region
  $region46: #{robertabase_linear4_forward.3} parent=0 // pred_check
    _
  $region47: #{robertabase_linear4_forward.3} parent=0 // pred_check_branch
    %48 = sbr.rel (0) target = $region49
  $region48: #{robertabase_linear4_forward.3} parent=0 // pred_region
    _
  $region49: #{robertabase_linear4_forward.3} parent=0 // pred_fallthru
    _
  // Predicated region
  $region50: #{robertabase_linear4_forward.3} parent=0 // pred_check
    _
  $region51: #{robertabase_linear4_forward.3} parent=0 // pred_check_branch
    %50 = sbr.rel (0) target = $region53
  $region52: #{robertabase_linear4_forward.3} parent=0 // pred_region
    _
  $region53: #{robertabase_linear4_forward.3} parent=0 // pred_fallthru
    _
  // Predicated region
  $region54: #{robertabase_linear4_forward.3} parent=0 // pred_check
    _
  $region55: #{robertabase_linear4_forward.3} parent=0 // pred_check_branch
    %52 = sbr.rel (0) target = $region57
  $region56: #{robertabase_linear4_forward.3} parent=0 // pred_region
    _
  $region57: #{robertabase_linear4_forward.3} parent=0 // pred_fallthru
    _
  // Predicated region
  $region58: #{robertabase_linear4_forward.3} parent=0 // pred_check
    _
  $region59: #{robertabase_linear4_forward.3} parent=0 // pred_check_branch
    %54 = sbr.rel (0) target = $region61
  $region60: #{robertabase_linear4_forward.3} parent=0 // pred_region
    _
  $region61: #{robertabase_linear4_forward.3} parent=0 // pred_fallthru
    _
  // Predicated region
  $region62: #{robertabase_linear4_forward.3} parent=0 // pred_check
    _
  $region63: #{robertabase_linear4_forward.3} parent=0 // pred_check_branch
    %56 = sbr.rel (0) target = $region65
  $region64: #{robertabase_linear4_forward.3} parent=0 // pred_region
    _
  $region65: #{robertabase_linear4_forward.3} parent=0 // pred_fallthru
    _
  // Predicated region
  $region66: #{robertabase_linear4_forward.3} parent=0 // pred_check
    _
  $region67: #{robertabase_linear4_forward.3} parent=0 // pred_check_branch
    %58 = sbr.rel (0) target = $region69
  $region68: #{robertabase_linear4_forward.3} parent=0 // pred_region
    _
  $region69: #{robertabase_linear4_forward.3} parent=0 // pred_fallthru
    _
  // Predicated region
  $region70: #{robertabase_linear4_forward.3} parent=0 // pred_check
    _
  $region71: #{robertabase_linear4_forward.3} parent=0 // pred_check_branch
    %60 = sbr.rel (0) target = $region73
  $region72: #{robertabase_linear4_forward.3} parent=0 // pred_region
    _
  $region73: #{robertabase_linear4_forward.3} parent=0 // pred_fallthru
    _
  // Predicated region
  $region74: #{robertabase_linear4_forward.3} parent=0 // pred_check
    _
  $region75: #{robertabase_linear4_forward.3} parent=0 // pred_check_branch
    %62 = sbr.rel (0) target = $region77
  $region76: #{robertabase_linear4_forward.3} parent=0 // pred_region
    _
  $region77: #{robertabase_linear4_forward.3} parent=0 // pred_fallthru
    _
  // Predicated region
  $region78: #{robertabase_linear4_forward.3} parent=0 // pred_check
    _
  $region79: #{robertabase_linear4_forward.3} parent=0 // pred_check_branch
    %64 = sbr.rel (0) target = $region81
  $region80: #{robertabase_linear4_forward.3} parent=0 // pred_region
    _
  $region81: #{robertabase_linear4_forward.3} parent=0 // pred_fallthru
    _
  %v66 = vld [vmem:[%s1] sm:$0x3]
  %v69 = vunpack.c.l.s4 1966171168
  %v70 = vunpack.c.0.s8 %v69
  %v71 = vlaneseq
  %v72 = vshrl.u32 %v71, 7
  %v73 = vsub.s32 %v70, %v72
  %v74 = vrot.slane %v66, %v73
  %v75 = vcombine.high %v74, %v74
  %v77 = vunpack.c.l.s4 1966171168
  %v78 = vunpack.c.0.s8 %v77
  %v79 = vlaneseq
  %v80 = vshrl.u32 %v79, 7
  %v81 = vsub.s32 %v78, %v80
  %v82 = vrot.slane %v74, %v81
  %v84 = vunpack.c.l.s4 1966171168
  %v85 = vunpack.c.0.s8 %v84
  %v86 = vlaneseq
  %v87 = vshrl.u32 %v86, 7
  %v88 = vsub.s32 %v85, %v87
  %v89 = vrot.slane %v75, %v88
  %v90 = vlaneseq
  %v91 = vshrl.u32 %v90, 7
  %v92 = vsub.s32 0, %v91
  %v93 = vrot.slane %v82, %v92
  %v94 = vlaneseq
  %v95 = vshrl.u32 %v94, 7
  %v96 = vsub.s32 0, %v95
  %v97 = vrot.slane %v89, %v96
  %v100 = vld [vmem:[%s0] sm:$0xff]
  %v101 = vld [vmem:[%s0 + $0x8] sm:$0xff]
  %v102 = vld [vmem:[%s2] sm:$0x1]
  %v103 = vld [vmem:[%s3] sm:$0x1]
  %vm104 = vcmask 261120
  %v105 = vsel %vm104, %v100, 0.0
  %106 = vadd.xlane.f32.xlu0 %v105
  %v107 = vpop.xlane.xlu0 %106
  %v108 = vsel %vm104, %v101, 0.0
  %109 = vadd.xlane.f32.xlu0 %v108
  %v110 = vpop.xlane.xlu0 %109
  %v111 = vrcp.pop 32.0
  %v112 = vmul.f32 %v107, %v111
  %v113 = vmul.f32 %v110, %v111
  %v114 = vsub.f32 %v100, %v112
  %v115 = vsub.f32 %v101, %v113
  %v116 = vmul.f32 %v114, %v114
  %v117 = vmul.f32 %v115, %v115
  %v118 = vsel %vm104, %v116, 0.0
  %119 = vadd.xlane.f32.xlu0 %v118
  %v120 = vpop.xlane.xlu0 %119
  %v121 = vsel %vm104, %v117, 0.0
  %122 = vadd.xlane.f32.xlu0 %v121
  %v123 = vpop.xlane.xlu0 %122
  %v124 = vmul.f32 %v120, %v111
  %v125 = vmul.f32 %v123, %v111
  %v126 = vadd.f32 %v124, 1e-05
  %v127 = vadd.f32 %v125, 1e-05
  %v128 = vrsqrt.pop %v126
  %v129 = vrsqrt.pop %v127
  %v130 = vmul.f32 %v114, %v128
  %v131 = vmul.f32 %v115, %v129
  %v133 = vlaneseq
  %v134 = vshrl.u32 %v133, 7
  %v135 = vsub.s32 0, %v134
  %v136 = vrot.slane %v102, %v135
  %v138 = vmul.f32 %v130, %v136
  %v139 = vmul.f32 %v131, %v136
  %v141 = vlaneseq
  %v142 = vshrl.u32 %v141, 7
  %v143 = vsub.s32 0, %v142
  %v144 = vrot.slane %v103, %v143
  %v146 = vadd.f32 %v138, %v144
  %v147 = vadd.f32 %v139, %v144
  %v148 = vld [vmem:[%s4] sm:$0xf]
  %v149 = vld [vmem:[%s4 + $0x4] sm:$0xf]
  %v150 = vld [vmem:[%s4 + $0x8] sm:$0xf]
  %v151 = vld [vmem:[%s4 + $0xc] sm:$0xf]
  %v152 = vld [vmem:[%s5] sm:$0x1]
  %v153 = vld [vmem:[%s6] sm:$0xf]
  %v154 = vld [vmem:[%s6 + $0x4] sm:$0xf]
  %v155 = vld [vmem:[%s6 + $0x8] sm:$0xf]
  %v156 = vld [vmem:[%s6 + $0xc] sm:$0xf]
  %v157 = vld [vmem:[%s7] sm:$0x1]
  %v158 = vld [vmem:[%s8] sm:$0x1]
  %v159 = vld [vmem:[%s9] sm:$0x1]
  %v160 = vld [vmem:[%s10] sm:$0xf]
  %v161 = vld [vmem:[%s10 + $0x4] sm:$0xf]
  %v162 = vld [vmem:[%s10 + $0x8] sm:$0xf]
  %v163 = vld [vmem:[%s10 + $0xc] sm:$0xf]
  %v164 = vld [vmem:[%s11] sm:$0x1]
  %v165 = vld [vmem:[%s12] sm:$0xf]
  %v166 = vld [vmem:[%s12 + $0x4] sm:$0xf]
  %v167 = vld [vmem:[%s12 + $0x8] sm:$0xf]
  %v168 = vld [vmem:[%s12 + $0xc] sm:$0xf]
  %v169 = vld [vmem:[%s12 + $0x10] sm:$0xf]
  %v170 = vld [vmem:[%s12 + $0x14] sm:$0xf]
  %v171 = vld [vmem:[%s12 + $0x18] sm:$0xf]
  %v172 = vld [vmem:[%s12 + $0x1c] sm:$0xf]
  %v173 = vld [vmem:[%s13] sm:$0x1]
  %v174 = vld [vmem:[%s14] sm:$0x1]
  %v175 = vld [vmem:[%s15] sm:$0x1]
  %v176 = vpack.c.bf16 %v147, %v146
  %v178 = vlaneseq
  %v179 = vshrl.u32 %v178, 7
  %v180 = vsub.s32 0, %v179
  %v181 = vrot.slane %v152, %v180
  %v187 = vunpack.c.l.b16 %v148
  %v188 = vunpack.c.l.b16 %v149
  %v189 = vunpack.c.l.b16 %v150
  %v190 = vunpack.c.l.b16 %v151
  %v191 = vpack.c.b16 %v188, %v187
  %v192 = vpack.c.b16 %v190, %v189
  %v196 = vsel %vm104, %v176, 0
  %198 = vmatprep.subr.bf16.mxu0 0
  %199 = vmatpush1.bf16.msra.mxu0 %v191
  %200 = vmatprep.subr.bf16.mxu0 0
  %201 = vmatpush1.bf16.msra.mxu0 %v192
  %202 = vmatprep.subr.bf16.mxu0 0
  %203 = vmatpush1.bf16.msra.mxu0 0
  %204 = vmatprep.subr.bf16.mxu0 0
  %205 = vmatpush1.bf16.msra.mxu0 0
  %206 = vmatprep.subr.bf16.mxu0 0
  %207 = vmatpush1.bf16.msra.mxu0 0
  %208 = vmatprep.subr.bf16.mxu0 0
  %209 = vmatpush1.bf16.msra.mxu0 0
  %210 = vmatprep.subr.bf16.mxu0 0
  %211 = vmatpush1.bf16.msra.mxu0 0
  %212 = vmatprep.subr.bf16.mxu0 0
  %213 = vmatpush1.bf16.msra.mxu0 0
  %214 = vmatprep.subr.bf16.mxu0 0
  %215 = vmatpush1.bf16.msra.mxu0 0
  %216 = vmatprep.subr.bf16.mxu0 0
  %217 = vmatpush1.bf16.msra.mxu0 0
  %218 = vmatprep.subr.bf16.mxu0 0
  %219 = vmatpush1.bf16.msra.mxu0 0
  %220 = vmatprep.subr.bf16.mxu0 0
  %221 = vmatpush1.bf16.msra.mxu0 0
  %222 = vmatprep.subr.bf16.mxu0 0
  %223 = vmatpush1.bf16.msra.mxu0 0
  %224 = vmatprep.subr.bf16.mxu0 0
  %225 = vmatpush1.bf16.msra.mxu0 0
  %226 = vmatprep.subr.bf16.mxu0 0
  %227 = vmatpush1.bf16.msra.mxu0 0
  %228 = vmatprep.subr.bf16.mxu0 0
  %229 = vmatpush1.bf16.msra.mxu0 0
  %230 = vmatprep.mubr.bf16.mxu0 0
  %231 = vmatmul.mubr.bf16.gmra.mrb[0].mxu0 %v196
  %v232 = vpop.f32.mrb[0].mxu0
  %v233 = vadd.f32 %v181, %v232
  %v234 = vpop.f32.mrb[0].mxu0
  %v235 = vpop.f32.mrb[0].mxu0
  %v236 = vadd.f32 %v181, %v235
  %v237 = vpop.f32.mrb[0].mxu0
  %238 = vdwg.mxu0
  %v239 = vpack.c.bf16 %v233, %v233
  %v240 = vpack.c.bf16 %v236, %v236
  %242 = vrot.lane.b32.xlu0 %v239, 96
  %v243 = vpop.permute.xlu0 %242
  %vm244 = vcmask 64512
  %v246 = vsel %vm244, %v239, 0
  %v249 = vsel %vm244, %v243, 0
  %251 = vmatprep.subr.bf16.mxu0 0
  %252 = vmatpush1.bf16.xpose.msra.mxu0 %v249
  %253 = vmatprep.subr.bf16.mxu0 0
  %254 = vmatpush1.bf16.xpose.msra.mxu0 0
  %255 = vmatprep.subr.bf16.mxu0 0
  %256 = vmatpush1.bf16.xpose.msra.mxu0 0
  %257 = vmatprep.subr.bf16.mxu0 0
  %258 = vmatpush1.bf16.xpose.msra.mxu0 0
  %259 = vmatprep.subr.bf16.mxu0 0
  %260 = vmatpush1.bf16.xpose.msra.mxu0 0
  %261 = vmatprep.subr.bf16.mxu0 0
  %262 = vmatpush1.bf16.xpose.msra.mxu0 0
  %263 = vmatprep.subr.bf16.mxu0 0
  %264 = vmatpush1.bf16.xpose.msra.mxu0 0
  %265 = vmatprep.subr.bf16.mxu0 0
  %266 = vmatpush1.bf16.xpose.msra.mxu0 0
  %267 = vmatprep.subr.bf16.mxu0 0
  %268 = vmatpush1.bf16.xpose.msra.mxu0 0
  %269 = vmatprep.subr.bf16.mxu0 0
  %270 = vmatpush1.bf16.xpose.msra.mxu0 0
  %271 = vmatprep.subr.bf16.mxu0 0
  %272 = vmatpush1.bf16.xpose.msra.mxu0 0
  %273 = vmatprep.subr.bf16.mxu0 0
  %274 = vmatpush1.bf16.xpose.msra.mxu0 0
  %275 = vmatprep.subr.bf16.mxu0 0
  %276 = vmatpush1.bf16.xpose.msra.mxu0 0
  %277 = vmatprep.subr.bf16.mxu0 0
  %278 = vmatpush1.bf16.xpose.msra.mxu0 0
  %279 = vmatprep.subr.bf16.mxu0 0
  %280 = vmatpush1.bf16.xpose.msra.mxu0 0
  %281 = vmatprep.subr.bf16.mxu0 0
  %282 = vmatpush1.bf16.xpose.msra.mxu0 0
  %283 = vmatprep.mubr.bf16.mxu0 0
  %284 = vmatmul.mubr.bf16.gmra.mrb[0].mxu0 %v246
  %v285 = vpop.f32.mrb[0].mxu0
  %v286 = vadd.f32 0.0, %v285
  %v287 = vpop.f32.mrb[0].mxu0
  %v288 = vpop.f32.mrb[0].mxu0
  %v289 = vpop.f32.mrb[0].mxu0
  %290 = vdwg.mxu0
  %292 = vrot.lane.b32.xlu0 %v240, 96
  %v293 = vpop.permute.xlu0 %292
  %v295 = vsel %vm244, %v240, 0
  %v298 = vsel %vm244, %v293, 0
  %300 = vmatprep.subr.bf16.mxu0 0
  %301 = vmatpush1.bf16.xpose.msra.mxu0 %v298
  %302 = vmatprep.subr.bf16.mxu0 0
  %303 = vmatpush1.bf16.xpose.msra.mxu0 0
  %304 = vmatprep.subr.bf16.mxu0 0
  %305 = vmatpush1.bf16.xpose.msra.mxu0 0
  %306 = vmatprep.subr.bf16.mxu0 0
  %307 = vmatpush1.bf16.xpose.msra.mxu0 0
  %308 = vmatprep.subr.bf16.mxu0 0
  %309 = vmatpush1.bf16.xpose.msra.mxu0 0
  %310 = vmatprep.subr.bf16.mxu0 0
  %311 = vmatpush1.bf16.xpose.msra.mxu0 0
  %312 = vmatprep.subr.bf16.mxu0 0
  %313 = vmatpush1.bf16.xpose.msra.mxu0 0
  %314 = vmatprep.subr.bf16.mxu0 0
  %315 = vmatpush1.bf16.xpose.msra.mxu0 0
  %316 = vmatprep.subr.bf16.mxu0 0
  %317 = vmatpush1.bf16.xpose.msra.mxu0 0
  %318 = vmatprep.subr.bf16.mxu0 0
  %319 = vmatpush1.bf16.xpose.msra.mxu0 0
  %320 = vmatprep.subr.bf16.mxu0 0
  %321 = vmatpush1.bf16.xpose.msra.mxu0 0
  %322 = vmatprep.subr.bf16.mxu0 0
  %323 = vmatpush1.bf16.xpose.msra.mxu0 0
  %324 = vmatprep.subr.bf16.mxu0 0
  %325 = vmatpush1.bf16.xpose.msra.mxu0 0
  %326 = vmatprep.subr.bf16.mxu0 0
  %327 = vmatpush1.bf16.xpose.msra.mxu0 0
  %328 = vmatprep.subr.bf16.mxu0 0
  %329 = vmatpush1.bf16.xpose.msra.mxu0 0
  %330 = vmatprep.subr.bf16.mxu0 0
  %331 = vmatpush1.bf16.xpose.msra.mxu0 0
  %332 = vmatprep.mubr.bf16.mxu0 0
  %333 = vmatmul.mubr.bf16.gmra.mrb[0].mxu0 %v295
  %v334 = vpop.f32.mrb[0].mxu0
  %v335 = vadd.f32 0.0, %v334
  %v336 = vpop.f32.mrb[0].mxu0
  %v337 = vpop.f32.mrb[0].mxu0
  %v338 = vpop.f32.mrb[0].mxu0
  %339 = vdwg.mxu0
  %v340 = vmul.f32 %v286, 0.35355338
  %v341 = vmul.f32 %v335, 0.35355338
  %v342 = vadd.f32 %v340, %v93
  %v343 = vadd.f32 %v341, %v97
  %v344 = vsel %vm244, %v342, -inf
  %345 = vmax.xlane.f32.xlu0 %v344
  %v346 = vpop.xlane.xlu0 %345
  %v347 = vsel %vm244, %v343, -inf
  %348 = vmax.xlane.f32.xlu0 %v347
  %v349 = vpop.xlane.xlu0 %348
  %v350 = vsub.f32 %v342, %v346
  %v351 = vsub.f32 %v343, %v349
  %v352 = vmul.f32 %v350, 1.442695
  %v353 = vpow.pop %v352
  %v354 = vmul.f32 %v351, 1.442695
  %v355 = vpow.pop %v354
  %v356 = vsel %vm244, %v353, 0.0
  %357 = vadd.xlane.f32.xlu0 %v356
  %v358 = vpop.xlane.xlu0 %357
  %v359 = vsel %vm244, %v355, 0.0
  %360 = vadd.xlane.f32.xlu0 %v359
  %v361 = vpop.xlane.xlu0 %360
  %v362 = vrcp.pop %v358
  %v363 = vrcp.pop %v361
  %v364 = vmul.f32 %v353, %v362
  %v365 = vmul.f32 %v355, %v363
  %v366 = vpack.c.bf16 %v364, %v364
  %v367 = vpack.c.bf16 %v365, %v365
  %368 = vrot.lane.b32.xlu0 %v239, 64
  %v369 = vpop.permute.xlu0 %368
  %v371 = vsel %vm244, %v366, 0
  %vm373 = vcmask 1043456
  %v375 = vsel %vm373, %v369, 0
  %377 = vmatprep.subr.bf16.mxu0 0
  %378 = vmatpush1.bf16.msra.mxu0 %v375
  %379 = vmatprep.subr.bf16.mxu0 0
  %380 = vmatpush1.bf16.msra.mxu0 0
  %381 = vmatprep.subr.bf16.mxu0 0
  %382 = vmatpush1.bf16.msra.mxu0 0
  %383 = vmatprep.subr.bf16.mxu0 0
  %384 = vmatpush1.bf16.msra.mxu0 0
  %385 = vmatprep.subr.bf16.mxu0 0
  %386 = vmatpush1.bf16.msra.mxu0 0
  %387 = vmatprep.subr.bf16.mxu0 0
  %388 = vmatpush1.bf16.msra.mxu0 0
  %389 = vmatprep.subr.bf16.mxu0 0
  %390 = vmatpush1.bf16.msra.mxu0 0
  %391 = vmatprep.subr.bf16.mxu0 0
  %392 = vmatpush1.bf16.msra.mxu0 0
  %393 = vmatprep.subr.bf16.mxu0 0
  %394 = vmatpush1.bf16.msra.mxu0 0
  %395 = vmatprep.subr.bf16.mxu0 0
  %396 = vmatpush1.bf16.msra.mxu0 0
  %397 = vmatprep.subr.bf16.mxu0 0
  %398 = vmatpush1.bf16.msra.mxu0 0
  %399 = vmatprep.subr.bf16.mxu0 0
  %400 = vmatpush1.bf16.msra.mxu0 0
  %401 = vmatprep.subr.bf16.mxu0 0
  %402 = vmatpush1.bf16.msra.mxu0 0
  %403 = vmatprep.subr.bf16.mxu0 0
  %404 = vmatpush1.bf16.msra.mxu0 0
  %405 = vmatprep.subr.bf16.mxu0 0
  %406 = vmatpush1.bf16.msra.mxu0 0
  %407 = vmatprep.subr.bf16.mxu0 0
  %408 = vmatpush1.bf16.msra.mxu0 0
  %409 = vmatprep.mubr.bf16.mxu0 0
  %410 = vmatmul.mubr.bf16.gmra.mrb[0].mxu0 %v371
  %v411 = vpop.f32.mrb[0].mxu0
  %v412 = vadd.f32 0.0, %v411
  %v413 = vpop.f32.mrb[0].mxu0
  %v414 = vpop.f32.mrb[0].mxu0
  %v415 = vpop.f32.mrb[0].mxu0
  %416 = vdwg.mxu0
  %417 = vrot.lane.b32.xlu0 %v240, 64
  %v418 = vpop.permute.xlu0 %417
  %v420 = vsel %vm244, %v367, 0
  %v423 = vsel %vm373, %v418, 0
  %425 = vmatprep.subr.bf16.mxu0 0
  %426 = vmatpush1.bf16.msra.mxu0 %v423
  %427 = vmatprep.subr.bf16.mxu0 0
  %428 = vmatpush1.bf16.msra.mxu0 0
  %429 = vmatprep.subr.bf16.mxu0 0
  %430 = vmatpush1.bf16.msra.mxu0 0
  %431 = vmatprep.subr.bf16.mxu0 0
  %432 = vmatpush1.bf16.msra.mxu0 0
  %433 = vmatprep.subr.bf16.mxu0 0
  %434 = vmatpush1.bf16.msra.mxu0 0
  %435 = vmatprep.subr.bf16.mxu0 0
  %436 = vmatpush1.bf16.msra.mxu0 0
  %437 = vmatprep.subr.bf16.mxu0 0
  %438 = vmatpush1.bf16.msra.mxu0 0
  %439 = vmatprep.subr.bf16.mxu0 0
  %440 = vmatpush1.bf16.msra.mxu0 0
  %441 = vmatprep.subr.bf16.mxu0 0
  %442 = vmatpush1.bf16.msra.mxu0 0
  %443 = vmatprep.subr.bf16.mxu0 0
  %444 = vmatpush1.bf16.msra.mxu0 0
  %445 = vmatprep.subr.bf16.mxu0 0
  %446 = vmatpush1.bf16.msra.mxu0 0
  %447 = vmatprep.subr.bf16.mxu0 0
  %448 = vmatpush1.bf16.msra.mxu0 0
  %449 = vmatprep.subr.bf16.mxu0 0
  %450 = vmatpush1.bf16.msra.mxu0 0
  %451 = vmatprep.subr.bf16.mxu0 0
  %452 = vmatpush1.bf16.msra.mxu0 0
  %453 = vmatprep.subr.bf16.mxu0 0
  %454 = vmatpush1.bf16.msra.mxu0 0
  %455 = vmatprep.subr.bf16.mxu0 0
  %456 = vmatpush1.bf16.msra.mxu0 0
  %457 = vmatprep.mubr.bf16.mxu0 0
  %458 = vmatmul.mubr.bf16.gmra.mrb[0].mxu0 %v420
  %v459 = vpop.f32.mrb[0].mxu0
  %v460 = vadd.f32 0.0, %v459
  %v461 = vpop.f32.mrb[0].mxu0
  %v462 = vpop.f32.mrb[0].mxu0
  %v463 = vpop.f32.mrb[0].mxu0
  %464 = vdwg.mxu0
  %465 = vrot.lane.b32.xlu0 %v239, 120
  %v466 = vpop.permute.xlu0 %465
  %467 = vrot.lane.b32.xlu0 %v239, 88
  %v468 = vpop.permute.xlu0 %467
  %v470 = vsel %vm244, %v466, 0
  %v473 = vsel %vm244, %v468, 0
  %475 = vmatprep.subr.bf16.mxu0 0
  %476 = vmatpush1.bf16.xpose.msra.mxu0 %v473
  %477 = vmatprep.subr.bf16.mxu0 0
  %478 = vmatpush1.bf16.xpose.msra.mxu0 0
  %479 = vmatprep.subr.bf16.mxu0 0
  %480 = vmatpush1.bf16.xpose.msra.mxu0 0
  %481 = vmatprep.subr.bf16.mxu0 0
  %482 = vmatpush1.bf16.xpose.msra.mxu0 0
  %483 = vmatprep.subr.bf16.mxu0 0
  %484 = vmatpush1.bf16.xpose.msra.mxu0 0
  %485 = vmatprep.subr.bf16.mxu0 0
  %486 = vmatpush1.bf16.xpose.msra.mxu0 0
  %487 = vmatprep.subr.bf16.mxu0 0
  %488 = vmatpush1.bf16.xpose.msra.mxu0 0
  %489 = vmatprep.subr.bf16.mxu0 0
  %490 = vmatpush1.bf16.xpose.msra.mxu0 0
  %491 = vmatprep.subr.bf16.mxu0 0
  %492 = vmatpush1.bf16.xpose.msra.mxu0 0
  %493 = vmatprep.subr.bf16.mxu0 0
  %494 = vmatpush1.bf16.xpose.msra.mxu0 0
  %495 = vmatprep.subr.bf16.mxu0 0
  %496 = vmatpush1.bf16.xpose.msra.mxu0 0
  %497 = vmatprep.subr.bf16.mxu0 0
  %498 = vmatpush1.bf16.xpose.msra.mxu0 0
  %499 = vmatprep.subr.bf16.mxu0 0
  %500 = vmatpush1.bf16.xpose.msra.mxu0 0
  %501 = vmatprep.subr.bf16.mxu0 0
  %502 = vmatpush1.bf16.xpose.msra.mxu0 0
  %503 = vmatprep.subr.bf16.mxu0 0
  %504 = vmatpush1.bf16.xpose.msra.mxu0 0
  %505 = vmatprep.subr.bf16.mxu0 0
  %506 = vmatpush1.bf16.xpose.msra.mxu0 0
  %507 = vmatprep.mubr.bf16.mxu0 0
  %508 = vmatmul.mubr.bf16.gmra.mrb[0].mxu0 %v470
  %v509 = vpop.f32.mrb[0].mxu0
  %v510 = vadd.f32 0.0, %v509
  %v511 = vpop.f32.mrb[0].mxu0
  %v512 = vpop.f32.mrb[0].mxu0
  %v513 = vpop.f32.mrb[0].mxu0
  %514 = vdwg.mxu0
  %515 = vrot.lane.b32.xlu0 %v240, 120
  %v516 = vpop.permute.xlu0 %515
  %517 = vrot.lane.b32.xlu0 %v240, 88
  %v518 = vpop.permute.xlu0 %517
  %v520 = vsel %vm244, %v516, 0
  %v523 = vsel %vm244, %v518, 0
  %525 = vmatprep.subr.bf16.mxu0 0
  %526 = vmatpush1.bf16.xpose.msra.mxu0 %v523
  %527 = vmatprep.subr.bf16.mxu0 0
  %528 = vmatpush1.bf16.xpose.msra.mxu0 0
  %529 = vmatprep.subr.bf16.mxu0 0
  %530 = vmatpush1.bf16.xpose.msra.mxu0 0
  %531 = vmatprep.subr.bf16.mxu0 0
  %532 = vmatpush1.bf16.xpose.msra.mxu0 0
  %533 = vmatprep.subr.bf16.mxu0 0
  %534 = vmatpush1.bf16.xpose.msra.mxu0 0
  %535 = vmatprep.subr.bf16.mxu0 0
  %536 = vmatpush1.bf16.xpose.msra.mxu0 0
  %537 = vmatprep.subr.bf16.mxu0 0
  %538 = vmatpush1.bf16.xpose.msra.mxu0 0
  %539 = vmatprep.subr.bf16.mxu0 0
  %540 = vmatpush1.bf16.xpose.msra.mxu0 0
  %541 = vmatprep.subr.bf16.mxu0 0
  %542 = vmatpush1.bf16.xpose.msra.mxu0 0
  %543 = vmatprep.subr.bf16.mxu0 0
  %544 = vmatpush1.bf16.xpose.msra.mxu0 0
  %545 = vmatprep.subr.bf16.mxu0 0
  %546 = vmatpush1.bf16.xpose.msra.mxu0 0
  %547 = vmatprep.subr.bf16.mxu0 0
  %548 = vmatpush1.bf16.xpose.msra.mxu0 0
  %549 = vmatprep.subr.bf16.mxu0 0
  %550 = vmatpush1.bf16.xpose.msra.mxu0 0
  %551 = vmatprep.subr.bf16.mxu0 0
  %552 = vmatpush1.bf16.xpose.msra.mxu0 0
  %553 = vmatprep.subr.bf16.mxu0 0
  %554 = vmatpush1.bf16.xpose.msra.mxu0 0
  %555 = vmatprep.subr.bf16.mxu0 0
  %556 = vmatpush1.bf16.xpose.msra.mxu0 0
  %557 = vmatprep.mubr.bf16.mxu0 0
  %558 = vmatmul.mubr.bf16.gmra.mrb[0].mxu0 %v520
  %v559 = vpop.f32.mrb[0].mxu0
  %v560 = vadd.f32 0.0, %v559
  %v561 = vpop.f32.mrb[0].mxu0
  %v562 = vpop.f32.mrb[0].mxu0
  %v563 = vpop.f32.mrb[0].mxu0
  %564 = vdwg.mxu0
  %v565 = vmul.f32 %v510, 0.35355338
  %v566 = vmul.f32 %v560, 0.35355338
  %v567 = vadd.f32 %v565, %v93
  %v568 = vadd.f32 %v566, %v97
  %v569 = vsel %vm244, %v567, -inf
  %570 = vmax.xlane.f32.xlu0 %v569
  %v571 = vpop.xlane.xlu0 %570
  %v572 = vsel %vm244, %v568, -inf
  %573 = vmax.xlane.f32.xlu0 %v572
  %v574 = vpop.xlane.xlu0 %573
  %v575 = vsub.f32 %v567, %v571
  %v576 = vsub.f32 %v568, %v574
  %v577 = vmul.f32 %v575, 1.442695
  %v578 = vpow.pop %v577
  %v579 = vmul.f32 %v576, 1.442695
  %v580 = vpow.pop %v579
  %v581 = vsel %vm244, %v578, 0.0
  %582 = vadd.xlane.f32.xlu0 %v581
  %v583 = vpop.xlane.xlu0 %582
  %v584 = vsel %vm244, %v580, 0.0
  %585 = vadd.xlane.f32.xlu0 %v584
  %v586 = vpop.xlane.xlu0 %585
  %v587 = vrcp.pop %v583
  %v588 = vrcp.pop %v586
  %v589 = vmul.f32 %v578, %v587
  %v590 = vmul.f32 %v580, %v588
  %v591 = vpack.c.bf16 %v589, %v589
  %v592 = vpack.c.bf16 %v590, %v590
  %593 = vrot.lane.b32.xlu0 %v239, 56
  %v594 = vpop.permute.xlu0 %593
  %v596 = vsel %vm244, %v591, 0
  %v599 = vsel %vm373, %v594, 0
  %601 = vmatprep.subr.bf16.mxu0 0
  %602 = vmatpush1.bf16.msra.mxu0 %v599
  %603 = vmatprep.subr.bf16.mxu0 0
  %604 = vmatpush1.bf16.msra.mxu0 0
  %605 = vmatprep.subr.bf16.mxu0 0
  %606 = vmatpush1.bf16.msra.mxu0 0
  %607 = vmatprep.subr.bf16.mxu0 0
  %608 = vmatpush1.bf16.msra.mxu0 0
  %609 = vmatprep.subr.bf16.mxu0 0
  %610 = vmatpush1.bf16.msra.mxu0 0
  %611 = vmatprep.subr.bf16.mxu0 0
  %612 = vmatpush1.bf16.msra.mxu0 0
  %613 = vmatprep.subr.bf16.mxu0 0
  %614 = vmatpush1.bf16.msra.mxu0 0
  %615 = vmatprep.subr.bf16.mxu0 0
  %616 = vmatpush1.bf16.msra.mxu0 0
  %617 = vmatprep.subr.bf16.mxu0 0
  %618 = vmatpush1.bf16.msra.mxu0 0
  %619 = vmatprep.subr.bf16.mxu0 0
  %620 = vmatpush1.bf16.msra.mxu0 0
  %621 = vmatprep.subr.bf16.mxu0 0
  %622 = vmatpush1.bf16.msra.mxu0 0
  %623 = vmatprep.subr.bf16.mxu0 0
  %624 = vmatpush1.bf16.msra.mxu0 0
  %625 = vmatprep.subr.bf16.mxu0 0
  %626 = vmatpush1.bf16.msra.mxu0 0
  %627 = vmatprep.subr.bf16.mxu0 0
  %628 = vmatpush1.bf16.msra.mxu0 0
  %629 = vmatprep.subr.bf16.mxu0 0
  %630 = vmatpush1.bf16.msra.mxu0 0
  %631 = vmatprep.subr.bf16.mxu0 0
  %632 = vmatpush1.bf16.msra.mxu0 0
  %633 = vmatprep.mubr.bf16.mxu0 0
  %634 = vmatmul.mubr.bf16.gmra.mrb[0].mxu0 %v596
  %v635 = vpop.f32.mrb[0].mxu0
  %v636 = vadd.f32 0.0, %v635
  %v637 = vpop.f32.mrb[0].mxu0
  %v638 = vpop.f32.mrb[0].mxu0
  %v639 = vpop.f32.mrb[0].mxu0
  %640 = vdwg.mxu0
  %641 = vrot.lane.b32.xlu0 %v240, 56
  %v642 = vpop.permute.xlu0 %641
  %v644 = vsel %vm244, %v592, 0
  %v647 = vsel %vm373, %v642, 0
  %649 = vmatprep.subr.bf16.mxu0 0
  %650 = vmatpush1.bf16.msra.mxu0 %v647
  %651 = vmatprep.subr.bf16.mxu0 0
  %652 = vmatpush1.bf16.msra.mxu0 0
  %653 = vmatprep.subr.bf16.mxu0 0
  %654 = vmatpush1.bf16.msra.mxu0 0
  %655 = vmatprep.subr.bf16.mxu0 0
  %656 = vmatpush1.bf16.msra.mxu0 0
  %657 = vmatprep.subr.bf16.mxu0 0
  %658 = vmatpush1.bf16.msra.mxu0 0
  %659 = vmatprep.subr.bf16.mxu0 0
  %660 = vmatpush1.bf16.msra.mxu0 0
  %661 = vmatprep.subr.bf16.mxu0 0
  %662 = vmatpush1.bf16.msra.mxu0 0
  %663 = vmatprep.subr.bf16.mxu0 0
  %664 = vmatpush1.bf16.msra.mxu0 0
  %665 = vmatprep.subr.bf16.mxu0 0
  %666 = vmatpush1.bf16.msra.mxu0 0
  %667 = vmatprep.subr.bf16.mxu0 0
  %668 = vmatpush1.bf16.msra.mxu0 0
  %669 = vmatprep.subr.bf16.mxu0 0
  %670 = vmatpush1.bf16.msra.mxu0 0
  %671 = vmatprep.subr.bf16.mxu0 0
  %672 = vmatpush1.bf16.msra.mxu0 0
  %673 = vmatprep.subr.bf16.mxu0 0
  %674 = vmatpush1.bf16.msra.mxu0 0
  %675 = vmatprep.subr.bf16.mxu0 0
  %676 = vmatpush1.bf16.msra.mxu0 0
  %677 = vmatprep.subr.bf16.mxu0 0
  %678 = vmatpush1.bf16.msra.mxu0 0
  %679 = vmatprep.subr.bf16.mxu0 0
  %680 = vmatpush1.bf16.msra.mxu0 0
  %681 = vmatprep.mubr.bf16.mxu0 0
  %682 = vmatmul.mubr.bf16.gmra.mrb[0].mxu0 %v644
  %v683 = vpop.f32.mrb[0].mxu0
  %v684 = vadd.f32 0.0, %v683
  %v685 = vpop.f32.mrb[0].mxu0
  %v686 = vpop.f32.mrb[0].mxu0
  %v687 = vpop.f32.mrb[0].mxu0
  %688 = vdwg.mxu0
  %689 = vrot.lane.b32.xlu0 %v239, 112
  %v690 = vpop.permute.xlu0 %689
  %691 = vrot.lane.b32.xlu0 %v239, 80
  %v692 = vpop.permute.xlu0 %691
  %v694 = vsel %vm244, %v690, 0
  %v697 = vsel %vm244, %v692, 0
  %699 = vmatprep.subr.bf16.mxu0 0
  %700 = vmatpush1.bf16.xpose.msra.mxu0 %v697
  %701 = vmatprep.subr.bf16.mxu0 0
  %702 = vmatpush1.bf16.xpose.msra.mxu0 0
  %703 = vmatprep.subr.bf16.mxu0 0
  %704 = vmatpush1.bf16.xpose.msra.mxu0 0
  %705 = vmatprep.subr.bf16.mxu0 0
  %706 = vmatpush1.bf16.xpose.msra.mxu0 0
  %707 = vmatprep.subr.bf16.mxu0 0
  %708 = vmatpush1.bf16.xpose.msra.mxu0 0
  %709 = vmatprep.subr.bf16.mxu0 0
  %710 = vmatpush1.bf16.xpose.msra.mxu0 0
  %711 = vmatprep.subr.bf16.mxu0 0
  %712 = vmatpush1.bf16.xpose.msra.mxu0 0
  %713 = vmatprep.subr.bf16.mxu0 0
  %714 = vmatpush1.bf16.xpose.msra.mxu0 0
  %715 = vmatprep.subr.bf16.mxu0 0
  %716 = vmatpush1.bf16.xpose.msra.mxu0 0
  %717 = vmatprep.subr.bf16.mxu0 0
  %718 = vmatpush1.bf16.xpose.msra.mxu0 0
  %719 = vmatprep.subr.bf16.mxu0 0
  %720 = vmatpush1.bf16.xpose.msra.mxu0 0
  %721 = vmatprep.subr.bf16.mxu0 0
  %722 = vmatpush1.bf16.xpose.msra.mxu0 0
  %723 = vmatprep.subr.bf16.mxu0 0
  %724 = vmatpush1.bf16.xpose.msra.mxu0 0
  %725 = vmatprep.subr.bf16.mxu0 0
  %726 = vmatpush1.bf16.xpose.msra.mxu0 0
  %727 = vmatprep.subr.bf16.mxu0 0
  %728 = vmatpush1.bf16.xpose.msra.mxu0 0
  %729 = vmatprep.subr.bf16.mxu0 0
  %730 = vmatpush1.bf16.xpose.msra.mxu0 0
  %731 = vmatprep.mubr.bf16.mxu0 0
  %732 = vmatmul.mubr.bf16.gmra.mrb[0].mxu0 %v694
  %v733 = vpop.f32.mrb[0].mxu0
  %v734 = vadd.f32 0.0, %v733
  %v735 = vpop.f32.mrb[0].mxu0
  %v736 = vpop.f32.mrb[0].mxu0
  %v737 = vpop.f32.mrb[0].mxu0
  %738 = vdwg.mxu0
  %739 = vrot.lane.b32.xlu0 %v240, 112
  %v740 = vpop.permute.xlu0 %739
  %741 = vrot.lane.b32.xlu0 %v240, 80
  %v742 = vpop.permute.xlu0 %741
  %v744 = vsel %vm244, %v740, 0
  %v747 = vsel %vm244, %v742, 0
  %749 = vmatprep.subr.bf16.mxu0 0
  %750 = vmatpush1.bf16.xpose.msra.mxu0 %v747
  %751 = vmatprep.subr.bf16.mxu0 0
  %752 = vmatpush1.bf16.xpose.msra.mxu0 0
  %753 = vmatprep.subr.bf16.mxu0 0
  %754 = vmatpush1.bf16.xpose.msra.mxu0 0
  %755 = vmatprep.subr.bf16.mxu0 0
  %756 = vmatpush1.bf16.xpose.msra.mxu0 0
  %757 = vmatprep.subr.bf16.mxu0 0
  %758 = vmatpush1.bf16.xpose.msra.mxu0 0
  %759 = vmatprep.subr.bf16.mxu0 0
  %760 = vmatpush1.bf16.xpose.msra.mxu0 0
  %761 = vmatprep.subr.bf16.mxu0 0
  %762 = vmatpush1.bf16.xpose.msra.mxu0 0
  %763 = vmatprep.subr.bf16.mxu0 0
  %764 = vmatpush1.bf16.xpose.msra.mxu0 0
  %765 = vmatprep.subr.bf16.mxu0 0
  %766 = vmatpush1.bf16.xpose.msra.mxu0 0
  %767 = vmatprep.subr.bf16.mxu0 0
  %768 = vmatpush1.bf16.xpose.msra.mxu0 0
  %769 = vmatprep.subr.bf16.mxu0 0
  %770 = vmatpush1.bf16.xpose.msra.mxu0 0
  %771 = vmatprep.subr.bf16.mxu0 0
  %772 = vmatpush1.bf16.xpose.msra.mxu0 0
  %773 = vmatprep.subr.bf16.mxu0 0
  %774 = vmatpush1.bf16.xpose.msra.mxu0 0
  %775 = vmatprep.subr.bf16.mxu0 0
  %776 = vmatpush1.bf16.xpose.msra.mxu0 0
  %777 = vmatprep.subr.bf16.mxu0 0
  %778 = vmatpush1.bf16.xpose.msra.mxu0 0
  %779 = vmatprep.subr.bf16.mxu0 0
  %780 = vmatpush1.bf16.xpose.msra.mxu0 0
  %781 = vmatprep.mubr.bf16.mxu0 0
  %782 = vmatmul.mubr.bf16.gmra.mrb[0].mxu0 %v744
  %v783 = vpop.f32.mrb[0].mxu0
  %v784 = vadd.f32 0.0, %v783
  %v785 = vpop.f32.mrb[0].mxu0
  %v786 = vpop.f32.mrb[0].mxu0
  %v787 = vpop.f32.mrb[0].mxu0
  %788 = vdwg.mxu0
  %v789 = vmul.f32 %v734, 0.35355338
  %v790 = vmul.f32 %v784, 0.35355338
  %v791 = vadd.f32 %v789, %v93
  %v792 = vadd.f32 %v790, %v97
  %v793 = vsel %vm244, %v791, -inf
  %794 = vmax.xlane.f32.xlu0 %v793
  %v795 = vpop.xlane.xlu0 %794
  %v796 = vsel %vm244, %v792, -inf
  %797 = vmax.xlane.f32.xlu0 %v796
  %v798 = vpop.xlane.xlu0 %797
  %v799 = vsub.f32 %v791, %v795
  %v800 = vsub.f32 %v792, %v798
  %v801 = vmul.f32 %v799, 1.442695
  %v802 = vpow.pop %v801
  %v803 = vmul.f32 %v800, 1.442695
  %v804 = vpow.pop %v803
  %v805 = vsel %vm244, %v802, 0.0
  %806 = vadd.xlane.f32.xlu0 %v805
  %v807 = vpop.xlane.xlu0 %806
  %v808 = vsel %vm244, %v804, 0.0
  %809 = vadd.xlane.f32.xlu0 %v808
  %v810 = vpop.xlane.xlu0 %809
  %v811 = vrcp.pop %v807
  %v812 = vrcp.pop %v810
  %v813 = vmul.f32 %v802, %v811
  %v814 = vmul.f32 %v804, %v812
  %v815 = vpack.c.bf16 %v813, %v813
  %v816 = vpack.c.bf16 %v814, %v814
  %817 = vrot.lane.b32.xlu0 %v239, 48
  %v818 = vpop.permute.xlu0 %817
  %v820 = vsel %vm244, %v815, 0
  %v823 = vsel %vm373, %v818, 0
  %825 = vmatprep.subr.bf16.mxu0 0
  %826 = vmatpush1.bf16.msra.mxu0 %v823
  %827 = vmatprep.subr.bf16.mxu0 0
  %828 = vmatpush1.bf16.msra.mxu0 0
  %829 = vmatprep.subr.bf16.mxu0 0
  %830 = vmatpush1.bf16.msra.mxu0 0
  %831 = vmatprep.subr.bf16.mxu0 0
  %832 = vmatpush1.bf16.msra.mxu0 0
  %833 = vmatprep.subr.bf16.mxu0 0
  %834 = vmatpush1.bf16.msra.mxu0 0
  %835 = vmatprep.subr.bf16.mxu0 0
  %836 = vmatpush1.bf16.msra.mxu0 0
  %837 = vmatprep.subr.bf16.mxu0 0
  %838 = vmatpush1.bf16.msra.mxu0 0
  %839 = vmatprep.subr.bf16.mxu0 0
  %840 = vmatpush1.bf16.msra.mxu0 0
  %841 = vmatprep.subr.bf16.mxu0 0
  %842 = vmatpush1.bf16.msra.mxu0 0
  %843 = vmatprep.subr.bf16.mxu0 0
  %844 = vmatpush1.bf16.msra.mxu0 0
  %845 = vmatprep.subr.bf16.mxu0 0
  %846 = vmatpush1.bf16.msra.mxu0 0
  %847 = vmatprep.subr.bf16.mxu0 0
  %848 = vmatpush1.bf16.msra.mxu0 0
  %849 = vmatprep.subr.bf16.mxu0 0
  %850 = vmatpush1.bf16.msra.mxu0 0
  %851 = vmatprep.subr.bf16.mxu0 0
  %852 = vmatpush1.bf16.msra.mxu0 0
  %853 = vmatprep.subr.bf16.mxu0 0
  %854 = vmatpush1.bf16.msra.mxu0 0
  %855 = vmatprep.subr.bf16.mxu0 0
  %856 = vmatpush1.bf16.msra.mxu0 0
  %857 = vmatprep.mubr.bf16.mxu0 0
  %858 = vmatmul.mubr.bf16.gmra.mrb[0].mxu0 %v820
  %v859 = vpop.f32.mrb[0].mxu0
  %v860 = vadd.f32 0.0, %v859
  %v861 = vpop.f32.mrb[0].mxu0
  %v862 = vpop.f32.mrb[0].mxu0
  %v863 = vpop.f32.mrb[0].mxu0
  %864 = vdwg.mxu0
  %865 = vrot.lane.b32.xlu0 %v240, 48
  %v866 = vpop.permute.xlu0 %865
  %v868 = vsel %vm244, %v816, 0
  %v871 = vsel %vm373, %v866, 0
  %873 = vmatprep.subr.bf16.mxu0 0
  %874 = vmatpush1.bf16.msra.mxu0 %v871
  %875 = vmatprep.subr.bf16.mxu0 0
  %876 = vmatpush1.bf16.msra.mxu0 0
  %877 = vmatprep.subr.bf16.mxu0 0
  %878 = vmatpush1.bf16.msra.mxu0 0
  %879 = vmatprep.subr.bf16.mxu0 0
  %880 = vmatpush1.bf16.msra.mxu0 0
  %881 = vmatprep.subr.bf16.mxu0 0
  %882 = vmatpush1.bf16.msra.mxu0 0
  %883 = vmatprep.subr.bf16.mxu0 0
  %884 = vmatpush1.bf16.msra.mxu0 0
  %885 = vmatprep.subr.bf16.mxu0 0
  %886 = vmatpush1.bf16.msra.mxu0 0
  %887 = vmatprep.subr.bf16.mxu0 0
  %888 = vmatpush1.bf16.msra.mxu0 0
  %889 = vmatprep.subr.bf16.mxu0 0
  %890 = vmatpush1.bf16.msra.mxu0 0
  %891 = vmatprep.subr.bf16.mxu0 0
  %892 = vmatpush1.bf16.msra.mxu0 0
  %893 = vmatprep.subr.bf16.mxu0 0
  %894 = vmatpush1.bf16.msra.mxu0 0
  %895 = vmatprep.subr.bf16.mxu0 0
  %896 = vmatpush1.bf16.msra.mxu0 0
  %897 = vmatprep.subr.bf16.mxu0 0
  %898 = vmatpush1.bf16.msra.mxu0 0
  %899 = vmatprep.subr.bf16.mxu0 0
  %900 = vmatpush1.bf16.msra.mxu0 0
  %901 = vmatprep.subr.bf16.mxu0 0
  %902 = vmatpush1.bf16.msra.mxu0 0
  %903 = vmatprep.subr.bf16.mxu0 0
  %904 = vmatpush1.bf16.msra.mxu0 0
  %905 = vmatprep.mubr.bf16.mxu0 0
  %906 = vmatmul.mubr.bf16.gmra.mrb[0].mxu0 %v868
  %v907 = vpop.f32.mrb[0].mxu0
  %v908 = vadd.f32 0.0, %v907
  %v909 = vpop.f32.mrb[0].mxu0
  %v910 = vpop.f32.mrb[0].mxu0
  %v911 = vpop.f32.mrb[0].mxu0
  %912 = vdwg.mxu0
  %913 = vrot.lane.b32.xlu0 %v239, 104
  %v914 = vpop.permute.xlu0 %913
  %915 = vrot.lane.b32.xlu0 %v239, 72
  %v916 = vpop.permute.xlu0 %915
  %v918 = vsel %vm244, %v914, 0
  %v921 = vsel %vm244, %v916, 0
  %923 = vmatprep.subr.bf16.mxu0 0
  %924 = vmatpush1.bf16.xpose.msra.mxu0 %v921
  %925 = vmatprep.subr.bf16.mxu0 0
  %926 = vmatpush1.bf16.xpose.msra.mxu0 0
  %927 = vmatprep.subr.bf16.mxu0 0
  %928 = vmatpush1.bf16.xpose.msra.mxu0 0
  %929 = vmatprep.subr.bf16.mxu0 0
  %930 = vmatpush1.bf16.xpose.msra.mxu0 0
  %931 = vmatprep.subr.bf16.mxu0 0
  %932 = vmatpush1.bf16.xpose.msra.mxu0 0
  %933 = vmatprep.subr.bf16.mxu0 0
  %934 = vmatpush1.bf16.xpose.msra.mxu0 0
  %935 = vmatprep.subr.bf16.mxu0 0
  %936 = vmatpush1.bf16.xpose.msra.mxu0 0
  %937 = vmatprep.subr.bf16.mxu0 0
  %938 = vmatpush1.bf16.xpose.msra.mxu0 0
  %939 = vmatprep.subr.bf16.mxu0 0
  %940 = vmatpush1.bf16.xpose.msra.mxu0 0
  %941 = vmatprep.subr.bf16.mxu0 0
  %942 = vmatpush1.bf16.xpose.msra.mxu0 0
  %943 = vmatprep.subr.bf16.mxu0 0
  %944 = vmatpush1.bf16.xpose.msra.mxu0 0
  %945 = vmatprep.subr.bf16.mxu0 0
  %946 = vmatpush1.bf16.xpose.msra.mxu0 0
  %947 = vmatprep.subr.bf16.mxu0 0
  %948 = vmatpush1.bf16.xpose.msra.mxu0 0
  %949 = vmatprep.subr.bf16.mxu0 0
  %950 = vmatpush1.bf16.xpose.msra.mxu0 0
  %951 = vmatprep.subr.bf16.mxu0 0
  %952 = vmatpush1.bf16.xpose.msra.mxu0 0
  %953 = vmatprep.subr.bf16.mxu0 0
  %954 = vmatpush1.bf16.xpose.msra.mxu0 0
  %955 = vmatprep.mubr.bf16.mxu0 0
  %956 = vmatmul.mubr.bf16.gmra.mrb[0].mxu0 %v918
  %v957 = vpop.f32.mrb[0].mxu0
  %v958 = vadd.f32 0.0, %v957
  %v959 = vpop.f32.mrb[0].mxu0
  %v960 = vpop.f32.mrb[0].mxu0
  %v961 = vpop.f32.mrb[0].mxu0
  %962 = vdwg.mxu0
  %963 = vrot.lane.b32.xlu0 %v240, 104
  %v964 = vpop.permute.xlu0 %963
  %965 = vrot.lane.b32.xlu0 %v240, 72
  %v966 = vpop.permute.xlu0 %965
  %v968 = vsel %vm244, %v964, 0
  %v971 = vsel %vm244, %v966, 0
  %973 = vmatprep.subr.bf16.mxu0 0
  %974 = vmatpush1.bf16.xpose.msra.mxu0 %v971
  %975 = vmatprep.subr.bf16.mxu0 0
  %976 = vmatpush1.bf16.xpose.msra.mxu0 0
  %977 = vmatprep.subr.bf16.mxu0 0
  %978 = vmatpush1.bf16.xpose.msra.mxu0 0
  %979 = vmatprep.subr.bf16.mxu0 0
  %980 = vmatpush1.bf16.xpose.msra.mxu0 0
  %981 = vmatprep.subr.bf16.mxu0 0
  %982 = vmatpush1.bf16.xpose.msra.mxu0 0
  %983 = vmatprep.subr.bf16.mxu0 0
  %984 = vmatpush1.bf16.xpose.msra.mxu0 0
  %985 = vmatprep.subr.bf16.mxu0 0
  %986 = vmatpush1.bf16.xpose.msra.mxu0 0
  %987 = vmatprep.subr.bf16.mxu0 0
  %988 = vmatpush1.bf16.xpose.msra.mxu0 0
  %989 = vmatprep.subr.bf16.mxu0 0
  %990 = vmatpush1.bf16.xpose.msra.mxu0 0
  %991 = vmatprep.subr.bf16.mxu0 0
  %992 = vmatpush1.bf16.xpose.msra.mxu0 0
  %993 = vmatprep.subr.bf16.mxu0 0
  %994 = vmatpush1.bf16.xpose.msra.mxu0 0
  %995 = vmatprep.subr.bf16.mxu0 0
  %996 = vmatpush1.bf16.xpose.msra.mxu0 0
  %997 = vmatprep.subr.bf16.mxu0 0
  %998 = vmatpush1.bf16.xpose.msra.mxu0 0
  %999 = vmatprep.subr.bf16.mxu0 0
  %1000 = vmatpush1.bf16.xpose.msra.mxu0 0
  %1001 = vmatprep.subr.bf16.mxu0 0
  %1002 = vmatpush1.bf16.xpose.msra.mxu0 0
  %1003 = vmatprep.subr.bf16.mxu0 0
  %1004 = vmatpush1.bf16.xpose.msra.mxu0 0
  %1005 = vmatprep.mubr.bf16.mxu0 0
  %1006 = vmatmul.mubr.bf16.gmra.mrb[0].mxu0 %v968
  %v1007 = vpop.f32.mrb[0].mxu0
  %v1008 = vadd.f32 0.0, %v1007
  %v1009 = vpop.f32.mrb[0].mxu0
  %v1010 = vpop.f32.mrb[0].mxu0
  %v1011 = vpop.f32.mrb[0].mxu0
  %1012 = vdwg.mxu0
  %v1013 = vmul.f32 %v958, 0.35355338
  %v1014 = vmul.f32 %v1008, 0.35355338
  %v1015 = vadd.f32 %v1013, %v93
  %v1016 = vadd.f32 %v1014, %v97
  %v1017 = vsel %vm244, %v1015, -inf
  %1018 = vmax.xlane.f32.xlu0 %v1017
  %v1019 = vpop.xlane.xlu0 %1018
  %v1020 = vsel %vm244, %v1016, -inf
  %1021 = vmax.xlane.f32.xlu0 %v1020
  %v1022 = vpop.xlane.xlu0 %1021
  %v1023 = vsub.f32 %v1015, %v1019
  %v1024 = vsub.f32 %v1016, %v1022
  %v1025 = vmul.f32 %v1023, 1.442695
  %v1026 = vpow.pop %v1025
  %v1027 = vmul.f32 %v1024, 1.442695
  %v1028 = vpow.pop %v1027
  %v1029 = vsel %vm244, %v1026, 0.0
  %1030 = vadd.xlane.f32.xlu0 %v1029
  %v1031 = vpop.xlane.xlu0 %1030
  %v1032 = vsel %vm244, %v1028, 0.0
  %1033 = vadd.xlane.f32.xlu0 %v1032
  %v1034 = vpop.xlane.xlu0 %1033
  %v1035 = vrcp.pop %v1031
  %v1036 = vrcp.pop %v1034
  %v1037 = vmul.f32 %v1026, %v1035
  %v1038 = vmul.f32 %v1028, %v1036
  %v1039 = vpack.c.bf16 %v1037, %v1037
  %v1040 = vpack.c.bf16 %v1038, %v1038
  %1041 = vrot.lane.b32.xlu0 %v239, 40
  %v1042 = vpop.permute.xlu0 %1041
  %v1044 = vsel %vm244, %v1039, 0
  %v1047 = vsel %vm373, %v1042, 0
  %1049 = vmatprep.subr.bf16.mxu0 0
  %1050 = vmatpush1.bf16.msra.mxu0 %v1047
  %1051 = vmatprep.subr.bf16.mxu0 0
  %1052 = vmatpush1.bf16.msra.mxu0 0
  %1053 = vmatprep.subr.bf16.mxu0 0
  %1054 = vmatpush1.bf16.msra.mxu0 0
  %1055 = vmatprep.subr.bf16.mxu0 0
  %1056 = vmatpush1.bf16.msra.mxu0 0
  %1057 = vmatprep.subr.bf16.mxu0 0
  %1058 = vmatpush1.bf16.msra.mxu0 0
  %1059 = vmatprep.subr.bf16.mxu0 0
  %1060 = vmatpush1.bf16.msra.mxu0 0
  %1061 = vmatprep.subr.bf16.mxu0 0
  %1062 = vmatpush1.bf16.msra.mxu0 0
  %1063 = vmatprep.subr.bf16.mxu0 0
  %1064 = vmatpush1.bf16.msra.mxu0 0
  %1065 = vmatprep.subr.bf16.mxu0 0
  %1066 = vmatpush1.bf16.msra.mxu0 0
  %1067 = vmatprep.subr.bf16.mxu0 0
  %1068 = vmatpush1.bf16.msra.mxu0 0
  %1069 = vmatprep.subr.bf16.mxu0 0
  %1070 = vmatpush1.bf16.msra.mxu0 0
  %1071 = vmatprep.subr.bf16.mxu0 0
  %1072 = vmatpush1.bf16.msra.mxu0 0
  %1073 = vmatprep.subr.bf16.mxu0 0
  %1074 = vmatpush1.bf16.msra.mxu0 0
  %1075 = vmatprep.subr.bf16.mxu0 0
  %1076 = vmatpush1.bf16.msra.mxu0 0
  %1077 = vmatprep.subr.bf16.mxu0 0
  %1078 = vmatpush1.bf16.msra.mxu0 0
  %1079 = vmatprep.subr.bf16.mxu0 0
  %1080 = vmatpush1.bf16.msra.mxu0 0
  %1081 = vmatprep.mubr.bf16.mxu0 0
  %1082 = vmatmul.mubr.bf16.gmra.mrb[0].mxu0 %v1044
  %v1083 = vpop.f32.mrb[0].mxu0
  %v1084 = vadd.f32 0.0, %v1083
  %v1085 = vpop.f32.mrb[0].mxu0
  %v1086 = vpop.f32.mrb[0].mxu0
  %v1087 = vpop.f32.mrb[0].mxu0
  %1088 = vdwg.mxu0
  %1089 = vrot.lane.b32.xlu0 %v240, 40
  %v1090 = vpop.permute.xlu0 %1089
  %v1092 = vsel %vm244, %v1040, 0
  %v1095 = vsel %vm373, %v1090, 0
  %1097 = vmatprep.subr.bf16.mxu0 0
  %1098 = vmatpush1.bf16.msra.mxu0 %v1095
  %1099 = vmatprep.subr.bf16.mxu0 0
  %1100 = vmatpush1.bf16.msra.mxu0 0
  %1101 = vmatprep.subr.bf16.mxu0 0
  %1102 = vmatpush1.bf16.msra.mxu0 0
  %1103 = vmatprep.subr.bf16.mxu0 0
  %1104 = vmatpush1.bf16.msra.mxu0 0
  %1105 = vmatprep.subr.bf16.mxu0 0
  %1106 = vmatpush1.bf16.msra.mxu0 0
  %1107 = vmatprep.subr.bf16.mxu0 0
  %1108 = vmatpush1.bf16.msra.mxu0 0
  %1109 = vmatprep.subr.bf16.mxu0 0
  %1110 = vmatpush1.bf16.msra.mxu0 0
  %1111 = vmatprep.subr.bf16.mxu0 0
  %1112 = vmatpush1.bf16.msra.mxu0 0
  %1113 = vmatprep.subr.bf16.mxu0 0
  %1114 = vmatpush1.bf16.msra.mxu0 0
  %1115 = vmatprep.subr.bf16.mxu0 0
  %1116 = vmatpush1.bf16.msra.mxu0 0
  %1117 = vmatprep.subr.bf16.mxu0 0
  %1118 = vmatpush1.bf16.msra.mxu0 0
  %1119 = vmatprep.subr.bf16.mxu0 0
  %1120 = vmatpush1.bf16.msra.mxu0 0
  %1121 = vmatprep.subr.bf16.mxu0 0
  %1122 = vmatpush1.bf16.msra.mxu0 0
  %1123 = vmatprep.subr.bf16.mxu0 0
  %1124 = vmatpush1.bf16.msra.mxu0 0
  %1125 = vmatprep.subr.bf16.mxu0 0
  %1126 = vmatpush1.bf16.msra.mxu0 0
  %1127 = vmatprep.subr.bf16.mxu0 0
  %1128 = vmatpush1.bf16.msra.mxu0 0
  %1129 = vmatprep.mubr.bf16.mxu0 0
  %1130 = vmatmul.mubr.bf16.gmra.mrb[0].mxu0 %v1092
  %v1131 = vpop.f32.mrb[0].mxu0
  %v1132 = vadd.f32 0.0, %v1131
  %v1133 = vpop.f32.mrb[0].mxu0
  %v1134 = vpop.f32.mrb[0].mxu0
  %v1135 = vpop.f32.mrb[0].mxu0
  %1136 = vdwg.mxu0
  %1139 = vrot.lane.b32.xlu0 %v636, 8
  %v1140 = vpop.permute.xlu0 %1139
  %1141 = vrot.lane.b32.xlu0 %v684, 8
  %v1142 = vpop.permute.xlu0 %1141
  %1147 = vrot.lane.b32.xlu0 %v860, 16
  %v1148 = vpop.permute.xlu0 %1147
  %1149 = vrot.lane.b32.xlu0 %v908, 16
  %v1150 = vpop.permute.xlu0 %1149
  %1155 = vrot.lane.b32.xlu0 %v1084, 24
  %v1156 = vpop.permute.xlu0 %1155
  %1157 = vrot.lane.b32.xlu0 %v1132, 24
  %v1158 = vpop.permute.xlu0 %1157
  %v1161 = vsel %vm244, %v412, %v1140
  %v1162 = vsel %vm244, %v460, %v1142
  %vm1163 = vcmask 130048
  %v1164 = vsel %vm1163, %v1161, %v1148
  %v1165 = vsel %vm1163, %v1162, %v1150
  %vm1166 = vcmask 195584
  %v1167 = vsel %vm1166, %v1164, %v1156
  %v1168 = vsel %vm1166, %v1165, %v1158
  %v1169 = vpack.c.bf16 %v1168, %v1167
  %v1171 = vlaneseq
  %v1172 = vshrl.u32 %v1171, 7
  %v1173 = vsub.s32 0, %v1172
  %v1174 = vrot.slane %v157, %v1173
  %v1180 = vunpack.c.l.b16 %v153
  %v1181 = vunpack.c.l.b16 %v154
  %v1182 = vunpack.c.l.b16 %v155
  %v1183 = vunpack.c.l.b16 %v156
  %v1184 = vpack.c.b16 %v1181, %v1180
  %v1185 = vpack.c.b16 %v1183, %v1182
  %v1189 = vsel %vm104, %v1169, 0
  %1191 = vmatprep.subr.bf16.mxu0 0
  %1192 = vmatpush1.bf16.msra.mxu0 %v1184
  %1193 = vmatprep.subr.bf16.mxu0 0
  %1194 = vmatpush1.bf16.msra.mxu0 %v1185
  %1195 = vmatprep.subr.bf16.mxu0 0
  %1196 = vmatpush1.bf16.msra.mxu0 0
  %1197 = vmatprep.subr.bf16.mxu0 0
  %1198 = vmatpush1.bf16.msra.mxu0 0
  %1199 = vmatprep.subr.bf16.mxu0 0
  %1200 = vmatpush1.bf16.msra.mxu0 0
  %1201 = vmatprep.subr.bf16.mxu0 0
  %1202 = vmatpush1.bf16.msra.mxu0 0
  %1203 = vmatprep.subr.bf16.mxu0 0
  %1204 = vmatpush1.bf16.msra.mxu0 0
  %1205 = vmatprep.subr.bf16.mxu0 0
  %1206 = vmatpush1.bf16.msra.mxu0 0
  %1207 = vmatprep.subr.bf16.mxu0 0
  %1208 = vmatpush1.bf16.msra.mxu0 0
  %1209 = vmatprep.subr.bf16.mxu0 0
  %1210 = vmatpush1.bf16.msra.mxu0 0
  %1211 = vmatprep.subr.bf16.mxu0 0
  %1212 = vmatpush1.bf16.msra.mxu0 0
  %1213 = vmatprep.subr.bf16.mxu0 0
  %1214 = vmatpush1.bf16.msra.mxu0 0
  %1215 = vmatprep.subr.bf16.mxu0 0
  %1216 = vmatpush1.bf16.msra.mxu0 0
  %1217 = vmatprep.subr.bf16.mxu0 0
  %1218 = vmatpush1.bf16.msra.mxu0 0
  %1219 = vmatprep.subr.bf16.mxu0 0
  %1220 = vmatpush1.bf16.msra.mxu0 0
  %1221 = vmatprep.subr.bf16.mxu0 0
  %1222 = vmatpush1.bf16.msra.mxu0 0
  %1223 = vmatprep.mubr.bf16.mxu0 0
  %1224 = vmatmul.mubr.bf16.gmra.mrb[0].mxu0 %v1189
  %v1225 = vpop.f32.mrb[0].mxu0
  %v1226 = vadd.f32 %v1174, %v1225
  %v1227 = vpop.f32.mrb[0].mxu0
  %v1228 = vpop.f32.mrb[0].mxu0
  %v1229 = vadd.f32 %v1174, %v1228
  %v1230 = vpop.f32.mrb[0].mxu0
  %1231 = vdwg.mxu0
  %v1232 = vadd.f32 %v1226, %v146
  %v1233 = vadd.f32 %v1229, %v147
  %v1234 = vsel %vm104, %v1232, 0.0
  %1235 = vadd.xlane.f32.xlu0 %v1234
  %v1236 = vpop.xlane.xlu0 %1235
  %v1237 = vsel %vm104, %v1233, 0.0
  %1238 = vadd.xlane.f32.xlu0 %v1237
  %v1239 = vpop.xlane.xlu0 %1238
  %v1240 = vmul.f32 %v1236, %v111
  %v1241 = vmul.f32 %v1239, %v111
  %v1242 = vsub.f32 %v1232, %v1240
  %v1243 = vsub.f32 %v1233, %v1241
  %v1244 = vmul.f32 %v1242, %v1242
  %v1245 = vmul.f32 %v1243, %v1243
  %v1246 = vsel %vm104, %v1244, 0.0
  %1247 = vadd.xlane.f32.xlu0 %v1246
  %v1248 = vpop.xlane.xlu0 %1247
  %v1249 = vsel %vm104, %v1245, 0.0
  %1250 = vadd.xlane.f32.xlu0 %v1249
  %v1251 = vpop.xlane.xlu0 %1250
  %v1252 = vmul.f32 %v1248, %v111
  %v1253 = vmul.f32 %v1251, %v111
  %v1254 = vadd.f32 %v1252, 1e-05
  %v1255 = vadd.f32 %v1253, 1e-05
  %v1256 = vrsqrt.pop %v1254
  %v1257 = vrsqrt.pop %v1255
  %v1258 = vmul.f32 %v1242, %v1256
  %v1259 = vmul.f32 %v1243, %v1257
  %v1261 = vlaneseq
  %v1262 = vshrl.u32 %v1261, 7
  %v1263 = vsub.s32 0, %v1262
  %v1264 = vrot.slane %v158, %v1263
  %v1266 = vmul.f32 %v1258, %v1264
  %v1267 = vmul.f32 %v1259, %v1264
  %v1269 = vlaneseq
  %v1270 = vshrl.u32 %v1269, 7
  %v1271 = vsub.s32 0, %v1270
  %v1272 = vrot.slane %v159, %v1271
  %v1274 = vadd.f32 %v1266, %v1272
  %v1275 = vadd.f32 %v1267, %v1272
  %v1276 = vpack.c.bf16 %v1275, %v1274
  %v1278 = vlaneseq
  %v1279 = vshrl.u32 %v1278, 7
  %v1280 = vsub.s32 0, %v1279
  %v1281 = vrot.slane %v164, %v1280
  %v1287 = vunpack.c.l.b16 %v160
  %v1288 = vunpack.c.l.b16 %v161
  %v1289 = vunpack.c.l.b16 %v162
  %v1290 = vunpack.c.l.b16 %v163
  %v1291 = vpack.c.b16 %v1288, %v1287
  %v1292 = vpack.c.b16 %v1290, %v1289
  %v1296 = vsel %vm104, %v1276, 0
  %1298 = vmatprep.subr.bf16.mxu0 0
  %1299 = vmatpush1.bf16.msra.mxu0 %v1291
  %1300 = vmatprep.subr.bf16.mxu0 0
  %1301 = vmatpush1.bf16.msra.mxu0 %v1292
  %1302 = vmatprep.subr.bf16.mxu0 0
  %1303 = vmatpush1.bf16.msra.mxu0 0
  %1304 = vmatprep.subr.bf16.mxu0 0
  %1305 = vmatpush1.bf16.msra.mxu0 0
  %1306 = vmatprep.subr.bf16.mxu0 0
  %1307 = vmatpush1.bf16.msra.mxu0 0
  %1308 = vmatprep.subr.bf16.mxu0 0
  %1309 = vmatpush1.bf16.msra.mxu0 0
  %1310 = vmatprep.subr.bf16.mxu0 0
  %1311 = vmatpush1.bf16.msra.mxu0 0
  %1312 = vmatprep.subr.bf16.mxu0 0
  %1313 = vmatpush1.bf16.msra.mxu0 0
  %1314 = vmatprep.subr.bf16.mxu0 0
  %1315 = vmatpush1.bf16.msra.mxu0 0
  %1316 = vmatprep.subr.bf16.mxu0 0
  %1317 = vmatpush1.bf16.msra.mxu0 0
  %1318 = vmatprep.subr.bf16.mxu0 0
  %1319 = vmatpush1.bf16.msra.mxu0 0
  %1320 = vmatprep.subr.bf16.mxu0 0
  %1321 = vmatpush1.bf16.msra.mxu0 0
  %1322 = vmatprep.subr.bf16.mxu0 0
  %1323 = vmatpush1.bf16.msra.mxu0 0
  %1324 = vmatprep.subr.bf16.mxu0 0
  %1325 = vmatpush1.bf16.msra.mxu0 0
  %1326 = vmatprep.subr.bf16.mxu0 0
  %1327 = vmatpush1.bf16.msra.mxu0 0
  %1328 = vmatprep.subr.bf16.mxu0 0
  %1329 = vmatpush1.bf16.msra.mxu0 0
  %1330 = vmatprep.mubr.bf16.mxu0 0
  %1331 = vmatmul.mubr.bf16.gmra.mrb[0].mxu0 %v1296
  %v1332 = vpop.f32.mrb[0].mxu0
  %v1333 = vadd.f32 %v1281, %v1332
  %v1334 = vpop.f32.mrb[0].mxu0
  %v1335 = vpop.f32.mrb[0].mxu0
  %v1336 = vadd.f32 %v1281, %v1335
  %v1337 = vpop.f32.mrb[0].mxu0
  %1338 = vdwg.mxu0
  %v1339 = vmul.f32 %v1333, 0.5
  %v1340 = vmul.f32 %v1336, 0.5
  %v1341 = vmul.f32 %v1333, 0.70710677
  %v1342 = vmul.f32 %v1336, 0.70710677
  %v1343 = verf.f32.pop %v1341
  %v1344 = verf.f32.pop %v1342
  %v1345 = vadd.f32 %v1343, 1.0
  %v1346 = vadd.f32 %v1344, 1.0
  %v1347 = vmul.f32 %v1339, %v1345
  %v1348 = vmul.f32 %v1340, %v1346
  %v1349 = vpack.c.bf16 %v1348, %v1347
  %v1351 = vlaneseq
  %v1352 = vshrl.u32 %v1351, 7
  %v1353 = vsub.s32 0, %v1352
  %v1354 = vrot.slane %v173, %v1353
  %v1364 = vunpack.c.l.b16 %v165
  %v1365 = vunpack.c.l.b16 %v166
  %v1366 = vunpack.c.l.b16 %v167
  %v1367 = vunpack.c.l.b16 %v168
  %v1368 = vunpack.c.l.b16 %v169
  %v1369 = vunpack.c.l.b16 %v170
  %v1370 = vunpack.c.l.b16 %v171
  %v1371 = vunpack.c.l.b16 %v172
  %v1372 = vpack.c.b16 %v1365, %v1364
  %v1373 = vpack.c.b16 %v1367, %v1366
  %v1374 = vpack.c.b16 %v1369, %v1368
  %v1375 = vpack.c.b16 %v1371, %v1370
  %vm1380 = vcmask 523264
  %v1382 = vsel %vm1380, %v1349, 0
  %1384 = vmatprep.subr.bf16.mxu0 0
  %1385 = vmatpush1.bf16.msra.mxu0 %v1372
  %1386 = vmatprep.subr.bf16.mxu0 0
  %1387 = vmatpush1.bf16.msra.mxu0 %v1373
  %1388 = vmatprep.subr.bf16.mxu0 0
  %1389 = vmatpush1.bf16.msra.mxu0 %v1374
  %1390 = vmatprep.subr.bf16.mxu0 0
  %1391 = vmatpush1.bf16.msra.mxu0 %v1375
  %1392 = vmatprep.subr.bf16.mxu0 0
  %1393 = vmatpush1.bf16.msra.mxu0 0
  %1394 = vmatprep.subr.bf16.mxu0 0
  %1395 = vmatpush1.bf16.msra.mxu0 0
  %1396 = vmatprep.subr.bf16.mxu0 0
  %1397 = vmatpush1.bf16.msra.mxu0 0
  %1398 = vmatprep.subr.bf16.mxu0 0
  %1399 = vmatpush1.bf16.msra.mxu0 0
  %1400 = vmatprep.subr.bf16.mxu0 0
  %1401 = vmatpush1.bf16.msra.mxu0 0
  %1402 = vmatprep.subr.bf16.mxu0 0
  %1403 = vmatpush1.bf16.msra.mxu0 0
  %1404 = vmatprep.subr.bf16.mxu0 0
  %1405 = vmatpush1.bf16.msra.mxu0 0
  %1406 = vmatprep.subr.bf16.mxu0 0
  %1407 = vmatpush1.bf16.msra.mxu0 0
  %1408 = vmatprep.subr.bf16.mxu0 0
  %1409 = vmatpush1.bf16.msra.mxu0 0
  %1410 = vmatprep.subr.bf16.mxu0 0
  %1411 = vmatpush1.bf16.msra.mxu0 0
  %1412 = vmatprep.subr.bf16.mxu0 0
  %1413 = vmatpush1.bf16.msra.mxu0 0
  %1414 = vmatprep.subr.bf16.mxu0 0
  %1415 = vmatpush1.bf16.msra.mxu0 0
  %1416 = vmatprep.mubr.bf16.mxu0 0
  %1417 = vmatmul.mubr.bf16.gmra.mrb[0].mxu0 %v1382
  %v1418 = vpop.f32.mrb[0].mxu0
  %v1419 = vadd.f32 %v1354, %v1418
  %v1420 = vpop.f32.mrb[0].mxu0
  %v1421 = vpop.f32.mrb[0].mxu0
  %v1422 = vadd.f32 %v1354, %v1421
  %v1423 = vpop.f32.mrb[0].mxu0
  %1424 = vdwg.mxu0
  %v1425 = vadd.f32 %v1419, %v1274
  %v1426 = vadd.f32 %v1422, %v1275
  %v1427 = vsel %vm104, %v1425, 0.0
  %1428 = vadd.xlane.f32.xlu0 %v1427
  %v1429 = vpop.xlane.xlu0 %1428
  %v1430 = vsel %vm104, %v1426, 0.0
  %1431 = vadd.xlane.f32.xlu0 %v1430
  %v1432 = vpop.xlane.xlu0 %1431
  %v1433 = vmul.f32 %v1429, %v111
  %v1434 = vmul.f32 %v1432, %v111
  %v1435 = vsub.f32 %v1425, %v1433
  %v1436 = vsub.f32 %v1426, %v1434
  %v1437 = vmul.f32 %v1435, %v1435
  %v1438 = vmul.f32 %v1436, %v1436
  %v1439 = vsel %vm104, %v1437, 0.0
  %1440 = vadd.xlane.f32.xlu0 %v1439
  %v1441 = vpop.xlane.xlu0 %1440
  %v1442 = vsel %vm104, %v1438, 0.0
  %1443 = vadd.xlane.f32.xlu0 %v1442
  %v1444 = vpop.xlane.xlu0 %1443
  %v1445 = vmul.f32 %v1441, %v111
  %v1446 = vmul.f32 %v1444, %v111
  %v1447 = vadd.f32 %v1445, 1e-05
  %v1448 = vadd.f32 %v1446, 1e-05
  %v1449 = vrsqrt.pop %v1447
  %v1450 = vrsqrt.pop %v1448
  %v1451 = vmul.f32 %v1435, %v1449
  %v1452 = vmul.f32 %v1436, %v1450
  %v1454 = vlaneseq
  %v1455 = vshrl.u32 %v1454, 7
  %v1456 = vsub.s32 0, %v1455
  %v1457 = vrot.slane %v174, %v1456
  %v1459 = vmul.f32 %v1451, %v1457
  %v1460 = vmul.f32 %v1452, %v1457
  %v1462 = vlaneseq
  %v1463 = vshrl.u32 %v1462, 7
  %v1464 = vsub.s32 0, %v1463
  %v1465 = vrot.slane %v175, %v1464
  %v1467 = vadd.f32 %v1459, %v1465
  %v1468 = vadd.f32 %v1460, %v1465
  %v1469 = vpack.c.bf16 %v1468, %v1467
  %v1470 = vld [vmem:[%s16] sm:$0xf]
  %v1471 = vld [vmem:[%s16 + $0x4] sm:$0xf]
  %v1472 = vld [vmem:[%s16 + $0x8] sm:$0xf]
  %v1473 = vld [vmem:[%s16 + $0xc] sm:$0xf]
  %v1474 = vld [vmem:[%s17] sm:$0x1]
  %v1476 = vlaneseq
  %v1477 = vshrl.u32 %v1476, 7
  %v1478 = vsub.s32 0, %v1477
  %v1479 = vrot.slane %v1474, %v1478
  %v1485 = vunpack.c.l.b16 %v1470
  %v1486 = vunpack.c.l.b16 %v1471
  %v1487 = vunpack.c.l.b16 %v1472
  %v1488 = vunpack.c.l.b16 %v1473
  %v1489 = vpack.c.b16 %v1486, %v1485
  %v1490 = vpack.c.b16 %v1488, %v1487
  %v1494 = vsel %vm104, %v1469, 0
  %1496 = vmatprep.subr.bf16.mxu0 0
  %1497 = vmatpush1.bf16.msra.mxu0 %v1489
  %1498 = vmatprep.subr.bf16.mxu0 0
  %1499 = vmatpush1.bf16.msra.mxu0 %v1490
  %1500 = vmatprep.subr.bf16.mxu0 0
  %1501 = vmatpush1.bf16.msra.mxu0 0
  %1502 = vmatprep.subr.bf16.mxu0 0
  %1503 = vmatpush1.bf16.msra.mxu0 0
  %1504 = vmatprep.subr.bf16.mxu0 0
  %1505 = vmatpush1.bf16.msra.mxu0 0
  %1506 = vmatprep.subr.bf16.mxu0 0
  %1507 = vmatpush1.bf16.msra.mxu0 0
  %1508 = vmatprep.subr.bf16.mxu0 0
  %1509 = vmatpush1.bf16.msra.mxu0 0
  %1510 = vmatprep.subr.bf16.mxu0 0
  %1511 = vmatpush1.bf16.msra.mxu0 0
  %1512 = vmatprep.subr.bf16.mxu0 0
  %1513 = vmatpush1.bf16.msra.mxu0 0
  %1514 = vmatprep.subr.bf16.mxu0 0
  %1515 = vmatpush1.bf16.msra.mxu0 0
  %1516 = vmatprep.subr.bf16.mxu0 0
  %1517 = vmatpush1.bf16.msra.mxu0 0
  %1518 = vmatprep.subr.bf16.mxu0 0
  %1519 = vmatpush1.bf16.msra.mxu0 0
  %1520 = vmatprep.subr.bf16.mxu0 0
  %1521 = vmatpush1.bf16.msra.mxu0 0
  %1522 = vmatprep.subr.bf16.mxu0 0
  %1523 = vmatpush1.bf16.msra.mxu0 0
  %1524 = vmatprep.subr.bf16.mxu0 0
  %1525 = vmatpush1.bf16.msra.mxu0 0
  %1526 = vmatprep.subr.bf16.mxu0 0
  %1527 = vmatpush1.bf16.msra.mxu0 0
  %1528 = vmatprep.mubr.bf16.mxu0 0
  %1529 = vmatmul.mubr.bf16.gmra.mrb[0].mxu0 %v1494
  %v1530 = vpop.f32.mrb[0].mxu0
  %v1531 = vadd.f32 %v1479, %v1530
  %v1532 = vpop.f32.mrb[0].mxu0
  %v1533 = vpop.f32.mrb[0].mxu0
  %v1534 = vadd.f32 %v1479, %v1533
  %v1535 = vpop.f32.mrb[0].mxu0
  %1536 = vdwg.mxu0
  %v1537 = vpack.c.bf16 %v1534, %v1531
  %v1538 = vld [vmem:[%s18] sm:$0xf]
  %v1539 = vld [vmem:[%s18 + $0x4] sm:$0xf]
  %v1540 = vld [vmem:[%s19] sm:$0x1]
  %v1542 = vlaneseq
  %v1543 = vshrl.u32 %v1542, 7
  %v1544 = vsub.s32 0, %v1543
  %v1545 = vrot.slane %v1540, %v1544
  %v1549 = vunpack.c.l.b16 %v1538
  %v1550 = vunpack.c.l.b16 %v1539
  %v1551 = vpack.c.b16 %v1550, %v1549
  %v1554 = vsel %vm1163, %v1537, 0
  %1556 = vmatprep.subr.bf16.mxu0 0
  %1557 = vmatpush1.bf16.msra.mxu0 %v1551
  %1558 = vmatprep.subr.bf16.mxu0 0
  %1559 = vmatpush1.bf16.msra.mxu0 0
  %1560 = vmatprep.subr.bf16.mxu0 0
  %1561 = vmatpush1.bf16.msra.mxu0 0
  %1562 = vmatprep.subr.bf16.mxu0 0
  %1563 = vmatpush1.bf16.msra.mxu0 0
  %1564 = vmatprep.subr.bf16.mxu0 0
  %1565 = vmatpush1.bf16.msra.mxu0 0
  %1566 = vmatprep.subr.bf16.mxu0 0
  %1567 = vmatpush1.bf16.msra.mxu0 0
  %1568 = vmatprep.subr.bf16.mxu0 0
  %1569 = vmatpush1.bf16.msra.mxu0 0
  %1570 = vmatprep.subr.bf16.mxu0 0
  %1571 = vmatpush1.bf16.msra.mxu0 0
  %1572 = vmatprep.subr.bf16.mxu0 0
  %1573 = vmatpush1.bf16.msra.mxu0 0
  %1574 = vmatprep.subr.bf16.mxu0 0
  %1575 = vmatpush1.bf16.msra.mxu0 0
  %1576 = vmatprep.subr.bf16.mxu0 0
  %1577 = vmatpush1.bf16.msra.mxu0 0
  %1578 = vmatprep.subr.bf16.mxu0 0
  %1579 = vmatpush1.bf16.msra.mxu0 0
  %1580 = vmatprep.subr.bf16.mxu0 0
  %1581 = vmatpush1.bf16.msra.mxu0 0
  %1582 = vmatprep.subr.bf16.mxu0 0
  %1583 = vmatpush1.bf16.msra.mxu0 0
  %1584 = vmatprep.subr.bf16.mxu0 0
  %1585 = vmatpush1.bf16.msra.mxu0 0
  %1586 = vmatprep.subr.bf16.mxu0 0
  %1587 = vmatpush1.bf16.msra.mxu0 0
  %1588 = vmatprep.mubr.bf16.mxu0 0
  %1589 = vmatmul.mubr.bf16.gmra.mrb[0].mxu0 %v1554
  %v1590 = vpop.f32.mrb[0].mxu0
  %v1591 = vadd.f32 %v1545, %v1590
  %v1592 = vpop.f32.mrb[0].mxu0
  %v1593 = vpop.f32.mrb[0].mxu0
  %v1594 = vadd.f32 %v1545, %v1593
  %v1595 = vpop.f32.mrb[0].mxu0
  %1596 = vdwg.mxu0
  %1597 = vst.msk [vmem:[%s20] sm:$0xff] %vm104, %v1591
  %1598 = vst.msk [vmem:[%s20 + $0x8] sm:$0xff] %vm104, %v1594
  // Predicated region
  $region82: #{robertabase_linear4_forward.3} parent=0 // pred_check
    _
  $region83: #{robertabase_linear4_forward.3} parent=0 // pred_check_branch
    %1600 = sbr.rel (0) target = $region85
  $region84: #{robertabase_linear4_forward.3} parent=0 // pred_region
    _
  $region85: #{robertabase_linear4_forward.3} parent=0 // pred_fallthru
    _
  // Predicated region
  $region86: #{robertabase_linear4_forward.3} parent=0 // pred_check
    _
  $region87: #{robertabase_linear4_forward.3} parent=0 // pred_check_branch
    %1602 = sbr.rel (0) target = $region89
  $region88: #{robertabase_linear4_forward.3} parent=0 // pred_region
    _
  $region89: #{robertabase_linear4_forward.3} parent=0 // pred_fallthru
    _

</llo_original>
